<compile_context>
chip_gen: v7x
topology: tpu7x:2x2x1
jax: 0.10.0
libtpu: 0.0.40
codegen_flags: <defaults>
</compile_context>

<pallas_src>
import functools

import numpy as np
import jax
import jax.numpy as jnp
from jax.experimental import pallas as pl
from jax.experimental.pallas import tpu as pltpu

_LANE = 128
_SUB = 8


# ----------------------------------------------------------------------------
# Skeleton utilities (pure Python glue, mirror NeMF skeleton.py semantics)
# ----------------------------------------------------------------------------
def find_neighbor(edges, d):
    n = len(edges)
    INF = 10 ** 9
    dist = [[0 if i == j else INF for j in range(n)] for i in range(n)]
    for i in range(n):
        for j in range(n):
            if i != j and set(edges[i]) & set(edges[j]):
                dist[i][j] = 1
    for k in range(n):
        for i in range(n):
            for j in range(n):
                if dist[i][k] + dist[k][j] < dist[i][j]:
                    dist[i][j] = dist[i][k] + dist[k][j]
    return [[j for j in range(n) if dist[i][j] <= d] for i in range(n)]


def skeleton_conv_mask(neighbour_list, in_channels, out_channels, joint_num, K):
    in_pj = in_channels // joint_num
    out_pj = out_channels // joint_num
    mask = np.zeros((out_channels, in_channels, K), np.float32)
    for i, neigh in enumerate(neighbour_list):
        expanded = [k * in_pj + c for k in neigh for c in range(in_pj)]
        mask[out_pj * i:out_pj * (i + 1), expanded, :] = 1.0
    return mask


def skeleton_pool(edges, channels_per_edge, last_pool):
    edge_num = len(edges)
    degree = {}
    for e in edges:
        degree[e[0]] = degree.get(e[0], 0) + 1
        degree[e[1]] = degree.get(e[1], 0) + 1
    seq_list = []

    def find_seq(j, seq):
        if degree.get(j, 0) > 2 and j != 0:
            seq_list.append(seq)
            seq = []
        if degree.get(j, 0) == 1:
            seq_list.append(seq)
            return
        for idx, e in enumerate(edges):
            if e[0] == j:
                find_seq(e[1], seq + [idx])

    find_seq(0, [])

    pooling_list, new_edges = [], []
    for seq in seq_list:
        if last_pool:
            pooling_list.append(seq)
            continue
        if len(seq) % 2 == 1:
            pooling_list.append([seq[0]])
            new_edges.append(edges[seq[0]])
            seq = seq[1:]
        for i in range(0, len(seq), 2):
            pooling_list.append([seq[i], seq[i + 1]])
            new_edges.append((edges[seq[i]][0], edges[seq[i + 1]][1]))

    W = np.zeros((len(pooling_list) * channels_per_edge,
                  edge_num * channels_per_edge), np.float32)
    for i, pair in enumerate(pooling_list):
        for j in pair:
            for c in range(channels_per_edge):
                W[i * channels_per_edge + c, j * channels_per_edge + c] = 1.0 / len(pair)
    return W, pooling_list, new_edges


# ----------------------------------------------------------------------------
# Build-time weight packing (all conv weights -> lane/sublane aligned matrices)
# ----------------------------------------------------------------------------
def _round_up(x, m):
    return ((x + m - 1) // m) * m


def _stack_conv_weight(w_oik, cout_pad):
    """(Cout, Cin, K) conv weight -> (K * round_up(Cin,128), cout_pad) bf16.

    Tap k occupies rows [k*cw, (k+1)*cw); cw is a 128 multiple so the per-tap
    kernel slices are sublane aligned.  Input-channel padding rows and
    output-channel padding columns are zero, so padded lanes stay inert.
    """
    cout, cin, k_taps = w_oik.shape
    cw = _round_up(cin, _LANE)
    w = jnp.zeros((k_taps * cw, cout_pad), jnp.float32)
    for k in range(k_taps):
        w = w.at[k * cw:k * cw + cin, :cout].set(w_oik[:, :, k].T.astype(jnp.float32))
    return w.astype(jnp.bfloat16)


def _pack_1x1(w_oi1, cout_pad):
    """1x1 shortcut conv weight (Cout, Cin, 1) -> (round_up(Cin,128), cout_pad) bf16."""
    cout, cin, _ = w_oi1.shape
    cw = _round_up(cin, _LANE)
    w = jnp.zeros((cw, cout_pad), jnp.float32)
    w = w.at[:cin, :cout].set(w_oi1[:, :, 0].T.astype(jnp.float32))
    return w.astype(jnp.bfloat16)


def _pack_bias(b, cout_pad):
    out = jnp.zeros((1, cout_pad), jnp.float32)
    return out.at[0, :b.shape[0]].set(b.astype(jnp.float32))


def init_conv(key, cout, cin, k, scale=0.1):
    kw, kb = jax.random.split(key)
    w = jax.random.normal(kw, (cout, cin, k), jnp.float32) * scale
    b = jax.random.normal(kb, (cout,), jnp.float32) * scale
    return w, b


def build_predictor_params(key, args, topology):
    K = args['kernel_size']
    topologies = [list(topology)]
    channel_base = [args['channel_base']]
    edge_num = [len(topology)]
    for _ in range(args['num_layers']):
        channel_base.append(channel_base[-1] * 2)

    weights = []
    widths = []                         # padded channel widths staged in the slab
    pooling_hist = []
    in_channels0 = channel_base[0] * edge_num[0]
    widths.append(_round_up(in_channels0, _LANE))

    for i in range(args['num_layers']):
        neighbour_list = find_neighbor(topologies[i], args['skeleton_dist'])
        in_ch = channel_base[i] * edge_num[i]
        out_ch = channel_base[i + 1] * edge_num[i]
        last_pool = (i == args['num_layers'] - 1)

        key, kc = jax.random.split(key)
        w, b = init_conv(kc, out_ch, in_ch, K)
        # TODO(synk): PyTorch SkeletonConv uses per-neighbour-block kaiming_uniform
        # init; deterministic normal weights are used here, then masked exactly like
        # SkeletonConv (equivalent to forward-time masking since weights are frozen).
        mask = skeleton_conv_mask(neighbour_list, in_ch, out_ch, edge_num[i], K)
        w = w * jnp.asarray(mask)

        pool_w, plist, new_edges = skeleton_pool(
            topologies[i], out_ch // len(neighbour_list), last_pool)
        pool_w = jnp.asarray(pool_w)                     # (C_pooled, out_ch)

        # Fold SkeletonPool (linear 'mean' channel mix) into the conv weights —
        # exact, since there is no nonlinearity between SkeletonConv and the pool.
        w_fold = jnp.einsum('pc,cik->pik', pool_w, w)    # (C_pooled, in_ch, K)
        b_fold = pool_w @ b
        cout_pad = _round_up(int(w_fold.shape[0]), _LANE)
        weights.append(_stack_conv_weight(w_fold, cout_pad))
        weights.append(_pack_bias(b_fold, cout_pad))
        widths.append(cout_pad)

        topologies.append(new_edges)
        pooling_hist.append(plist)
        edge_num.append(len(new_edges))

    gm_in = channel_base[-1] * len(pooling_hist[-1])
    gm_channels = [gm_in, 512, 256, 128, args['out_channels']]
    ratios = []
    for idx in range(4):
        cin, cout = gm_channels[idx], gm_channels[idx + 1]
        cout_pad = _round_up(cout, _LANE)
        key, k3, k1 = jax.random.split(key, 3)
        w3, b3 = init_conv(k3, cout, cin, K)
        w1, b1 = init_conv(k1, cout, cin, 1)
        weights += [_stack_conv_weight(w3, cout_pad), _pack_1x1(w1, cout_pad),
                    _pack_bias(b3, cout_pad), _pack_bias(b1, cout_pad)]
        ratios.append(1.0 / (idx + 2))   # residual_ratio(k) = 1/(k+1), k = idx+1
        widths.append(cout_pad)

    meta = dict(in_channels=in_channels0, out_channels=args['out_channels'])
    # torch nn.PReLU() default: single shared alpha, init 0.25 -> baked as a constant.
    params = dict(weights=weights, ratios=tuple(ratios), kernel_size=K,
                  prelu_alpha=0.25, out_channels=args['out_channels'],
                  out_pad=_round_up(args['out_channels'], _LANE),
                  in_pad=_round_up(in_channels0, _LANE),
                  slab_channels=int(max(widths)))
    return params, meta


# ----------------------------------------------------------------------------
# Fused Pallas kernel: whole Predictor forward for one sample per grid step
# ----------------------------------------------------------------------------
def _fused_predictor_kernel(x_ref,
                            e0_w, e0_b, e1_w, e1_b,
                            r0_w3, r0_w1, r0_b3, r0_b1,
                            r1_w3, r1_w1, r1_b3, r1_b1,
                            r2_w3, r2_w1, r2_b3, r2_b1,
                            r3_w3, r3_w1, r3_b3, r3_b1,
                            o_ref, slab,
                            *, T, K, P, pad0, alpha, ratios):
    c_slab = slab.shape[1]

    # Zero ONLY the halo rows (padding_mode='zeros').  The valid rows are fully
    # rewritten every layer and nothing else of the scratch is ever read.
    slab[pad0 - P:pad0, :] = jnp.zeros((P, c_slab), jnp.float32)
    slab[pad0 + T:pad0 + T + P, :] = jnp.zeros((P, c_slab), jnp.float32)

    # Stage this sample's input (already lane-padded to a 128 multiple) at an
    # 8-sublane-aligned row offset -> full-width unmasked stores.
    cin_pad = x_ref.shape[-1]
    slab[pad0:pad0 + T, :cin_pad] = x_ref[0]

    def prelu(v):
        return jnp.where(v >= 0.0, v, alpha * v)

    def conv(w_ref):
        # K-tap conv as K shifted (T, cw) @ (cw, cout_pad) matmuls accumulated in
        # f32 — no materialized im2col temporary.  cw is a 128 multiple so every
        # weight-row / slab slice is aligned; operands are bf16 for MXU throughput.
        cw = w_ref.shape[0] // K
        acc = jnp.dot(slab[pad0 - P:pad0 - P + T, :cw].astype(jnp.bfloat16),
                      w_ref[0:cw, :], preferred_element_type=jnp.float32)
        for k in range(1, K):
            acc = acc + jnp.dot(
                slab[pad0 - P + k:pad0 - P + k + T, :cw].astype(jnp.bfloat16),
                w_ref[k * cw:(k + 1) * cw, :], preferred_element_type=jnp.float32)
        return acc

    def shortcut(w_ref):
        # 1x1 shortcut: single center-tap matmul (no zero-row MXU waste).
        cw = w_ref.shape[0]
        return jnp.dot(slab[pad0:pad0 + T, :cw].astype(jnp.bfloat16), w_ref[...],
                       preferred_element_type=jnp.float32)

    # Encoder layers: masked SkeletonConv + mean SkeletonPool (pre-folded) + PReLU.
    for w_ref, b_ref in ((e0_w, e0_b), (e1_w, e1_b)):
        h = prelu(conv(w_ref) + b_ref[...])
        slab[pad0:pad0 + T, :h.shape[-1]] = h          # lane-dense, sublane-aligned

    # global_motion: 4 ResidualBlocks (Kx conv main + 1x1 shortcut, ratio mix;
    # the last block has no activation and writes straight to the output ref).
    blocks = ((r0_w3, r0_w1, r0_b3, r0_b1, ratios[0], False),
              (r1_w3, r1_w1, r1_b3, r1_b1, ratios[1], False),
              (r2_w3, r2_w1, r2_b3, r2_b1, ratios[2], False),
              (r3_w3, r3_w1, r3_b3, r3_b1, ratios[3], True))
    for w3, w1, b3, b1, r, last in blocks:
        z = conv(w3) + b3[...]
        s = shortcut(w1) + b1[...]
        if not last:
            z = prelu(z)
        y = r * z + (1.0 - r) * s
        if last:
            o_ref[0] = y                                # lane-dense 128-wide output
        else:
            slab[pad0:pad0 + T, :y.shape[-1]] = y


def predictor_forward(params, x_nct):
    """x_nct: PyTorch Conv1d layout (N, C, T). Returns (N, out_channels, T)."""
    N, c_in, T = x_nct.shape
    out_c = params['out_channels']
    out_pad = params['out_pad']
    K = params['kernel_size']
    P = (K - 1) // 2
    pad0 = _round_up(max(P, 1), _SUB)          # 8-aligned start of the valid rows
    rows = _round_up(pad0 + T + P, _SUB)       # per-sample slab height
    cin_pad = params['in_pad']
    c_slab = params['slab_channels']
    weights = params['weights']

    # layout: (N, T, C) with channels zero-padded to a 128-lane multiple.  One
    # sample per grid step; the batch axis is 'parallel' so both TensorCores of
    # a v7x chip get work.  Weight index maps are constant -> DMA'd once, resident.
    x_ntc = jnp.transpose(x_nct, (0, 2, 1)).astype(jnp.float32)
    x_pad = jnp.zeros((N, T, cin_pad), jnp.float32).at[:, :, :c_in].set(x_ntc)

    kernel = functools.partial(
        _fused_predictor_kernel, T=T, K=K, P=P, pad0=pad0,
        alpha=params['prelu_alpha'], ratios=params['ratios'])

    out_padded = pl.pallas_call(
        kernel,
        out_shape=jax.ShapeDtypeStruct((N, T, out_pad), jnp.float32),
        grid=(N,),
        in_specs=[pl.BlockSpec((1, T, cin_pad), lambda s: (s, 0, 0))]
                 + [pl.BlockSpec(w.shape, lambda s: (0, 0)) for w in weights],
        out_specs=pl.BlockSpec((1, T, out_pad), lambda s: (s, 0, 0)),
        scratch_shapes=[pltpu.VMEM((rows, c_slab), jnp.float32)],
        compiler_params=pltpu.CompilerParams(dimension_semantics=("parallel",)),
    )(x_pad, *weights)

    # lane-dense (128-wide) kernel output; slice the real channels here.
    return jnp.transpose(out_padded[:, :, :out_c], (0, 2, 1))


# ----------------------------------------------------------------------------
if __name__ == "__main__":
    args = dict(channel_base=4, num_layers=2, kernel_size=3, skeleton_dist=1,
                skeleton_pool='mean', padding_mode='zeros', activation='relu',
                use_residual_blocks=False, extra_conv=0, out_channels=4)
    # 7-joint / 6-edge toy skeleton
    topology = [(0, 1), (1, 2), (0, 3), (3, 4), (0, 5), (5, 6)]

    key = jax.random.PRNGKey(0)
    key_x, key_p = jax.random.split(key)
    params, meta = build_predictor_params(key_p, args, topology)

    N, T = 2, 8
    C_in = meta['in_channels']                                   # 4 * 6 = 24
    x = jax.random.normal(key_x, (N, C_in, T), jnp.float32)      # PyTorch (N, C, T)

    fwd = jax.jit(lambda inp: predictor_forward(params, inp))
    out = jax.block_until_ready(fwd(x))
    assert out.shape == (N, args['out_channels'], T), out.shape
    assert bool(jnp.all(jnp.isfinite(out)))
    print("KERNEL_OK")
</pallas_src>

<mosaic_0001>
module attributes {stable_mosaic.version = 11 : i64} {
  func.func @_fused_predictor_kernel(%arg0: i32, %arg1: memref<1x8x128xf32, #tpu.memory_space<vmem>>, %arg2: memref<384x128xbf16, #tpu.memory_space<vmem>>, %arg3: memref<1x128xf32, #tpu.memory_space<vmem>>, %arg4: memref<384x128xbf16, #tpu.memory_space<vmem>>, %arg5: memref<1x128xf32, #tpu.memory_space<vmem>>, %arg6: memref<384x512xbf16, #tpu.memory_space<vmem>>, %arg7: memref<128x512xbf16, #tpu.memory_space<vmem>>, %arg8: memref<1x512xf32, #tpu.memory_space<vmem>>, %arg9: memref<1x512xf32, #tpu.memory_space<vmem>>, %arg10: memref<1536x256xbf16, #tpu.memory_space<vmem>>, %arg11: memref<512x256xbf16, #tpu.memory_space<vmem>>, %arg12: memref<1x256xf32, #tpu.memory_space<vmem>>, %arg13: memref<1x256xf32, #tpu.memory_space<vmem>>, %arg14: memref<768x128xbf16, #tpu.memory_space<vmem>>, %arg15: memref<256x128xbf16, #tpu.memory_space<vmem>>, %arg16: memref<1x128xf32, #tpu.memory_space<vmem>>, %arg17: memref<1x128xf32, #tpu.memory_space<vmem>>, %arg18: memref<384x128xbf16, #tpu.memory_space<vmem>>, %arg19: memref<128x128xbf16, #tpu.memory_space<vmem>>, %arg20: memref<1x128xf32, #tpu.memory_space<vmem>>, %arg21: memref<1x128xf32, #tpu.memory_space<vmem>>, %arg22: memref<1x8x128xf32, #tpu.memory_space<vmem>>, %arg23: memref<24x512xf32, #tpu.memory_space<vmem>>) attributes {dimension_semantics = [#tpu.dimension_semantics<parallel>], iteration_bounds = array<i64: 2>, scalar_prefetch = 0 : i64, scratch_operands = 1 : i64, tpu.core_type = #tpu.core_type<tc>, window_params = [{transform_indices = @transform_0, window_bounds = array<i64: 1, 8, 128>}, {pipeline_mode = #tpu.pipeline_mode<synchronous>, transform_indices = @transform_1, window_bounds = array<i64: 384, 128>}, {pipeline_mode = #tpu.pipeline_mode<synchronous>, transform_indices = @transform_2, window_bounds = array<i64: 1, 128>}, {pipeline_mode = #tpu.pipeline_mode<synchronous>, transform_indices = @transform_3, window_bounds = array<i64: 384, 128>}, {pipeline_mode = #tpu.pipeline_mode<synchronous>, transform_indices = @transform_4, window_bounds = array<i64: 1, 128>}, {pipeline_mode = #tpu.pipeline_mode<synchronous>, transform_indices = @transform_5, window_bounds = array<i64: 384, 512>}, {pipeline_mode = #tpu.pipeline_mode<synchronous>, transform_indices = @transform_6, window_bounds = array<i64: 128, 512>}, {pipeline_mode = #tpu.pipeline_mode<synchronous>, transform_indices = @transform_7, window_bounds = array<i64: 1, 512>}, {pipeline_mode = #tpu.pipeline_mode<synchronous>, transform_indices = @transform_8, window_bounds = array<i64: 1, 512>}, {pipeline_mode = #tpu.pipeline_mode<synchronous>, transform_indices = @transform_9, window_bounds = array<i64: 1536, 256>}, {pipeline_mode = #tpu.pipeline_mode<synchronous>, transform_indices = @transform_10, window_bounds = array<i64: 512, 256>}, {pipeline_mode = #tpu.pipeline_mode<synchronous>, transform_indices = @transform_11, window_bounds = array<i64: 1, 256>}, {pipeline_mode = #tpu.pipeline_mode<synchronous>, transform_indices = @transform_12, window_bounds = array<i64: 1, 256>}, {pipeline_mode = #tpu.pipeline_mode<synchronous>, transform_indices = @transform_13, window_bounds = array<i64: 768, 128>}, {pipeline_mode = #tpu.pipeline_mode<synchronous>, transform_indices = @transform_14, window_bounds = array<i64: 256, 128>}, {pipeline_mode = #tpu.pipeline_mode<synchronous>, transform_indices = @transform_15, window_bounds = array<i64: 1, 128>}, {pipeline_mode = #tpu.pipeline_mode<synchronous>, transform_indices = @transform_16, window_bounds = array<i64: 1, 128>}, {pipeline_mode = #tpu.pipeline_mode<synchronous>, transform_indices = @transform_17, window_bounds = array<i64: 384, 128>}, {pipeline_mode = #tpu.pipeline_mode<synchronous>, transform_indices = @transform_18, window_bounds = array<i64: 128, 128>}, {pipeline_mode = #tpu.pipeline_mode<synchronous>, transform_indices = @transform_19, window_bounds = array<i64: 1, 128>}, {pipeline_mode = #tpu.pipeline_mode<synchronous>, transform_indices = @transform_20, window_bounds = array<i64: 1, 128>}, {transform_indices = @transform_21, window_bounds = array<i64: 1, 8, 128>}]} {
    %cst = arith.constant 0.000000e+00 : f32
    %0 = vector.broadcast %cst : f32 to vector<1x512xf32>
    %c7 = arith.constant 7 : index
    %c0 = arith.constant 0 : index
    %1 = vector.load %arg23[%c7, %c0] : memref<24x512xf32, #tpu.memory_space<vmem>>, vector<1x512xf32>
    tpu.vector_store %arg23[%c7, %c0], %0 {strides = array<i32>} : memref<24x512xf32, #tpu.memory_space<vmem>>, vector<1x512xf32>,
    %cst_0 = arith.constant 0.000000e+00 : f32
    %2 = vector.broadcast %cst_0 : f32 to vector<1x512xf32>
    %c16 = arith.constant 16 : index
    %c0_1 = arith.constant 0 : index
    %3 = vector.load %arg23[%c16, %c0_1] : memref<24x512xf32, #tpu.memory_space<vmem>>, vector<1x512xf32>
    tpu.vector_store %arg23[%c16, %c0_1], %2 {strides = array<i32>} : memref<24x512xf32, #tpu.memory_space<vmem>>, vector<1x512xf32>,
    %c0_2 = arith.constant 0 : index
    %c0_3 = arith.constant 0 : index
    %c0_4 = arith.constant 0 : index
    %4 = vector.load %arg1[%c0_2, %c0_3, %c0_4] : memref<1x8x128xf32, #tpu.memory_space<vmem>>, vector<1x8x128xf32>
    %5 = vector.shape_cast %4 : vector<1x8x128xf32> to vector<8x128xf32>
    %c8 = arith.constant 8 : index
    %c0_5 = arith.constant 0 : index
    %6 = vector.load %arg23[%c8, %c0_5] : memref<24x512xf32, #tpu.memory_space<vmem>>, vector<8x128xf32>
    tpu.vector_store %arg23[%c8, %c0_5], %5 {strides = array<i32>} : memref<24x512xf32, #tpu.memory_space<vmem>>, vector<8x128xf32>,
    %c7_6 = arith.constant 7 : index
    %c0_7 = arith.constant 0 : index
    %7 = vector.load %arg23[%c7_6, %c0_7] : memref<24x512xf32, #tpu.memory_space<vmem>>, vector<8x128xf32>
    %8 = arith.truncf %7 : vector<8x128xf32> to vector<8x128xbf16>
    %c0_8 = arith.constant 0 : index
    %c0_9 = arith.constant 0 : index
    %9 = vector.load %arg2[%c0_8, %c0_9] : memref<384x128xbf16, #tpu.memory_space<vmem>>, vector<128x128xbf16>
    %cst_10 = arith.constant dense<0.000000e+00> : vector<8x128xf32>
    %10 = tpu.matmul %8, %9, %cst_10 {dimension_numbers = #tpu.dot_dimension_numbers<[1], [0], [0], [1], [0, 0, 1, 1], [], []>} : vector<8x128xbf16>, vector<128x128xbf16>, vector<8x128xf32> -> vector<8x128xf32>
    %c8_11 = arith.constant 8 : index
    %c0_12 = arith.constant 0 : index
    %11 = vector.load %arg23[%c8_11, %c0_12] : memref<24x512xf32, #tpu.memory_space<vmem>>, vector<8x128xf32>
    %12 = arith.truncf %11 : vector<8x128xf32> to vector<8x128xbf16>
    %c128 = arith.constant 128 : index
    %c0_13 = arith.constant 0 : index
    %13 = vector.load %arg2[%c128, %c0_13] : memref<384x128xbf16, #tpu.memory_space<vmem>>, vector<128x128xbf16>
    %cst_14 = arith.constant dense<0.000000e+00> : vector<8x128xf32>
    %14 = tpu.matmul %12, %13, %cst_14 {dimension_numbers = #tpu.dot_dimension_numbers<[1], [0], [0], [1], [0, 0, 1, 1], [], []>} : vector<8x128xbf16>, vector<128x128xbf16>, vector<8x128xf32> -> vector<8x128xf32>
    %15 = arith.addf %10, %14 : vector<8x128xf32>
    %c9 = arith.constant 9 : index
    %c0_15 = arith.constant 0 : index
    %16 = vector.load %arg23[%c9, %c0_15] : memref<24x512xf32, #tpu.memory_space<vmem>>, vector<8x128xf32>
    %17 = arith.truncf %16 : vector<8x128xf32> to vector<8x128xbf16>
    %c256 = arith.constant 256 : index
    %c0_16 = arith.constant 0 : index
    %18 = vector.load %arg2[%c256, %c0_16] : memref<384x128xbf16, #tpu.memory_space<vmem>>, vector<128x128xbf16>
    %cst_17 = arith.constant dense<0.000000e+00> : vector<8x128xf32>
    %19 = tpu.matmul %17, %18, %cst_17 {dimension_numbers = #tpu.dot_dimension_numbers<[1], [0], [0], [1], [0, 0, 1, 1], [], []>} : vector<8x128xbf16>, vector<128x128xbf16>, vector<8x128xf32> -> vector<8x128xf32>
    %20 = arith.addf %15, %19 : vector<8x128xf32>
    %c0_18 = arith.constant 0 : index
    %c0_19 = arith.constant 0 : index
    %21 = vector.load %arg3[%c0_18, %c0_19] : memref<1x128xf32, #tpu.memory_space<vmem>>, vector<1x128xf32>
    %22 = vector.broadcast %21 : vector<1x128xf32> to vector<8x128xf32>
    %23 = arith.addf %20, %22 : vector<8x128xf32>
    %cst_20 = arith.constant 0.000000e+00 : f32
    %24 = vector.broadcast %cst_20 : f32 to vector<8x128xf32>
    %25 = arith.cmpf oge, %23, %24 : vector<8x128xf32>
    %cst_21 = arith.constant 2.500000e-01 : f32
    %26 = vector.broadcast %cst_21 : f32 to vector<8x128xf32>
    %27 = arith.mulf %26, %23 : vector<8x128xf32>
    %28 = arith.select %25, %23, %27 : vector<8x128xi1>, vector<8x128xf32>
    %c8_22 = arith.constant 8 : index
    %c0_23 = arith.constant 0 : index
    %29 = vector.load %arg23[%c8_22, %c0_23] : memref<24x512xf32, #tpu.memory_space<vmem>>, vector<8x128xf32>
    tpu.vector_store %arg23[%c8_22, %c0_23], %28 {strides = array<i32>} : memref<24x512xf32, #tpu.memory_space<vmem>>, vector<8x128xf32>,
    %c7_24 = arith.constant 7 : index
    %c0_25 = arith.constant 0 : index
    %30 = vector.load %arg23[%c7_24, %c0_25] : memref<24x512xf32, #tpu.memory_space<vmem>>, vector<8x128xf32>
    %31 = arith.truncf %30 : vector<8x128xf32> to vector<8x128xbf16>
    %c0_26 = arith.constant 0 : index
    %c0_27 = arith.constant 0 : index
    %32 = vector.load %arg4[%c0_26, %c0_27] : memref<384x128xbf16, #tpu.memory_space<vmem>>, vector<128x128xbf16>
    %cst_28 = arith.constant dense<0.000000e+00> : vector<8x128xf32>
    %33 = tpu.matmul %31, %32, %cst_28 {dimension_numbers = #tpu.dot_dimension_numbers<[1], [0], [0], [1], [0, 0, 1, 1], [], []>} : vector<8x128xbf16>, vector<128x128xbf16>, vector<8x128xf32> -> vector<8x128xf32>
    %c8_29 = arith.constant 8 : index
    %c0_30 = arith.constant 0 : index
    %34 = vector.load %arg23[%c8_29, %c0_30] : memref<24x512xf32, #tpu.memory_space<vmem>>, vector<8x128xf32>
    %35 = arith.truncf %34 : vector<8x128xf32> to vector<8x128xbf16>
    %c128_31 = arith.constant 128 : index
    %c0_32 = arith.constant 0 : index
    %36 = vector.load %arg4[%c128_31, %c0_32] : memref<384x128xbf16, #tpu.memory_space<vmem>>, vector<128x128xbf16>
    %cst_33 = arith.constant dense<0.000000e+00> : vector<8x128xf32>
    %37 = tpu.matmul %35, %36, %cst_33 {dimension_numbers = #tpu.dot_dimension_numbers<[1], [0], [0], [1], [0, 0, 1, 1], [], []>} : vector<8x128xbf16>, vector<128x128xbf16>, vector<8x128xf32> -> vector<8x128xf32>
    %38 = arith.addf %33, %37 : vector<8x128xf32>
    %c9_34 = arith.constant 9 : index
    %c0_35 = arith.constant 0 : index
    %39 = vector.load %arg23[%c9_34, %c0_35] : memref<24x512xf32, #tpu.memory_space<vmem>>, vector<8x128xf32>
    %40 = arith.truncf %39 : vector<8x128xf32> to vector<8x128xbf16>
    %c256_36 = arith.constant 256 : index
    %c0_37 = arith.constant 0 : index
    %41 = vector.load %arg4[%c256_36, %c0_37] : memref<384x128xbf16, #tpu.memory_space<vmem>>, vector<128x128xbf16>
    %cst_38 = arith.constant dense<0.000000e+00> : vector<8x128xf32>
    %42 = tpu.matmul %40, %41, %cst_38 {dimension_numbers = #tpu.dot_dimension_numbers<[1], [0], [0], [1], [0, 0, 1, 1], [], []>} : vector<8x128xbf16>, vector<128x128xbf16>, vector<8x128xf32> -> vector<8x128xf32>
    %43 = arith.addf %38, %42 : vector<8x128xf32>
    %c0_39 = arith.constant 0 : index
    %c0_40 = arith.constant 0 : index
    %44 = vector.load %arg5[%c0_39, %c0_40] : memref<1x128xf32, #tpu.memory_space<vmem>>, vector<1x128xf32>
    %45 = vector.broadcast %44 : vector<1x128xf32> to vector<8x128xf32>
    %46 = arith.addf %43, %45 : vector<8x128xf32>
    %cst_41 = arith.constant 0.000000e+00 : f32
    %47 = vector.broadcast %cst_41 : f32 to vector<8x128xf32>
    %48 = arith.cmpf oge, %46, %47 : vector<8x128xf32>
    %cst_42 = arith.constant 2.500000e-01 : f32
    %49 = vector.broadcast %cst_42 : f32 to vector<8x128xf32>
    %50 = arith.mulf %49, %46 : vector<8x128xf32>
    %51 = arith.select %48, %46, %50 : vector<8x128xi1>, vector<8x128xf32>
    %c8_43 = arith.constant 8 : index
    %c0_44 = arith.constant 0 : index
    %52 = vector.load %arg23[%c8_43, %c0_44] : memref<24x512xf32, #tpu.memory_space<vmem>>, vector<8x128xf32>
    tpu.vector_store %arg23[%c8_43, %c0_44], %51 {strides = array<i32>} : memref<24x512xf32, #tpu.memory_space<vmem>>, vector<8x128xf32>,
    %c7_45 = arith.constant 7 : index
    %c0_46 = arith.constant 0 : index
    %53 = vector.load %arg23[%c7_45, %c0_46] : memref<24x512xf32, #tpu.memory_space<vmem>>, vector<8x128xf32>
    %54 = arith.truncf %53 : vector<8x128xf32> to vector<8x128xbf16>
    %c0_47 = arith.constant 0 : index
    %c0_48 = arith.constant 0 : index
    %55 = vector.load %arg6[%c0_47, %c0_48] : memref<384x512xbf16, #tpu.memory_space<vmem>>, vector<128x512xbf16>
    %cst_49 = arith.constant dense<0.000000e+00> : vector<8x512xf32>
    %56 = tpu.matmul %54, %55, %cst_49 {dimension_numbers = #tpu.dot_dimension_numbers<[1], [0], [0], [1], [0, 0, 1, 1], [], []>} : vector<8x128xbf16>, vector<128x512xbf16>, vector<8x512xf32> -> vector<8x512xf32>
    %c8_50 = arith.constant 8 : index
    %c0_51 = arith.constant 0 : index
    %57 = vector.load %arg23[%c8_50, %c0_51] : memref<24x512xf32, #tpu.memory_space<vmem>>, vector<8x128xf32>
    %58 = arith.truncf %57 : vector<8x128xf32> to vector<8x128xbf16>
    %c128_52 = arith.constant 128 : index
    %c0_53 = arith.constant 0 : index
    %59 = vector.load %arg6[%c128_52, %c0_53] : memref<384x512xbf16, #tpu.memory_space<vmem>>, vector<128x512xbf16>
    %cst_54 = arith.constant dense<0.000000e+00> : vector<8x512xf32>
    %60 = tpu.matmul %58, %59, %cst_54 {dimension_numbers = #tpu.dot_dimension_numbers<[1], [0], [0], [1], [0, 0, 1, 1], [], []>} : vector<8x128xbf16>, vector<128x512xbf16>, vector<8x512xf32> -> vector<8x512xf32>
    %61 = arith.addf %56, %60 : vector<8x512xf32>
    %c9_55 = arith.constant 9 : index
    %c0_56 = arith.constant 0 : index
    %62 = vector.load %arg23[%c9_55, %c0_56] : memref<24x512xf32, #tpu.memory_space<vmem>>, vector<8x128xf32>
    %63 = arith.truncf %62 : vector<8x128xf32> to vector<8x128xbf16>
    %c256_57 = arith.constant 256 : index
    %c0_58 = arith.constant 0 : index
    %64 = vector.load %arg6[%c256_57, %c0_58] : memref<384x512xbf16, #tpu.memory_space<vmem>>, vector<128x512xbf16>
    %cst_59 = arith.constant dense<0.000000e+00> : vector<8x512xf32>
    %65 = tpu.matmul %63, %64, %cst_59 {dimension_numbers = #tpu.dot_dimension_numbers<[1], [0], [0], [1], [0, 0, 1, 1], [], []>} : vector<8x128xbf16>, vector<128x512xbf16>, vector<8x512xf32> -> vector<8x512xf32>
    %66 = arith.addf %61, %65 : vector<8x512xf32>
    %c0_60 = arith.constant 0 : index
    %c0_61 = arith.constant 0 : index
    %67 = vector.load %arg8[%c0_60, %c0_61] : memref<1x512xf32, #tpu.memory_space<vmem>>, vector<1x512xf32>
    %68 = vector.broadcast %67 : vector<1x512xf32> to vector<8x512xf32>
    %69 = arith.addf %66, %68 : vector<8x512xf32>
    %c8_62 = arith.constant 8 : index
    %c0_63 = arith.constant 0 : index
    %70 = vector.load %arg23[%c8_62, %c0_63] : memref<24x512xf32, #tpu.memory_space<vmem>>, vector<8x128xf32>
    %71 = arith.truncf %70 : vector<8x128xf32> to vector<8x128xbf16>
    %c0_64 = arith.constant 0 : index
    %c0_65 = arith.constant 0 : index
    %72 = vector.load %arg7[%c0_64, %c0_65] : memref<128x512xbf16, #tpu.memory_space<vmem>>, vector<128x512xbf16>
    %cst_66 = arith.constant dense<0.000000e+00> : vector<8x512xf32>
    %73 = tpu.matmul %71, %72, %cst_66 {dimension_numbers = #tpu.dot_dimension_numbers<[1], [0], [0], [1], [0, 0, 1, 1], [], []>} : vector<8x128xbf16>, vector<128x512xbf16>, vector<8x512xf32> -> vector<8x512xf32>
    %c0_67 = arith.constant 0 : index
    %c0_68 = arith.constant 0 : index
    %74 = vector.load %arg9[%c0_67, %c0_68] : memref<1x512xf32, #tpu.memory_space<vmem>>, vector<1x512xf32>
    %75 = vector.broadcast %74 : vector<1x512xf32> to vector<8x512xf32>
    %76 = arith.addf %73, %75 : vector<8x512xf32>
    %cst_69 = arith.constant 0.000000e+00 : f32
    %77 = vector.broadcast %cst_69 : f32 to vector<8x512xf32>
    %78 = arith.cmpf oge, %69, %77 : vector<8x512xf32>
    %cst_70 = arith.constant 2.500000e-01 : f32
    %79 = vector.broadcast %cst_70 : f32 to vector<8x512xf32>
    %80 = arith.mulf %79, %69 : vector<8x512xf32>
    %81 = arith.select %78, %69, %80 : vector<8x512xi1>, vector<8x512xf32>
    %cst_71 = arith.constant 5.000000e-01 : f32
    %82 = vector.broadcast %cst_71 : f32 to vector<8x512xf32>
    %83 = arith.mulf %82, %81 : vector<8x512xf32>
    %cst_72 = arith.constant 5.000000e-01 : f32
    %84 = vector.broadcast %cst_72 : f32 to vector<8x512xf32>
    %85 = arith.mulf %84, %76 : vector<8x512xf32>
    %86 = arith.addf %83, %85 : vector<8x512xf32>
    %c8_73 = arith.constant 8 : index
    %c0_74 = arith.constant 0 : index
    %87 = vector.load %arg23[%c8_73, %c0_74] : memref<24x512xf32, #tpu.memory_space<vmem>>, vector<8x512xf32>
    tpu.vector_store %arg23[%c8_73, %c0_74], %86 {strides = array<i32>} : memref<24x512xf32, #tpu.memory_space<vmem>>, vector<8x512xf32>,
    %c7_75 = arith.constant 7 : index
    %c0_76 = arith.constant 0 : index
    %88 = vector.load %arg23[%c7_75, %c0_76] : memref<24x512xf32, #tpu.memory_space<vmem>>, vector<8x512xf32>
    %89 = arith.truncf %88 : vector<8x512xf32> to vector<8x512xbf16>
    %c0_77 = arith.constant 0 : index
    %c0_78 = arith.constant 0 : index
    %90 = vector.load %arg10[%c0_77, %c0_78] : memref<1536x256xbf16, #tpu.memory_space<vmem>>, vector<512x256xbf16>
    %cst_79 = arith.constant dense<0.000000e+00> : vector<8x256xf32>
    %91 = tpu.matmul %89, %90, %cst_79 {dimension_numbers = #tpu.dot_dimension_numbers<[1], [0], [0], [1], [0, 0, 1, 1], [], []>} : vector<8x512xbf16>, vector<512x256xbf16>, vector<8x256xf32> -> vector<8x256xf32>
    %c8_80 = arith.constant 8 : index
    %c0_81 = arith.constant 0 : index
    %92 = vector.load %arg23[%c8_80, %c0_81] : memref<24x512xf32, #tpu.memory_space<vmem>>, vector<8x512xf32>
    %93 = arith.truncf %92 : vector<8x512xf32> to vector<8x512xbf16>
    %c512 = arith.constant 512 : index
    %c0_82 = arith.constant 0 : index
    %94 = vector.load %arg10[%c512, %c0_82] : memref<1536x256xbf16, #tpu.memory_space<vmem>>, vector<512x256xbf16>
    %cst_83 = arith.constant dense<0.000000e+00> : vector<8x256xf32>
    %95 = tpu.matmul %93, %94, %cst_83 {dimension_numbers = #tpu.dot_dimension_numbers<[1], [0], [0], [1], [0, 0, 1, 1], [], []>} : vector<8x512xbf16>, vector<512x256xbf16>, vector<8x256xf32> -> vector<8x256xf32>
    %96 = arith.addf %91, %95 : vector<8x256xf32>
    %c9_84 = arith.constant 9 : index
    %c0_85 = arith.constant 0 : index
    %97 = vector.load %arg23[%c9_84, %c0_85] : memref<24x512xf32, #tpu.memory_space<vmem>>, vector<8x512xf32>
    %98 = arith.truncf %97 : vector<8x512xf32> to vector<8x512xbf16>
    %c1024 = arith.constant 1024 : index
    %c0_86 = arith.constant 0 : index
    %99 = vector.load %arg10[%c1024, %c0_86] : memref<1536x256xbf16, #tpu.memory_space<vmem>>, vector<512x256xbf16>
    %cst_87 = arith.constant dense<0.000000e+00> : vector<8x256xf32>
    %100 = tpu.matmul %98, %99, %cst_87 {dimension_numbers = #tpu.dot_dimension_numbers<[1], [0], [0], [1], [0, 0, 1, 1], [], []>} : vector<8x512xbf16>, vector<512x256xbf16>, vector<8x256xf32> -> vector<8x256xf32>
    %101 = arith.addf %96, %100 : vector<8x256xf32>
    %c0_88 = arith.constant 0 : index
    %c0_89 = arith.constant 0 : index
    %102 = vector.load %arg12[%c0_88, %c0_89] : memref<1x256xf32, #tpu.memory_space<vmem>>, vector<1x256xf32>
    %103 = vector.broadcast %102 : vector<1x256xf32> to vector<8x256xf32>
    %104 = arith.addf %101, %103 : vector<8x256xf32>
    %c8_90 = arith.constant 8 : index
    %c0_91 = arith.constant 0 : index
    %105 = vector.load %arg23[%c8_90, %c0_91] : memref<24x512xf32, #tpu.memory_space<vmem>>, vector<8x512xf32>
    %106 = arith.truncf %105 : vector<8x512xf32> to vector<8x512xbf16>
    %c0_92 = arith.constant 0 : index
    %c0_93 = arith.constant 0 : index
    %107 = vector.load %arg11[%c0_92, %c0_93] : memref<512x256xbf16, #tpu.memory_space<vmem>>, vector<512x256xbf16>
    %cst_94 = arith.constant dense<0.000000e+00> : vector<8x256xf32>
    %108 = tpu.matmul %106, %107, %cst_94 {dimension_numbers = #tpu.dot_dimension_numbers<[1], [0], [0], [1], [0, 0, 1, 1], [], []>} : vector<8x512xbf16>, vector<512x256xbf16>, vector<8x256xf32> -> vector<8x256xf32>
    %c0_95 = arith.constant 0 : index
    %c0_96 = arith.constant 0 : index
    %109 = vector.load %arg13[%c0_95, %c0_96] : memref<1x256xf32, #tpu.memory_space<vmem>>, vector<1x256xf32>
    %110 = vector.broadcast %109 : vector<1x256xf32> to vector<8x256xf32>
    %111 = arith.addf %108, %110 : vector<8x256xf32>
    %cst_97 = arith.constant 0.000000e+00 : f32
    %112 = vector.broadcast %cst_97 : f32 to vector<8x256xf32>
    %113 = arith.cmpf oge, %104, %112 : vector<8x256xf32>
    %cst_98 = arith.constant 2.500000e-01 : f32
    %114 = vector.broadcast %cst_98 : f32 to vector<8x256xf32>
    %115 = arith.mulf %114, %104 : vector<8x256xf32>
    %116 = arith.select %113, %104, %115 : vector<8x256xi1>, vector<8x256xf32>
    %cst_99 = arith.constant 0.333333343 : f32
    %117 = vector.broadcast %cst_99 : f32 to vector<8x256xf32>
    %118 = arith.mulf %117, %116 : vector<8x256xf32>
    %cst_100 = arith.constant 0.666666686 : f32
    %119 = vector.broadcast %cst_100 : f32 to vector<8x256xf32>
    %120 = arith.mulf %119, %111 : vector<8x256xf32>
    %121 = arith.addf %118, %120 : vector<8x256xf32>
    %c8_101 = arith.constant 8 : index
    %c0_102 = arith.constant 0 : index
    %122 = vector.load %arg23[%c8_101, %c0_102] : memref<24x512xf32, #tpu.memory_space<vmem>>, vector<8x256xf32>
    tpu.vector_store %arg23[%c8_101, %c0_102], %121 {strides = array<i32>} : memref<24x512xf32, #tpu.memory_space<vmem>>, vector<8x256xf32>,
    %c7_103 = arith.constant 7 : index
    %c0_104 = arith.constant 0 : index
    %123 = vector.load %arg23[%c7_103, %c0_104] : memref<24x512xf32, #tpu.memory_space<vmem>>, vector<8x256xf32>
    %124 = arith.truncf %123 : vector<8x256xf32> to vector<8x256xbf16>
    %c0_105 = arith.constant 0 : index
    %c0_106 = arith.constant 0 : index
    %125 = vector.load %arg14[%c0_105, %c0_106] : memref<768x128xbf16, #tpu.memory_space<vmem>>, vector<256x128xbf16>
    %cst_107 = arith.constant dense<0.000000e+00> : vector<8x128xf32>
    %126 = tpu.matmul %124, %125, %cst_107 {dimension_numbers = #tpu.dot_dimension_numbers<[1], [0], [0], [1], [0, 0, 1, 1], [], []>} : vector<8x256xbf16>, vector<256x128xbf16>, vector<8x128xf32> -> vector<8x128xf32>
    %c8_108 = arith.constant 8 : index
    %c0_109 = arith.constant 0 : index
    %127 = vector.load %arg23[%c8_108, %c0_109] : memref<24x512xf32, #tpu.memory_space<vmem>>, vector<8x256xf32>
    %128 = arith.truncf %127 : vector<8x256xf32> to vector<8x256xbf16>
    %c256_110 = arith.constant 256 : index
    %c0_111 = arith.constant 0 : index
    %129 = vector.load %arg14[%c256_110, %c0_111] : memref<768x128xbf16, #tpu.memory_space<vmem>>, vector<256x128xbf16>
    %cst_112 = arith.constant dense<0.000000e+00> : vector<8x128xf32>
    %130 = tpu.matmul %128, %129, %cst_112 {dimension_numbers = #tpu.dot_dimension_numbers<[1], [0], [0], [1], [0, 0, 1, 1], [], []>} : vector<8x256xbf16>, vector<256x128xbf16>, vector<8x128xf32> -> vector<8x128xf32>
    %131 = arith.addf %126, %130 : vector<8x128xf32>
    %c9_113 = arith.constant 9 : index
    %c0_114 = arith.constant 0 : index
    %132 = vector.load %arg23[%c9_113, %c0_114] : memref<24x512xf32, #tpu.memory_space<vmem>>, vector<8x256xf32>
    %133 = arith.truncf %132 : vector<8x256xf32> to vector<8x256xbf16>
    %c512_115 = arith.constant 512 : index
    %c0_116 = arith.constant 0 : index
    %134 = vector.load %arg14[%c512_115, %c0_116] : memref<768x128xbf16, #tpu.memory_space<vmem>>, vector<256x128xbf16>
    %cst_117 = arith.constant dense<0.000000e+00> : vector<8x128xf32>
    %135 = tpu.matmul %133, %134, %cst_117 {dimension_numbers = #tpu.dot_dimension_numbers<[1], [0], [0], [1], [0, 0, 1, 1], [], []>} : vector<8x256xbf16>, vector<256x128xbf16>, vector<8x128xf32> -> vector<8x128xf32>
    %136 = arith.addf %131, %135 : vector<8x128xf32>
    %c0_118 = arith.constant 0 : index
    %c0_119 = arith.constant 0 : index
    %137 = vector.load %arg16[%c0_118, %c0_119] : memref<1x128xf32, #tpu.memory_space<vmem>>, vector<1x128xf32>
    %138 = vector.broadcast %137 : vector<1x128xf32> to vector<8x128xf32>
    %139 = arith.addf %136, %138 : vector<8x128xf32>
    %c8_120 = arith.constant 8 : index
    %c0_121 = arith.constant 0 : index
    %140 = vector.load %arg23[%c8_120, %c0_121] : memref<24x512xf32, #tpu.memory_space<vmem>>, vector<8x256xf32>
    %141 = arith.truncf %140 : vector<8x256xf32> to vector<8x256xbf16>
    %c0_122 = arith.constant 0 : index
    %c0_123 = arith.constant 0 : index
    %142 = vector.load %arg15[%c0_122, %c0_123] : memref<256x128xbf16, #tpu.memory_space<vmem>>, vector<256x128xbf16>
    %cst_124 = arith.constant dense<0.000000e+00> : vector<8x128xf32>
    %143 = tpu.matmul %141, %142, %cst_124 {dimension_numbers = #tpu.dot_dimension_numbers<[1], [0], [0], [1], [0, 0, 1, 1], [], []>} : vector<8x256xbf16>, vector<256x128xbf16>, vector<8x128xf32> -> vector<8x128xf32>
    %c0_125 = arith.constant 0 : index
    %c0_126 = arith.constant 0 : index
    %144 = vector.load %arg17[%c0_125, %c0_126] : memref<1x128xf32, #tpu.memory_space<vmem>>, vector<1x128xf32>
    %145 = vector.broadcast %144 : vector<1x128xf32> to vector<8x128xf32>
    %146 = arith.addf %143, %145 : vector<8x128xf32>
    %cst_127 = arith.constant 0.000000e+00 : f32
    %147 = vector.broadcast %cst_127 : f32 to vector<8x128xf32>
    %148 = arith.cmpf oge, %139, %147 : vector<8x128xf32>
    %cst_128 = arith.constant 2.500000e-01 : f32
    %149 = vector.broadcast %cst_128 : f32 to vector<8x128xf32>
    %150 = arith.mulf %149, %139 : vector<8x128xf32>
    %151 = arith.select %148, %139, %150 : vector<8x128xi1>, vector<8x128xf32>
    %cst_129 = arith.constant 2.500000e-01 : f32
    %152 = vector.broadcast %cst_129 : f32 to vector<8x128xf32>
    %153 = arith.mulf %152, %151 : vector<8x128xf32>
    %cst_130 = arith.constant 7.500000e-01 : f32
    %154 = vector.broadcast %cst_130 : f32 to vector<8x128xf32>
    %155 = arith.mulf %154, %146 : vector<8x128xf32>
    %156 = arith.addf %153, %155 : vector<8x128xf32>
    %c8_131 = arith.constant 8 : index
    %c0_132 = arith.constant 0 : index
    %157 = vector.load %arg23[%c8_131, %c0_132] : memref<24x512xf32, #tpu.memory_space<vmem>>, vector<8x128xf32>
    tpu.vector_store %arg23[%c8_131, %c0_132], %156 {strides = array<i32>} : memref<24x512xf32, #tpu.memory_space<vmem>>, vector<8x128xf32>,
    %c7_133 = arith.constant 7 : index
    %c0_134 = arith.constant 0 : index
    %158 = vector.load %arg23[%c7_133, %c0_134] : memref<24x512xf32, #tpu.memory_space<vmem>>, vector<8x128xf32>
    %159 = arith.truncf %158 : vector<8x128xf32> to vector<8x128xbf16>
    %c0_135 = arith.constant 0 : index
    %c0_136 = arith.constant 0 : index
    %160 = vector.load %arg18[%c0_135, %c0_136] : memref<384x128xbf16, #tpu.memory_space<vmem>>, vector<128x128xbf16>
    %cst_137 = arith.constant dense<0.000000e+00> : vector<8x128xf32>
    %161 = tpu.matmul %159, %160, %cst_137 {dimension_numbers = #tpu.dot_dimension_numbers<[1], [0], [0], [1], [0, 0, 1, 1], [], []>} : vector<8x128xbf16>, vector<128x128xbf16>, vector<8x128xf32> -> vector<8x128xf32>
    %c8_138 = arith.constant 8 : index
    %c0_139 = arith.constant 0 : index
    %162 = vector.load %arg23[%c8_138, %c0_139] : memref<24x512xf32, #tpu.memory_space<vmem>>, vector<8x128xf32>
    %163 = arith.truncf %162 : vector<8x128xf32> to vector<8x128xbf16>
    %c128_140 = arith.constant 128 : index
    %c0_141 = arith.constant 0 : index
    %164 = vector.load %arg18[%c128_140, %c0_141] : memref<384x128xbf16, #tpu.memory_space<vmem>>, vector<128x128xbf16>
    %cst_142 = arith.constant dense<0.000000e+00> : vector<8x128xf32>
    %165 = tpu.matmul %163, %164, %cst_142 {dimension_numbers = #tpu.dot_dimension_numbers<[1], [0], [0], [1], [0, 0, 1, 1], [], []>} : vector<8x128xbf16>, vector<128x128xbf16>, vector<8x128xf32> -> vector<8x128xf32>
    %166 = arith.addf %161, %165 : vector<8x128xf32>
    %c9_143 = arith.constant 9 : index
    %c0_144 = arith.constant 0 : index
    %167 = vector.load %arg23[%c9_143, %c0_144] : memref<24x512xf32, #tpu.memory_space<vmem>>, vector<8x128xf32>
    %168 = arith.truncf %167 : vector<8x128xf32> to vector<8x128xbf16>
    %c256_145 = arith.constant 256 : index
    %c0_146 = arith.constant 0 : index
    %169 = vector.load %arg18[%c256_145, %c0_146] : memref<384x128xbf16, #tpu.memory_space<vmem>>, vector<128x128xbf16>
    %cst_147 = arith.constant dense<0.000000e+00> : vector<8x128xf32>
    %170 = tpu.matmul %168, %169, %cst_147 {dimension_numbers = #tpu.dot_dimension_numbers<[1], [0], [0], [1], [0, 0, 1, 1], [], []>} : vector<8x128xbf16>, vector<128x128xbf16>, vector<8x128xf32> -> vector<8x128xf32>
    %171 = arith.addf %166, %170 : vector<8x128xf32>
    %c0_148 = arith.constant 0 : index
    %c0_149 = arith.constant 0 : index
    %172 = vector.load %arg20[%c0_148, %c0_149] : memref<1x128xf32, #tpu.memory_space<vmem>>, vector<1x128xf32>
    %173 = vector.broadcast %172 : vector<1x128xf32> to vector<8x128xf32>
    %174 = arith.addf %171, %173 : vector<8x128xf32>
    %c8_150 = arith.constant 8 : index
    %c0_151 = arith.constant 0 : index
    %175 = vector.load %arg23[%c8_150, %c0_151] : memref<24x512xf32, #tpu.memory_space<vmem>>, vector<8x128xf32>
    %176 = arith.truncf %175 : vector<8x128xf32> to vector<8x128xbf16>
    %c0_152 = arith.constant 0 : index
    %c0_153 = arith.constant 0 : index
    %177 = vector.load %arg19[%c0_152, %c0_153] : memref<128x128xbf16, #tpu.memory_space<vmem>>, vector<128x128xbf16>
    %cst_154 = arith.constant dense<0.000000e+00> : vector<8x128xf32>
    %178 = tpu.matmul %176, %177, %cst_154 {dimension_numbers = #tpu.dot_dimension_numbers<[1], [0], [0], [1], [0, 0, 1, 1], [], []>} : vector<8x128xbf16>, vector<128x128xbf16>, vector<8x128xf32> -> vector<8x128xf32>
    %c0_155 = arith.constant 0 : index
    %c0_156 = arith.constant 0 : index
    %179 = vector.load %arg21[%c0_155, %c0_156] : memref<1x128xf32, #tpu.memory_space<vmem>>, vector<1x128xf32>
    %180 = vector.broadcast %179 : vector<1x128xf32> to vector<8x128xf32>
    %181 = arith.addf %178, %180 : vector<8x128xf32>
    %cst_157 = arith.constant 2.000000e-01 : f32
    %182 = vector.broadcast %cst_157 : f32 to vector<8x128xf32>
    %183 = arith.mulf %182, %174 : vector<8x128xf32>
    %cst_158 = arith.constant 8.000000e-01 : f32
    %184 = vector.broadcast %cst_158 : f32 to vector<8x128xf32>
    %185 = arith.mulf %184, %181 : vector<8x128xf32>
    %186 = arith.addf %183, %185 : vector<8x128xf32>
    %c0_159 = arith.constant 0 : index
    %c0_160 = arith.constant 0 : index
    %c0_161 = arith.constant 0 : index
    %187 = vector.load %arg22[%c0_159, %c0_160, %c0_161] : memref<1x8x128xf32, #tpu.memory_space<vmem>>, vector<1x8x128xf32>
    %188 = vector.shape_cast %187 : vector<1x8x128xf32> to vector<8x128xf32>
    %189 = vector.shape_cast %186 : vector<8x128xf32> to vector<1x8x128xf32>
    tpu.vector_store %arg22[%c0_159, %c0_160, %c0_161], %189 {strides = array<i32>} : memref<1x8x128xf32, #tpu.memory_space<vmem>>, vector<1x8x128xf32>,
    return
  }
  func.func @transform_0(%arg0: i32) -> (i32, i32, i32) {
    %c0_i32 = arith.constant 0 : i32
    %c0_i32_0 = arith.constant 0 : i32
    %c0_i32_1 = arith.constant 0 : i32
    return %arg0, %c0_i32, %c0_i32_0 : i32, i32, i32
  }
  func.func @transform_1(%arg0: i32) -> (i32, i32) {
    %c0_i32 = arith.constant 0 : i32
    %c0_i32_0 = arith.constant 0 : i32
    %c0_i32_1 = arith.constant 0 : i32
    return %c0_i32, %c0_i32_0 : i32, i32
  }
  func.func @transform_2(%arg0: i32) -> (i32, i32) {
    %c0_i32 = arith.constant 0 : i32
    %c0_i32_0 = arith.constant 0 : i32
    %c0_i32_1 = arith.constant 0 : i32
    return %c0_i32, %c0_i32_0 : i32, i32
  }
  func.func @transform_3(%arg0: i32) -> (i32, i32) {
    %c0_i32 = arith.constant 0 : i32
    %c0_i32_0 = arith.constant 0 : i32
    %c0_i32_1 = arith.constant 0 : i32
    return %c0_i32, %c0_i32_0 : i32, i32
  }
  func.func @transform_4(%arg0: i32) -> (i32, i32) {
    %c0_i32 = arith.constant 0 : i32
    %c0_i32_0 = arith.constant 0 : i32
    %c0_i32_1 = arith.constant 0 : i32
    return %c0_i32, %c0_i32_0 : i32, i32
  }
  func.func @transform_5(%arg0: i32) -> (i32, i32) {
    %c0_i32 = arith.constant 0 : i32
    %c0_i32_0 = arith.constant 0 : i32
    %c0_i32_1 = arith.constant 0 : i32
    return %c0_i32, %c0_i32_0 : i32, i32
  }
  func.func @transform_6(%arg0: i32) -> (i32, i32) {
    %c0_i32 = arith.constant 0 : i32
    %c0_i32_0 = arith.constant 0 : i32
    %c0_i32_1 = arith.constant 0 : i32
    return %c0_i32, %c0_i32_0 : i32, i32
  }
  func.func @transform_7(%arg0: i32) -> (i32, i32) {
    %c0_i32 = arith.constant 0 : i32
    %c0_i32_0 = arith.constant 0 : i32
    %c0_i32_1 = arith.constant 0 : i32
    return %c0_i32, %c0_i32_0 : i32, i32
  }
  func.func @transform_8(%arg0: i32) -> (i32, i32) {
    %c0_i32 = arith.constant 0 : i32
    %c0_i32_0 = arith.constant 0 : i32
    %c0_i32_1 = arith.constant 0 : i32
    return %c0_i32, %c0_i32_0 : i32, i32
  }
  func.func @transform_9(%arg0: i32) -> (i32, i32) {
    %c0_i32 = arith.constant 0 : i32
    %c0_i32_0 = arith.constant 0 : i32
    %c0_i32_1 = arith.constant 0 : i32
    return %c0_i32, %c0_i32_0 : i32, i32
  }
  func.func @transform_10(%arg0: i32) -> (i32, i32) {
    %c0_i32 = arith.constant 0 : i32
    %c0_i32_0 = arith.constant 0 : i32
    %c0_i32_1 = arith.constant 0 : i32
    return %c0_i32, %c0_i32_0 : i32, i32
  }
  func.func @transform_11(%arg0: i32) -> (i32, i32) {
    %c0_i32 = arith.constant 0 : i32
    %c0_i32_0 = arith.constant 0 : i32
    %c0_i32_1 = arith.constant 0 : i32
    return %c0_i32, %c0_i32_0 : i32, i32
  }
  func.func @transform_12(%arg0: i32) -> (i32, i32) {
    %c0_i32 = arith.constant 0 : i32
    %c0_i32_0 = arith.constant 0 : i32
    %c0_i32_1 = arith.constant 0 : i32
    return %c0_i32, %c0_i32_0 : i32, i32
  }
  func.func @transform_13(%arg0: i32) -> (i32, i32) {
    %c0_i32 = arith.constant 0 : i32
    %c0_i32_0 = arith.constant 0 : i32
    %c0_i32_1 = arith.constant 0 : i32
    return %c0_i32, %c0_i32_0 : i32, i32
  }
  func.func @transform_14(%arg0: i32) -> (i32, i32) {
    %c0_i32 = arith.constant 0 : i32
    %c0_i32_0 = arith.constant 0 : i32
    %c0_i32_1 = arith.constant 0 : i32
    return %c0_i32, %c0_i32_0 : i32, i32
  }
  func.func @transform_15(%arg0: i32) -> (i32, i32) {
    %c0_i32 = arith.constant 0 : i32
    %c0_i32_0 = arith.constant 0 : i32
    %c0_i32_1 = arith.constant 0 : i32
    return %c0_i32, %c0_i32_0 : i32, i32
  }
  func.func @transform_16(%arg0: i32) -> (i32, i32) {
    %c0_i32 = arith.constant 0 : i32
    %c0_i32_0 = arith.constant 0 : i32
    %c0_i32_1 = arith.constant 0 : i32
    return %c0_i32, %c0_i32_0 : i32, i32
  }
  func.func @transform_17(%arg0: i32) -> (i32, i32) {
    %c0_i32 = arith.constant 0 : i32
    %c0_i32_0 = arith.constant 0 : i32
    %c0_i32_1 = arith.constant 0 : i32
    return %c0_i32, %c0_i32_0 : i32, i32
  }
  func.func @transform_18(%arg0: i32) -> (i32, i32) {
    %c0_i32 = arith.constant 0 : i32
    %c0_i32_0 = arith.constant 0 : i32
    %c0_i32_1 = arith.constant 0 : i32
    return %c0_i32, %c0_i32_0 : i32, i32
  }
  func.func @transform_19(%arg0: i32) -> (i32, i32) {
    %c0_i32 = arith.constant 0 : i32
    %c0_i32_0 = arith.constant 0 : i32
    %c0_i32_1 = arith.constant 0 : i32
    return %c0_i32, %c0_i32_0 : i32, i32
  }
  func.func @transform_20(%arg0: i32) -> (i32, i32) {
    %c0_i32 = arith.constant 0 : i32
    %c0_i32_0 = arith.constant 0 : i32
    %c0_i32_1 = arith.constant 0 : i32
    return %c0_i32, %c0_i32_0 : i32, i32
  }
  func.func @transform_21(%arg0: i32) -> (i32, i32, i32) {
    %c0_i32 = arith.constant 0 : i32
    %c0_i32_0 = arith.constant 0 : i32
    %c0_i32_1 = arith.constant 0 : i32
    return %arg0, %c0_i32, %c0_i32_0 : i32, i32, i32
  }
}

</mosaic_0001>

<llo_original>
// kernel: _lambda_.1
$region0: #{_lambda_.1}
  #allocation0 [shape = 'u32[]', space=smem, size = 0x4, offset = 0x4, fixed_abs, tag = 'smem constant byte address 0x4 - core index']
  #allocation1 [shape = 'u32[144,128]{1,0:T(1,128)}', space=vmem, size = 0x12000, scoped, tag = 'internal scratch']
  #allocation2 [shape = 'f32[24,512]{1,0:T(8,128)}', space=vmem, size = 0xc000, scoped, tag = 'scratch operand']
  %s0 = inlined_call_operand.vmem [shape: f32[2,8,128], index: 0, kind: input, shape index: {}]
  %s1 = inlined_call_operand.vmem [shape: bf16[384,128], index: 1, kind: input, shape index: {}]
  %s2 = inlined_call_operand.vmem [shape: f32[1,128], index: 2, kind: input, shape index: {}]
  %s3 = inlined_call_operand.vmem [shape: bf16[384,128], index: 3, kind: input, shape index: {}]
  %s4 = inlined_call_operand.vmem [shape: f32[1,128], index: 4, kind: input, shape index: {}]
  %s5 = inlined_call_operand.vmem [shape: bf16[384,512], index: 5, kind: input, shape index: {}]
  %s6 = inlined_call_operand.vmem [shape: bf16[128,512], index: 6, kind: input, shape index: {}]
  %s7 = inlined_call_operand.vmem [shape: f32[1,512], index: 7, kind: input, shape index: {}]
  %s8 = inlined_call_operand.vmem [shape: f32[1,512], index: 8, kind: input, shape index: {}]
  %s9 = inlined_call_operand.vmem [shape: bf16[1536,256], index: 9, kind: input, shape index: {}]
  %s10 = inlined_call_operand.vmem [shape: bf16[512,256], index: 10, kind: input, shape index: {}]
  %s11 = inlined_call_operand.vmem [shape: f32[1,256], index: 11, kind: input, shape index: {}]
  %s12 = inlined_call_operand.vmem [shape: f32[1,256], index: 12, kind: input, shape index: {}]
  %s13 = inlined_call_operand.vmem [shape: bf16[768,128], index: 13, kind: input, shape index: {}]
  %s14 = inlined_call_operand.vmem [shape: bf16[256,128], index: 14, kind: input, shape index: {}]
  %s15 = inlined_call_operand.vmem [shape: f32[1,128], index: 15, kind: input, shape index: {}]
  %s16 = inlined_call_operand.vmem [shape: f32[1,128], index: 16, kind: input, shape index: {}]
  %s17 = inlined_call_operand.vmem [shape: bf16[384,128], index: 17, kind: input, shape index: {}]
  %s18 = inlined_call_operand.vmem [shape: bf16[128,128], index: 18, kind: input, shape index: {}]
  %s19 = inlined_call_operand.vmem [shape: f32[1,128], index: 19, kind: input, shape index: {}]
  %s20 = inlined_call_operand.vmem [shape: f32[1,128], index: 20, kind: input, shape index: {}]
  %s21 = inlined_call_operand.vmem [shape: f32[2,8,128], index: 21, kind: output, shape index: {}]
  %s22 = sld [smem:[#allocation0]]
  $region117: #{_lambda_.1} parent=0
    _
  %s24 = ssub.s32 1, %s22
  %s25 = scalar_select 0, %s24, %s22
  loop: start=0, step=1, limit=4
  $region2: #{_lambda_.1} parent=0 // loop_pre_header
    _
  $region3: #{_lambda_.1} parent=0 // loop_header
    %s27 = sphi 0, %s31
    %p28 = scmp.ge.s32.totalorder %s27, 4
    %s37 = sphi 0, %s39
    %s40 = sphi 0, %s37
    %s41 = sphi 0, %s40
    %s57 = sphi 0, %s41
    %s61 = sphi 0, %s61
    %s63 = sphi 0, %s61
    %s64 = sphi 0, %s63
    %s78 = sphi 0, %s64
    %s82 = sphi 0, %s82
    %s84 = sphi 0, %s82
    %s85 = sphi 0, %s84
    %s99 = sphi 0, %s85
    %s103 = sphi 0, %s103
    %s105 = sphi 0, %s103
    %s106 = sphi 0, %s105
    %s120 = sphi 0, %s106
    %s124 = sphi 0, %s124
    %s126 = sphi 0, %s124
    %s127 = sphi 0, %s126
    %s141 = sphi 0, %s127
    %s145 = sphi 0, %s145
    %s147 = sphi 0, %s145
    %s148 = sphi 0, %s147
    %s162 = sphi 0, %s148
    %s166 = sphi 0, %s166
    %s168 = sphi 0, %s166
    %s169 = sphi 0, %s168
    %s183 = sphi 0, %s169
    %s187 = sphi 0, %s187
    %s189 = sphi 0, %s187
    %s190 = sphi 0, %s189
    %s204 = sphi 0, %s190
    %s208 = sphi 0, %s208
    %s210 = sphi 0, %s208
    %s211 = sphi 0, %s210
    %s225 = sphi 0, %s211
    %s229 = sphi 0, %s229
    %s231 = sphi 0, %s229
    %s232 = sphi 0, %s231
    %s246 = sphi 0, %s232
    %s250 = sphi 0, %s250
    %s252 = sphi 0, %s250
    %s253 = sphi 0, %s252
    %s267 = sphi 0, %s253
    %s271 = sphi 0, %s271
    %s273 = sphi 0, %s271
    %s274 = sphi 0, %s273
    %s288 = sphi 0, %s274
    %s292 = sphi 0, %s292
    %s294 = sphi 0, %s292
    %s295 = sphi 0, %s294
    %s309 = sphi 0, %s295
    %s313 = sphi 0, %s313
    %s315 = sphi 0, %s313
    %s316 = sphi 0, %s315
    %s330 = sphi 0, %s316
    %s334 = sphi 0, %s334
    %s336 = sphi 0, %s334
    %s337 = sphi 0, %s336
    %s351 = sphi 0, %s337
    %s355 = sphi 0, %s355
    %s357 = sphi 0, %s355
    %s358 = sphi 0, %s357
    %s372 = sphi 0, %s358
    %s376 = sphi 0, %s376
    %s378 = sphi 0, %s376
    %s379 = sphi 0, %s378
    %s393 = sphi 0, %s379
    %s397 = sphi 0, %s397
    %s399 = sphi 0, %s397
    %s400 = sphi 0, %s399
    %s414 = sphi 0, %s400
    %s418 = sphi 0, %s418
    %s420 = sphi 0, %s418
    %s421 = sphi 0, %s420
    %s435 = sphi 0, %s421
    %s439 = sphi 0, %s439
    %s441 = sphi 0, %s439
    %s442 = sphi 0, %s441
    %s456 = sphi 0, %s442
    %s460 = sphi 0, %s460
    %s462 = sphi 0, %s460
    %s463 = sphi 0, %s462
    %s477 = sphi 0, %s463
    %s483 = sphi 0, %s485
    %s486 = sphi 0, %s483
    %s487 = sphi 0, %s486
    %s503 = sphi 0, %s487
  $region4: #{_lambda_.1} parent=0 // loop_header_branch
    %30 = sbr.rel (%p28) target = $region8
  $region5: #{_lambda_.1} parent=0 // loop_body
    %s32 = ssub.s32 %s27, 1
    %s33 = ssub.s32 %s27, 2
    %s34 = sadd.s32 %s27, 1
    %s35 = ssub.s32 %s27, %s34
    %p36 = scmp.eq.s32.totalorder %s35, 0
    %s38 = sadd.s32 %s37, 1
    %s39 = scalar_select %p36, %s37, %s38
    %p42 = pneg %p36
    %p43 = scmp.eq.s32.totalorder %s27, 1
    %p44 = por %p42, %p43
    %p45 = scmp.ne.s32.totalorder %s37, %s40
    %p46 = scmp.eq.s32.totalorder %s27, 0
    %p47 = por %p45, %p46
    %p48 = scmp.ne.s32.totalorder %s37, %s40
    %p49 = scmp.eq.s32.totalorder %s32, 1
    %p50 = por %p48, %p49
    %p51 = scmp.ne.s32.totalorder %s40, %s41
    %p52 = scmp.eq.s32.totalorder %s32, 0
    %p53 = por %p51, %p52
    %p54 = scmp.ne.s32.totalorder %s40, %s41
    %p55 = scmp.eq.s32.totalorder %s33, 1
    %p56 = por %p54, %p55
    %p58 = scmp.ne.s32.totalorder %s41, %s57
    %p59 = scmp.eq.s32.totalorder %s33, 0
    %p60 = por %p58, %p59
    %s62 = sadd.s32 %s61, 1
    %p65 = scmp.eq.s32.totalorder %s27, 1
    %p66 = scmp.ne.s32.totalorder %s61, %s63
    %p67 = scmp.eq.s32.totalorder %s27, 0
    %p68 = por %p66, %p67
    %p69 = scmp.ne.s32.totalorder %s61, %s63
    %p70 = scmp.eq.s32.totalorder %s32, 1
    %p71 = por %p69, %p70
    %p72 = scmp.ne.s32.totalorder %s63, %s64
    %p73 = scmp.eq.s32.totalorder %s32, 0
    %p74 = por %p72, %p73
    %p75 = scmp.ne.s32.totalorder %s63, %s64
    %p76 = scmp.eq.s32.totalorder %s33, 1
    %p77 = por %p75, %p76
    %p79 = scmp.ne.s32.totalorder %s64, %s78
    %p80 = scmp.eq.s32.totalorder %s33, 0
    %p81 = por %p79, %p80
    %s83 = sadd.s32 %s82, 1
    %p86 = scmp.eq.s32.totalorder %s27, 1
    %p87 = scmp.ne.s32.totalorder %s82, %s84
    %p88 = scmp.eq.s32.totalorder %s27, 0
    %p89 = por %p87, %p88
    %p90 = scmp.ne.s32.totalorder %s82, %s84
    %p91 = scmp.eq.s32.totalorder %s32, 1
    %p92 = por %p90, %p91
    %p93 = scmp.ne.s32.totalorder %s84, %s85
    %p94 = scmp.eq.s32.totalorder %s32, 0
    %p95 = por %p93, %p94
    %p96 = scmp.ne.s32.totalorder %s84, %s85
    %p97 = scmp.eq.s32.totalorder %s33, 1
    %p98 = por %p96, %p97
    %p100 = scmp.ne.s32.totalorder %s85, %s99
    %p101 = scmp.eq.s32.totalorder %s33, 0
    %p102 = por %p100, %p101
    %s104 = sadd.s32 %s103, 1
    %p107 = scmp.eq.s32.totalorder %s27, 1
    %p108 = scmp.ne.s32.totalorder %s103, %s105
    %p109 = scmp.eq.s32.totalorder %s27, 0
    %p110 = por %p108, %p109
    %p111 = scmp.ne.s32.totalorder %s103, %s105
    %p112 = scmp.eq.s32.totalorder %s32, 1
    %p113 = por %p111, %p112
    %p114 = scmp.ne.s32.totalorder %s105, %s106
    %p115 = scmp.eq.s32.totalorder %s32, 0
    %p116 = por %p114, %p115
    %p117 = scmp.ne.s32.totalorder %s105, %s106
    %p118 = scmp.eq.s32.totalorder %s33, 1
    %p119 = por %p117, %p118
    %p121 = scmp.ne.s32.totalorder %s106, %s120
    %p122 = scmp.eq.s32.totalorder %s33, 0
    %p123 = por %p121, %p122
    %s125 = sadd.s32 %s124, 1
    %p128 = scmp.eq.s32.totalorder %s27, 1
    %p129 = scmp.ne.s32.totalorder %s124, %s126
    %p130 = scmp.eq.s32.totalorder %s27, 0
    %p131 = por %p129, %p130
    %p132 = scmp.ne.s32.totalorder %s124, %s126
    %p133 = scmp.eq.s32.totalorder %s32, 1
    %p134 = por %p132, %p133
    %p135 = scmp.ne.s32.totalorder %s126, %s127
    %p136 = scmp.eq.s32.totalorder %s32, 0
    %p137 = por %p135, %p136
    %p138 = scmp.ne.s32.totalorder %s126, %s127
    %p139 = scmp.eq.s32.totalorder %s33, 1
    %p140 = por %p138, %p139
    %p142 = scmp.ne.s32.totalorder %s127, %s141
    %p143 = scmp.eq.s32.totalorder %s33, 0
    %p144 = por %p142, %p143
    %s146 = sadd.s32 %s145, 1
    %p149 = scmp.eq.s32.totalorder %s27, 1
    %p150 = scmp.ne.s32.totalorder %s145, %s147
    %p151 = scmp.eq.s32.totalorder %s27, 0
    %p152 = por %p150, %p151
    %p153 = scmp.ne.s32.totalorder %s145, %s147
    %p154 = scmp.eq.s32.totalorder %s32, 1
    %p155 = por %p153, %p154
    %p156 = scmp.ne.s32.totalorder %s147, %s148
    %p157 = scmp.eq.s32.totalorder %s32, 0
    %p158 = por %p156, %p157
    %p159 = scmp.ne.s32.totalorder %s147, %s148
    %p160 = scmp.eq.s32.totalorder %s33, 1
    %p161 = por %p159, %p160
    %p163 = scmp.ne.s32.totalorder %s148, %s162
    %p164 = scmp.eq.s32.totalorder %s33, 0
    %p165 = por %p163, %p164
    %s167 = sadd.s32 %s166, 1
    %p170 = scmp.eq.s32.totalorder %s27, 1
    %p171 = scmp.ne.s32.totalorder %s166, %s168
    %p172 = scmp.eq.s32.totalorder %s27, 0
    %p173 = por %p171, %p172
    %p174 = scmp.ne.s32.totalorder %s166, %s168
    %p175 = scmp.eq.s32.totalorder %s32, 1
    %p176 = por %p174, %p175
    %p177 = scmp.ne.s32.totalorder %s168, %s169
    %p178 = scmp.eq.s32.totalorder %s32, 0
    %p179 = por %p177, %p178
    %p180 = scmp.ne.s32.totalorder %s168, %s169
    %p181 = scmp.eq.s32.totalorder %s33, 1
    %p182 = por %p180, %p181
    %p184 = scmp.ne.s32.totalorder %s169, %s183
    %p185 = scmp.eq.s32.totalorder %s33, 0
    %p186 = por %p184, %p185
    %s188 = sadd.s32 %s187, 1
    %p191 = scmp.eq.s32.totalorder %s27, 1
    %p192 = scmp.ne.s32.totalorder %s187, %s189
    %p193 = scmp.eq.s32.totalorder %s27, 0
    %p194 = por %p192, %p193
    %p195 = scmp.ne.s32.totalorder %s187, %s189
    %p196 = scmp.eq.s32.totalorder %s32, 1
    %p197 = por %p195, %p196
    %p198 = scmp.ne.s32.totalorder %s189, %s190
    %p199 = scmp.eq.s32.totalorder %s32, 0
    %p200 = por %p198, %p199
    %p201 = scmp.ne.s32.totalorder %s189, %s190
    %p202 = scmp.eq.s32.totalorder %s33, 1
    %p203 = por %p201, %p202
    %p205 = scmp.ne.s32.totalorder %s190, %s204
    %p206 = scmp.eq.s32.totalorder %s33, 0
    %p207 = por %p205, %p206
    %s209 = sadd.s32 %s208, 1
    %p212 = scmp.eq.s32.totalorder %s27, 1
    %p213 = scmp.ne.s32.totalorder %s208, %s210
    %p214 = scmp.eq.s32.totalorder %s27, 0
    %p215 = por %p213, %p214
    %p216 = scmp.ne.s32.totalorder %s208, %s210
    %p217 = scmp.eq.s32.totalorder %s32, 1
    %p218 = por %p216, %p217
    %p219 = scmp.ne.s32.totalorder %s210, %s211
    %p220 = scmp.eq.s32.totalorder %s32, 0
    %p221 = por %p219, %p220
    %p222 = scmp.ne.s32.totalorder %s210, %s211
    %p223 = scmp.eq.s32.totalorder %s33, 1
    %p224 = por %p222, %p223
    %p226 = scmp.ne.s32.totalorder %s211, %s225
    %p227 = scmp.eq.s32.totalorder %s33, 0
    %p228 = por %p226, %p227
    %s230 = sadd.s32 %s229, 1
    %p233 = scmp.eq.s32.totalorder %s27, 1
    %p234 = scmp.ne.s32.totalorder %s229, %s231
    %p235 = scmp.eq.s32.totalorder %s27, 0
    %p236 = por %p234, %p235
    %p237 = scmp.ne.s32.totalorder %s229, %s231
    %p238 = scmp.eq.s32.totalorder %s32, 1
    %p239 = por %p237, %p238
    %p240 = scmp.ne.s32.totalorder %s231, %s232
    %p241 = scmp.eq.s32.totalorder %s32, 0
    %p242 = por %p240, %p241
    %p243 = scmp.ne.s32.totalorder %s231, %s232
    %p244 = scmp.eq.s32.totalorder %s33, 1
    %p245 = por %p243, %p244
    %p247 = scmp.ne.s32.totalorder %s232, %s246
    %p248 = scmp.eq.s32.totalorder %s33, 0
    %p249 = por %p247, %p248
    %s251 = sadd.s32 %s250, 1
    %p254 = scmp.eq.s32.totalorder %s27, 1
    %p255 = scmp.ne.s32.totalorder %s250, %s252
    %p256 = scmp.eq.s32.totalorder %s27, 0
    %p257 = por %p255, %p256
    %p258 = scmp.ne.s32.totalorder %s250, %s252
    %p259 = scmp.eq.s32.totalorder %s32, 1
    %p260 = por %p258, %p259
    %p261 = scmp.ne.s32.totalorder %s252, %s253
    %p262 = scmp.eq.s32.totalorder %s32, 0
    %p263 = por %p261, %p262
    %p264 = scmp.ne.s32.totalorder %s252, %s253
    %p265 = scmp.eq.s32.totalorder %s33, 1
    %p266 = por %p264, %p265
    %p268 = scmp.ne.s32.totalorder %s253, %s267
    %p269 = scmp.eq.s32.totalorder %s33, 0
    %p270 = por %p268, %p269
    %s272 = sadd.s32 %s271, 1
    %p275 = scmp.eq.s32.totalorder %s27, 1
    %p276 = scmp.ne.s32.totalorder %s271, %s273
    %p277 = scmp.eq.s32.totalorder %s27, 0
    %p278 = por %p276, %p277
    %p279 = scmp.ne.s32.totalorder %s271, %s273
    %p280 = scmp.eq.s32.totalorder %s32, 1
    %p281 = por %p279, %p280
    %p282 = scmp.ne.s32.totalorder %s273, %s274
    %p283 = scmp.eq.s32.totalorder %s32, 0
    %p284 = por %p282, %p283
    %p285 = scmp.ne.s32.totalorder %s273, %s274
    %p286 = scmp.eq.s32.totalorder %s33, 1
    %p287 = por %p285, %p286
    %p289 = scmp.ne.s32.totalorder %s274, %s288
    %p290 = scmp.eq.s32.totalorder %s33, 0
    %p291 = por %p289, %p290
    %s293 = sadd.s32 %s292, 1
    %p296 = scmp.eq.s32.totalorder %s27, 1
    %p297 = scmp.ne.s32.totalorder %s292, %s294
    %p298 = scmp.eq.s32.totalorder %s27, 0
    %p299 = por %p297, %p298
    %p300 = scmp.ne.s32.totalorder %s292, %s294
    %p301 = scmp.eq.s32.totalorder %s32, 1
    %p302 = por %p300, %p301
    %p303 = scmp.ne.s32.totalorder %s294, %s295
    %p304 = scmp.eq.s32.totalorder %s32, 0
    %p305 = por %p303, %p304
    %p306 = scmp.ne.s32.totalorder %s294, %s295
    %p307 = scmp.eq.s32.totalorder %s33, 1
    %p308 = por %p306, %p307
    %p310 = scmp.ne.s32.totalorder %s295, %s309
    %p311 = scmp.eq.s32.totalorder %s33, 0
    %p312 = por %p310, %p311
    %s314 = sadd.s32 %s313, 1
    %p317 = scmp.eq.s32.totalorder %s27, 1
    %p318 = scmp.ne.s32.totalorder %s313, %s315
    %p319 = scmp.eq.s32.totalorder %s27, 0
    %p320 = por %p318, %p319
    %p321 = scmp.ne.s32.totalorder %s313, %s315
    %p322 = scmp.eq.s32.totalorder %s32, 1
    %p323 = por %p321, %p322
    %p324 = scmp.ne.s32.totalorder %s315, %s316
    %p325 = scmp.eq.s32.totalorder %s32, 0
    %p326 = por %p324, %p325
    %p327 = scmp.ne.s32.totalorder %s315, %s316
    %p328 = scmp.eq.s32.totalorder %s33, 1
    %p329 = por %p327, %p328
    %p331 = scmp.ne.s32.totalorder %s316, %s330
    %p332 = scmp.eq.s32.totalorder %s33, 0
    %p333 = por %p331, %p332
    %s335 = sadd.s32 %s334, 1
    %p338 = scmp.eq.s32.totalorder %s27, 1
    %p339 = scmp.ne.s32.totalorder %s334, %s336
    %p340 = scmp.eq.s32.totalorder %s27, 0
    %p341 = por %p339, %p340
    %p342 = scmp.ne.s32.totalorder %s334, %s336
    %p343 = scmp.eq.s32.totalorder %s32, 1
    %p344 = por %p342, %p343
    %p345 = scmp.ne.s32.totalorder %s336, %s337
    %p346 = scmp.eq.s32.totalorder %s32, 0
    %p347 = por %p345, %p346
    %p348 = scmp.ne.s32.totalorder %s336, %s337
    %p349 = scmp.eq.s32.totalorder %s33, 1
    %p350 = por %p348, %p349
    %p352 = scmp.ne.s32.totalorder %s337, %s351
    %p353 = scmp.eq.s32.totalorder %s33, 0
    %p354 = por %p352, %p353
    %s356 = sadd.s32 %s355, 1
    %p359 = scmp.eq.s32.totalorder %s27, 1
    %p360 = scmp.ne.s32.totalorder %s355, %s357
    %p361 = scmp.eq.s32.totalorder %s27, 0
    %p362 = por %p360, %p361
    %p363 = scmp.ne.s32.totalorder %s355, %s357
    %p364 = scmp.eq.s32.totalorder %s32, 1
    %p365 = por %p363, %p364
    %p366 = scmp.ne.s32.totalorder %s357, %s358
    %p367 = scmp.eq.s32.totalorder %s32, 0
    %p368 = por %p366, %p367
    %p369 = scmp.ne.s32.totalorder %s357, %s358
    %p370 = scmp.eq.s32.totalorder %s33, 1
    %p371 = por %p369, %p370
    %p373 = scmp.ne.s32.totalorder %s358, %s372
    %p374 = scmp.eq.s32.totalorder %s33, 0
    %p375 = por %p373, %p374
    %s377 = sadd.s32 %s376, 1
    %p380 = scmp.eq.s32.totalorder %s27, 1
    %p381 = scmp.ne.s32.totalorder %s376, %s378
    %p382 = scmp.eq.s32.totalorder %s27, 0
    %p383 = por %p381, %p382
    %p384 = scmp.ne.s32.totalorder %s376, %s378
    %p385 = scmp.eq.s32.totalorder %s32, 1
    %p386 = por %p384, %p385
    %p387 = scmp.ne.s32.totalorder %s378, %s379
    %p388 = scmp.eq.s32.totalorder %s32, 0
    %p389 = por %p387, %p388
    %p390 = scmp.ne.s32.totalorder %s378, %s379
    %p391 = scmp.eq.s32.totalorder %s33, 1
    %p392 = por %p390, %p391
    %p394 = scmp.ne.s32.totalorder %s379, %s393
    %p395 = scmp.eq.s32.totalorder %s33, 0
    %p396 = por %p394, %p395
    %s398 = sadd.s32 %s397, 1
    %p401 = scmp.eq.s32.totalorder %s27, 1
    %p402 = scmp.ne.s32.totalorder %s397, %s399
    %p403 = scmp.eq.s32.totalorder %s27, 0
    %p404 = por %p402, %p403
    %p405 = scmp.ne.s32.totalorder %s397, %s399
    %p406 = scmp.eq.s32.totalorder %s32, 1
    %p407 = por %p405, %p406
    %p408 = scmp.ne.s32.totalorder %s399, %s400
    %p409 = scmp.eq.s32.totalorder %s32, 0
    %p410 = por %p408, %p409
    %p411 = scmp.ne.s32.totalorder %s399, %s400
    %p412 = scmp.eq.s32.totalorder %s33, 1
    %p413 = por %p411, %p412
    %p415 = scmp.ne.s32.totalorder %s400, %s414
    %p416 = scmp.eq.s32.totalorder %s33, 0
    %p417 = por %p415, %p416
    %s419 = sadd.s32 %s418, 1
    %p422 = scmp.eq.s32.totalorder %s27, 1
    %p423 = scmp.ne.s32.totalorder %s418, %s420
    %p424 = scmp.eq.s32.totalorder %s27, 0
    %p425 = por %p423, %p424
    %p426 = scmp.ne.s32.totalorder %s418, %s420
    %p427 = scmp.eq.s32.totalorder %s32, 1
    %p428 = por %p426, %p427
    %p429 = scmp.ne.s32.totalorder %s420, %s421
    %p430 = scmp.eq.s32.totalorder %s32, 0
    %p431 = por %p429, %p430
    %p432 = scmp.ne.s32.totalorder %s420, %s421
    %p433 = scmp.eq.s32.totalorder %s33, 1
    %p434 = por %p432, %p433
    %p436 = scmp.ne.s32.totalorder %s421, %s435
    %p437 = scmp.eq.s32.totalorder %s33, 0
    %p438 = por %p436, %p437
    %s440 = sadd.s32 %s439, 1
    %p443 = scmp.eq.s32.totalorder %s27, 1
    %p444 = scmp.ne.s32.totalorder %s439, %s441
    %p445 = scmp.eq.s32.totalorder %s27, 0
    %p446 = por %p444, %p445
    %p447 = scmp.ne.s32.totalorder %s439, %s441
    %p448 = scmp.eq.s32.totalorder %s32, 1
    %p449 = por %p447, %p448
    %p450 = scmp.ne.s32.totalorder %s441, %s442
    %p451 = scmp.eq.s32.totalorder %s32, 0
    %p452 = por %p450, %p451
    %p453 = scmp.ne.s32.totalorder %s441, %s442
    %p454 = scmp.eq.s32.totalorder %s33, 1
    %p455 = por %p453, %p454
    %p457 = scmp.ne.s32.totalorder %s442, %s456
    %p458 = scmp.eq.s32.totalorder %s33, 0
    %p459 = por %p457, %p458
    %s461 = sadd.s32 %s460, 1
    %p464 = scmp.eq.s32.totalorder %s27, 1
    %p465 = scmp.ne.s32.totalorder %s460, %s462
    %p466 = scmp.eq.s32.totalorder %s27, 0
    %p467 = por %p465, %p466
    %p468 = scmp.ne.s32.totalorder %s460, %s462
    %p469 = scmp.eq.s32.totalorder %s32, 1
    %p470 = por %p468, %p469
    %p471 = scmp.ne.s32.totalorder %s462, %s463
    %p472 = scmp.eq.s32.totalorder %s32, 0
    %p473 = por %p471, %p472
    %p474 = scmp.ne.s32.totalorder %s462, %s463
    %p475 = scmp.eq.s32.totalorder %s33, 1
    %p476 = por %p474, %p475
    %p478 = scmp.ne.s32.totalorder %s463, %s477
    %p479 = scmp.eq.s32.totalorder %s33, 0
    %p480 = por %p478, %p479
    %s481 = ssub.s32 %s27, %s34
    %p482 = scmp.eq.s32.totalorder %s481, 0
    %s484 = sadd.s32 %s483, 1
    %s485 = scalar_select %p482, %s483, %s484
    %p488 = pneg %p482
    %p489 = scmp.eq.s32.totalorder %s27, 1
    %p490 = por %p488, %p489
    %p491 = scmp.ne.s32.totalorder %s483, %s486
    %p492 = scmp.eq.s32.totalorder %s27, 0
    %p493 = por %p491, %p492
    %p494 = scmp.ne.s32.totalorder %s483, %s486
    %p495 = scmp.eq.s32.totalorder %s32, 1
    %p496 = por %p494, %p495
    %p497 = scmp.ne.s32.totalorder %s486, %s487
    %p498 = scmp.eq.s32.totalorder %s32, 0
    %p499 = por %p497, %p498
    %p500 = scmp.ne.s32.totalorder %s486, %s487
    %p501 = scmp.eq.s32.totalorder %s33, 1
    %p502 = por %p500, %p501
    %p504 = scmp.ne.s32.totalorder %s487, %s503
    %p505 = scmp.eq.s32.totalorder %s33, 0
    %p506 = por %p504, %p505
    %p507 = scmp.le.s32.totalorder 1, %s27
    %p508 = scmp.lt.s32.totalorder %s27, 3
    %p509 = pnand %p507, %p508
    %p510 = pneg %p509
    // Predicated region
    $region9: #{_lambda_.1} parent=5 // pred_check
      _
    $region10: #{_lambda_.1} parent=5 // pred_check_branch
      %512 = sbr.rel (%p509) target = $region12
    $region11: #{_lambda_.1} parent=5 // pred_region
      %s513 = ssub.s32 %s27, 1
      // Predicated region
      $region13: #{_lambda_.1} parent=11 // pred_check
        %p514 = pneg %p74
      $region14: #{_lambda_.1} parent=11 // pred_check_branch
        %516 = sbr.rel (%p514) target = $region16
      $region15: #{_lambda_.1} parent=11 // pred_region
        _
      $region16: #{_lambda_.1} parent=11 // pred_fallthru
        _
      // Predicated region
      $region17: #{_lambda_.1} parent=11 // pred_check
        %p517 = pneg %p95
      $region18: #{_lambda_.1} parent=11 // pred_check_branch
        %519 = sbr.rel (%p517) target = $region20
      $region19: #{_lambda_.1} parent=11 // pred_region
        _
      $region20: #{_lambda_.1} parent=11 // pred_fallthru
        _
      // Predicated region
      $region21: #{_lambda_.1} parent=11 // pred_check
        %p520 = pneg %p116
      $region22: #{_lambda_.1} parent=11 // pred_check_branch
        %522 = sbr.rel (%p520) target = $region24
      $region23: #{_lambda_.1} parent=11 // pred_region
        _
      $region24: #{_lambda_.1} parent=11 // pred_fallthru
        _
      // Predicated region
      $region25: #{_lambda_.1} parent=11 // pred_check
        %p523 = pneg %p137
      $region26: #{_lambda_.1} parent=11 // pred_check_branch
        %525 = sbr.rel (%p523) target = $region28
      $region27: #{_lambda_.1} parent=11 // pred_region
        _
      $region28: #{_lambda_.1} parent=11 // pred_fallthru
        _
      // Predicated region
      $region29: #{_lambda_.1} parent=11 // pred_check
        %p526 = pneg %p158
      $region30: #{_lambda_.1} parent=11 // pred_check_branch
        %528 = sbr.rel (%p526) target = $region32
      $region31: #{_lambda_.1} parent=11 // pred_region
        _
      $region32: #{_lambda_.1} parent=11 // pred_fallthru
        _
      // Predicated region
      $region33: #{_lambda_.1} parent=11 // pred_check
        %p529 = pneg %p179
      $region34: #{_lambda_.1} parent=11 // pred_check_branch
        %531 = sbr.rel (%p529) target = $region36
      $region35: #{_lambda_.1} parent=11 // pred_region
        _
      $region36: #{_lambda_.1} parent=11 // pred_fallthru
        _
      // Predicated region
      $region37: #{_lambda_.1} parent=11 // pred_check
        %p532 = pneg %p200
      $region38: #{_lambda_.1} parent=11 // pred_check_branch
        %534 = sbr.rel (%p532) target = $region40
      $region39: #{_lambda_.1} parent=11 // pred_region
        _
      $region40: #{_lambda_.1} parent=11 // pred_fallthru
        _
      // Predicated region
      $region41: #{_lambda_.1} parent=11 // pred_check
        %p535 = pneg %p221
      $region42: #{_lambda_.1} parent=11 // pred_check_branch
        %537 = sbr.rel (%p535) target = $region44
      $region43: #{_lambda_.1} parent=11 // pred_region
        _
      $region44: #{_lambda_.1} parent=11 // pred_fallthru
        _
      // Predicated region
      $region45: #{_lambda_.1} parent=11 // pred_check
        %p538 = pneg %p242
      $region46: #{_lambda_.1} parent=11 // pred_check_branch
        %540 = sbr.rel (%p538) target = $region48
      $region47: #{_lambda_.1} parent=11 // pred_region
        _
      $region48: #{_lambda_.1} parent=11 // pred_fallthru
        _
      // Predicated region
      $region49: #{_lambda_.1} parent=11 // pred_check
        %p541 = pneg %p263
      $region50: #{_lambda_.1} parent=11 // pred_check_branch
        %543 = sbr.rel (%p541) target = $region52
      $region51: #{_lambda_.1} parent=11 // pred_region
        _
      $region52: #{_lambda_.1} parent=11 // pred_fallthru
        _
      // Predicated region
      $region53: #{_lambda_.1} parent=11 // pred_check
        %p544 = pneg %p284
      $region54: #{_lambda_.1} parent=11 // pred_check_branch
        %546 = sbr.rel (%p544) target = $region56
      $region55: #{_lambda_.1} parent=11 // pred_region
        _
      $region56: #{_lambda_.1} parent=11 // pred_fallthru
        _
      // Predicated region
      $region57: #{_lambda_.1} parent=11 // pred_check
        %p547 = pneg %p305
      $region58: #{_lambda_.1} parent=11 // pred_check_branch
        %549 = sbr.rel (%p547) target = $region60
      $region59: #{_lambda_.1} parent=11 // pred_region
        _
      $region60: #{_lambda_.1} parent=11 // pred_fallthru
        _
      // Predicated region
      $region61: #{_lambda_.1} parent=11 // pred_check
        %p550 = pneg %p326
      $region62: #{_lambda_.1} parent=11 // pred_check_branch
        %552 = sbr.rel (%p550) target = $region64
      $region63: #{_lambda_.1} parent=11 // pred_region
        _
      $region64: #{_lambda_.1} parent=11 // pred_fallthru
        _
      // Predicated region
      $region65: #{_lambda_.1} parent=11 // pred_check
        %p553 = pneg %p347
      $region66: #{_lambda_.1} parent=11 // pred_check_branch
        %555 = sbr.rel (%p553) target = $region68
      $region67: #{_lambda_.1} parent=11 // pred_region
        _
      $region68: #{_lambda_.1} parent=11 // pred_fallthru
        _
      // Predicated region
      $region69: #{_lambda_.1} parent=11 // pred_check
        %p556 = pneg %p368
      $region70: #{_lambda_.1} parent=11 // pred_check_branch
        %558 = sbr.rel (%p556) target = $region72
      $region71: #{_lambda_.1} parent=11 // pred_region
        _
      $region72: #{_lambda_.1} parent=11 // pred_fallthru
        _
      // Predicated region
      $region73: #{_lambda_.1} parent=11 // pred_check
        %p559 = pneg %p389
      $region74: #{_lambda_.1} parent=11 // pred_check_branch
        %561 = sbr.rel (%p559) target = $region76
      $region75: #{_lambda_.1} parent=11 // pred_region
        _
      $region76: #{_lambda_.1} parent=11 // pred_fallthru
        _
      // Predicated region
      $region77: #{_lambda_.1} parent=11 // pred_check
        %p562 = pneg %p410
      $region78: #{_lambda_.1} parent=11 // pred_check_branch
        %564 = sbr.rel (%p562) target = $region80
      $region79: #{_lambda_.1} parent=11 // pred_region
        _
      $region80: #{_lambda_.1} parent=11 // pred_fallthru
        _
      // Predicated region
      $region81: #{_lambda_.1} parent=11 // pred_check
        %p565 = pneg %p431
      $region82: #{_lambda_.1} parent=11 // pred_check_branch
        %567 = sbr.rel (%p565) target = $region84
      $region83: #{_lambda_.1} parent=11 // pred_region
        _
      $region84: #{_lambda_.1} parent=11 // pred_fallthru
        _
      // Predicated region
      $region85: #{_lambda_.1} parent=11 // pred_check
        %p568 = pneg %p452
      $region86: #{_lambda_.1} parent=11 // pred_check_branch
        %570 = sbr.rel (%p568) target = $region88
      $region87: #{_lambda_.1} parent=11 // pred_region
        _
      $region88: #{_lambda_.1} parent=11 // pred_fallthru
        _
      // Predicated region
      $region89: #{_lambda_.1} parent=11 // pred_check
        %p571 = pneg %p473
      $region90: #{_lambda_.1} parent=11 // pred_check_branch
        %573 = sbr.rel (%p571) target = $region92
      $region91: #{_lambda_.1} parent=11 // pred_region
        _
      $region92: #{_lambda_.1} parent=11 // pred_fallthru
        _
    $region12: #{_lambda_.1} parent=5 // pred_fallthru
      _
    %p574 = scmp.lt.s32.totalorder %s27, 2
    // Predicated region
    $region93: #{_lambda_.1} parent=5 // pred_check
      %p575 = pneg %p574
    $region94: #{_lambda_.1} parent=5 // pred_check_branch
      %577 = sbr.rel (%p575) target = $region96
    $region95: #{_lambda_.1} parent=5 // pred_region
      // Predicated region
      $region97: #{_lambda_.1} parent=95 // pred_check
        %p578 = pneg %p47
      $region98: #{_lambda_.1} parent=95 // pred_check_branch
        %580 = sbr.rel (%p578) target = $region100
      $region99: #{_lambda_.1} parent=95 // pred_region
        %p581 = scmp.lt.s32.totalorder %s27, 1
        %s582 = scalar_select %p581, %s27, 1
        %s583 = smul.addr %s582, 8
        %s584 = scalar_lea.vmem %s0, %s583
      $region100: #{_lambda_.1} parent=95 // pred_fallthru
        _
    $region96: #{_lambda_.1} parent=5 // pred_fallthru
      _
    %p585 = scmp.le.s32.totalorder 1, %s27
    %p586 = scmp.lt.s32.totalorder %s27, 3
    %p587 = pnand %p585, %p586
    %p588 = pneg %p587
    // Predicated region
    $region101: #{_lambda_.1} parent=5 // pred_check
      _
    $region102: #{_lambda_.1} parent=5 // pred_check_branch
      %590 = sbr.rel (%p587) target = $region104
    $region103: #{_lambda_.1} parent=5 // pred_region
      %s591 = ssub.s32 %s27, 1
      %p592 = scmp.lt.s32.totalorder %s32, 1
      %s593 = scalar_select %p592, %s32, 1
      %s594 = smul.addr %s593, 8
      %s595 = scalar_lea.vmem %s0, %s594
      %p596 = pneg %p53
      %p597 = pneg %p50
      %p598 = pneg %p74
      %p599 = pneg %p71
      %p600 = pneg %p95
      %p601 = pneg %p92
      %p602 = pneg %p116
      %p603 = pneg %p113
      %p604 = pneg %p137
      %p605 = pneg %p134
      %p606 = pneg %p158
      %p607 = pneg %p155
      %p608 = pneg %p179
      %p609 = pneg %p176
      %p610 = pneg %p200
      %p611 = pneg %p197
      %p612 = pneg %p221
      %p613 = pneg %p218
      %p614 = pneg %p242
      %p615 = pneg %p239
      %p616 = pneg %p263
      %p617 = pneg %p260
      %p618 = pneg %p284
      %p619 = pneg %p281
      %p620 = pneg %p305
      %p621 = pneg %p302
      %p622 = pneg %p326
      %p623 = pneg %p323
      %p624 = pneg %p347
      %p625 = pneg %p344
      %p626 = pneg %p368
      %p627 = pneg %p365
      %p628 = pneg %p389
      %p629 = pneg %p386
      %p630 = pneg %p410
      %p631 = pneg %p407
      %p632 = pneg %p431
      %p633 = pneg %p428
      %p634 = pneg %p452
      %p635 = pneg %p449
      %p636 = pneg %p473
      %p637 = pneg %p470
      %p638 = pneg %p499
      %p639 = pneg %p496
      %p640 = scmp.lt.s32.totalorder %s32, 1
      %s641 = scalar_select %p640, %s32, 1
      %s642 = smul.addr %s641, 8
      %s643 = scalar_lea.vmem %s21, %s642
      %p644 = scmp.lt.s32.totalorder %s32, 1
      %s645 = scalar_select %p644, %s32, 1
      %s646 = smul.addr %s645, 8
      %s647 = scalar_lea.vmem %s0, %s646
      %p648 = scmp.lt.s32.totalorder %s32, 1
      %s649 = scalar_select %p648, %s32, 1
      %s650 = smul.addr %s649, 8
      %s651 = scalar_lea.vmem %s21, %s650
      %v653 = vlaneseq
      %vm654 = vcmp.ge.s32.totalorder %v653, 0
      %vm655 = vcmp.lt.s32.totalorder %v653, 512
      %vm656 = vmand %vm654, %vm655
      %s657 = scalar_lea.vmem [#allocation2], 7
      %658 = vst.msk [vmem:[%s657] ss:$8 sm:$0xf] %vm656, 0.0
      %659 = vst.msk [vmem:[%s657] ss:$8 sm:$0x0] %vm656, 0.0
      %s660 = scalar_lea.vmem [#allocation2], 64
      %661 = vst.msk [vmem:[%s660] ss:$8 sm:$0xf] %vm656, 0.0
      %662 = vst.msk [vmem:[%s660] ss:$8 sm:$0x0] %vm656, 0.0
      %v663 = vld [vmem:[%s647] sm:$0xff]
      %664 = vst [vmem:[#allocation2 + $0x20] sm:$0xff] %v663
      %v665 = vld [vmem:[#allocation2] sm:$0x80]
      %v666 = vld [vmem:[#allocation2 + $0x20] sm:$0x7f]
      %v667 = vpack.c.bf16 %v666, %v665
      %v668 = vld [vmem:[%s1] sm:$0xf]
      %v669 = vld [vmem:[%s1 + $0x4] sm:$0xf]
      %v670 = vld [vmem:[%s1 + $0x8] sm:$0xf]
      %v671 = vld [vmem:[%s1 + $0xc] sm:$0xf]
      %v672 = vld [vmem:[%s1 + $0x10] sm:$0xf]
      %v673 = vld [vmem:[%s1 + $0x14] sm:$0xf]
      %v674 = vld [vmem:[%s1 + $0x18] sm:$0xf]
      %v675 = vld [vmem:[%s1 + $0x1c] sm:$0xf]
      %v676 = vld [vmem:[%s1 + $0x20] sm:$0xf]
      %v677 = vld [vmem:[%s1 + $0x24] sm:$0xf]
      %v678 = vld [vmem:[%s1 + $0x28] sm:$0xf]
      %v679 = vld [vmem:[%s1 + $0x2c] sm:$0xf]
      %v680 = vld [vmem:[%s1 + $0x30] sm:$0xf]
      %v681 = vld [vmem:[%s1 + $0x34] sm:$0xf]
      %v682 = vld [vmem:[%s1 + $0x38] sm:$0xf]
      %v683 = vld [vmem:[%s1 + $0x3c] sm:$0xf]
      %v684 = vld [vmem:[#allocation2 + $0x20] sm:$0xff]
      %v685 = vpack.c.bf16 %v684, %v684
      %v686 = vld [vmem:[%s1 + $0x40] sm:$0xf]
      %v687 = vld [vmem:[%s1 + $0x44] sm:$0xf]
      %v688 = vld [vmem:[%s1 + $0x48] sm:$0xf]
      %v689 = vld [vmem:[%s1 + $0x4c] sm:$0xf]
      %v690 = vld [vmem:[%s1 + $0x50] sm:$0xf]
      %v691 = vld [vmem:[%s1 + $0x54] sm:$0xf]
      %v692 = vld [vmem:[%s1 + $0x58] sm:$0xf]
      %v693 = vld [vmem:[%s1 + $0x5c] sm:$0xf]
      %v694 = vld [vmem:[%s1 + $0x60] sm:$0xf]
      %v695 = vld [vmem:[%s1 + $0x64] sm:$0xf]
      %v696 = vld [vmem:[%s1 + $0x68] sm:$0xf]
      %v697 = vld [vmem:[%s1 + $0x6c] sm:$0xf]
      %v698 = vld [vmem:[%s1 + $0x70] sm:$0xf]
      %v699 = vld [vmem:[%s1 + $0x74] sm:$0xf]
      %v700 = vld [vmem:[%s1 + $0x78] sm:$0xf]
      %v701 = vld [vmem:[%s1 + $0x7c] sm:$0xf]
      %v718 = vunpack.c.l.b16 %v686
      %v719 = vunpack.c.l.b16 %v687
      %v720 = vunpack.c.l.b16 %v688
      %v721 = vunpack.c.l.b16 %v689
      %v722 = vunpack.c.l.b16 %v690
      %v723 = vunpack.c.l.b16 %v691
      %v724 = vunpack.c.l.b16 %v692
      %v725 = vunpack.c.l.b16 %v693
      %v726 = vunpack.c.l.b16 %v694
      %v727 = vunpack.c.l.b16 %v695
      %v728 = vunpack.c.l.b16 %v696
      %v729 = vunpack.c.l.b16 %v697
      %v730 = vunpack.c.l.b16 %v698
      %v731 = vunpack.c.l.b16 %v699
      %v732 = vunpack.c.l.b16 %v700
      %v733 = vunpack.c.l.b16 %v701
      %v734 = vpack.c.b16 %v719, %v718
      %v735 = vpack.c.b16 %v721, %v720
      %v736 = vpack.c.b16 %v723, %v722
      %v737 = vpack.c.b16 %v725, %v724
      %v738 = vpack.c.b16 %v727, %v726
      %v739 = vpack.c.b16 %v729, %v728
      %v740 = vpack.c.b16 %v731, %v730
      %v741 = vpack.c.b16 %v733, %v732
      %750 = vmatprep.subr.bf16.mxu0 0
      %751 = vmatpush1.bf16.msra.mxu0 %v734
      %752 = vmatprep.subr.bf16.mxu0 0
      %753 = vmatpush1.bf16.msra.mxu0 %v735
      %754 = vmatprep.subr.bf16.mxu0 0
      %755 = vmatpush1.bf16.msra.mxu0 %v736
      %756 = vmatprep.subr.bf16.mxu0 0
      %757 = vmatpush1.bf16.msra.mxu0 %v737
      %758 = vmatprep.subr.bf16.mxu0 0
      %759 = vmatpush1.bf16.msra.mxu0 %v738
      %760 = vmatprep.subr.bf16.mxu0 0
      %761 = vmatpush1.bf16.msra.mxu0 %v739
      %762 = vmatprep.subr.bf16.mxu0 0
      %763 = vmatpush1.bf16.msra.mxu0 %v740
      %764 = vmatprep.subr.bf16.mxu0 0
      %765 = vmatpush1.bf16.msra.mxu0 %v741
      %766 = vmatprep.subr.bf16.mxu0 0
      %767 = vmatpush1.bf16.msra.mxu0 0
      %768 = vmatprep.subr.bf16.mxu0 0
      %769 = vmatpush1.bf16.msra.mxu0 0
      %770 = vmatprep.subr.bf16.mxu0 0
      %771 = vmatpush1.bf16.msra.mxu0 0
      %772 = vmatprep.subr.bf16.mxu0 0
      %773 = vmatpush1.bf16.msra.mxu0 0
      %774 = vmatprep.subr.bf16.mxu0 0
      %775 = vmatpush1.bf16.msra.mxu0 0
      %776 = vmatprep.subr.bf16.mxu0 0
      %777 = vmatpush1.bf16.msra.mxu0 0
      %778 = vmatprep.subr.bf16.mxu0 0
      %779 = vmatpush1.bf16.msra.mxu0 0
      %780 = vmatprep.subr.bf16.mxu0 0
      %781 = vmatpush1.bf16.msra.mxu0 0
      %782 = vmatprep.mubr.bf16.mxu0 0
      %783 = vmatmul.mubr.bf16.gmra.mrb[0].mxu0 %v685
      %v784 = vpop.f32.mrb[0].mxu0
      %v785 = vadd.f32 0.0, %v784
      %v786 = vpop.f32.mrb[0].mxu0
      %v787 = vpop.f32.mrb[0].mxu0
      %v788 = vpop.f32.mrb[0].mxu0
      %789 = vdwg.mxu0
      %v791 = vshrl.u32 %v667, 16
      %v793 = vrot.slane %v791, 3
      %v794 = vshll.u32 %v667, 16
      %v796 = vrot.slane %v794, 4
      %v797 = vor.u32 %v793, %v796
      %v815 = vunpack.c.l.b16 %v668
      %v816 = vunpack.c.l.b16 %v669
      %v817 = vunpack.c.l.b16 %v670
      %v818 = vunpack.c.l.b16 %v671
      %v819 = vunpack.c.l.b16 %v672
      %v820 = vunpack.c.l.b16 %v673
      %v821 = vunpack.c.l.b16 %v674
      %v822 = vunpack.c.l.b16 %v675
      %v823 = vunpack.c.l.b16 %v676
      %v824 = vunpack.c.l.b16 %v677
      %v825 = vunpack.c.l.b16 %v678
      %v826 = vunpack.c.l.b16 %v679
      %v827 = vunpack.c.l.b16 %v680
      %v828 = vunpack.c.l.b16 %v681
      %v829 = vunpack.c.l.b16 %v682
      %v830 = vunpack.c.l.b16 %v683
      %v831 = vpack.c.b16 %v816, %v815
      %v832 = vpack.c.b16 %v818, %v817
      %v833 = vpack.c.b16 %v820, %v819
      %v834 = vpack.c.b16 %v822, %v821
      %v835 = vpack.c.b16 %v824, %v823
      %v836 = vpack.c.b16 %v826, %v825
      %v837 = vpack.c.b16 %v828, %v827
      %v838 = vpack.c.b16 %v830, %v829
      %847 = vmatprep.subr.bf16.mxu0 0
      %848 = vmatpush1.bf16.msra.mxu0 %v831
      %849 = vmatprep.subr.bf16.mxu0 0
      %850 = vmatpush1.bf16.msra.mxu0 %v832
      %851 = vmatprep.subr.bf16.mxu0 0
      %852 = vmatpush1.bf16.msra.mxu0 %v833
      %853 = vmatprep.subr.bf16.mxu0 0
      %854 = vmatpush1.bf16.msra.mxu0 %v834
      %855 = vmatprep.subr.bf16.mxu0 0
      %856 = vmatpush1.bf16.msra.mxu0 %v835
      %857 = vmatprep.subr.bf16.mxu0 0
      %858 = vmatpush1.bf16.msra.mxu0 %v836
      %859 = vmatprep.subr.bf16.mxu0 0
      %860 = vmatpush1.bf16.msra.mxu0 %v837
      %861 = vmatprep.subr.bf16.mxu0 0
      %862 = vmatpush1.bf16.msra.mxu0 %v838
      %863 = vmatprep.subr.bf16.mxu0 0
      %864 = vmatpush1.bf16.msra.mxu0 0
      %865 = vmatprep.subr.bf16.mxu0 0
      %866 = vmatpush1.bf16.msra.mxu0 0
      %867 = vmatprep.subr.bf16.mxu0 0
      %868 = vmatpush1.bf16.msra.mxu0 0
      %869 = vmatprep.subr.bf16.mxu0 0
      %870 = vmatpush1.bf16.msra.mxu0 0
      %871 = vmatprep.subr.bf16.mxu0 0
      %872 = vmatpush1.bf16.msra.mxu0 0
      %873 = vmatprep.subr.bf16.mxu0 0
      %874 = vmatpush1.bf16.msra.mxu0 0
      %875 = vmatprep.subr.bf16.mxu0 0
      %876 = vmatpush1.bf16.msra.mxu0 0
      %877 = vmatprep.subr.bf16.mxu0 0
      %878 = vmatpush1.bf16.msra.mxu0 0
      %879 = vmatprep.mubr.bf16.mxu0 0
      %880 = vmatmul.mubr.bf16.gmra.mrb[0].mxu0 %v797
      %v881 = vpop.f32.mrb[0].mxu0
      %v882 = vadd.f32 %v785, %v881
      %v883 = vpop.f32.mrb[0].mxu0
      %v884 = vpop.f32.mrb[0].mxu0
      %v885 = vpop.f32.mrb[0].mxu0
      %886 = vdwg.mxu0
      %v887 = vld [vmem:[#allocation2 + $0x20] sm:$0xfe]
      %v888 = vld [vmem:[#allocation2 + $0x40] sm:$0x1]
      %v889 = vpack.c.bf16 %v888, %v887
      %v890 = vld [vmem:[%s1 + $0x80] sm:$0xf]
      %v891 = vld [vmem:[%s1 + $0x84] sm:$0xf]
      %v892 = vld [vmem:[%s1 + $0x88] sm:$0xf]
      %v893 = vld [vmem:[%s1 + $0x8c] sm:$0xf]
      %v894 = vld [vmem:[%s1 + $0x90] sm:$0xf]
      %v895 = vld [vmem:[%s1 + $0x94] sm:$0xf]
      %v896 = vld [vmem:[%s1 + $0x98] sm:$0xf]
      %v897 = vld [vmem:[%s1 + $0x9c] sm:$0xf]
      %v898 = vld [vmem:[%s1 + $0xa0] sm:$0xf]
      %v899 = vld [vmem:[%s1 + $0xa4] sm:$0xf]
      %v900 = vld [vmem:[%s1 + $0xa8] sm:$0xf]
      %v901 = vld [vmem:[%s1 + $0xac] sm:$0xf]
      %v902 = vld [vmem:[%s1 + $0xb0] sm:$0xf]
      %v903 = vld [vmem:[%s1 + $0xb4] sm:$0xf]
      %v904 = vld [vmem:[%s1 + $0xb8] sm:$0xf]
      %v905 = vld [vmem:[%s1 + $0xbc] sm:$0xf]
      %v907 = vshrl.u32 %v889, 16
      %v909 = vshll.u32 %v889, 16
      %v911 = vrot.slane %v909, 1
      %v912 = vor.u32 %v907, %v911
      %v930 = vunpack.c.l.b16 %v890
      %v931 = vunpack.c.l.b16 %v891
      %v932 = vunpack.c.l.b16 %v892
      %v933 = vunpack.c.l.b16 %v893
      %v934 = vunpack.c.l.b16 %v894
      %v935 = vunpack.c.l.b16 %v895
      %v936 = vunpack.c.l.b16 %v896
      %v937 = vunpack.c.l.b16 %v897
      %v938 = vunpack.c.l.b16 %v898
      %v939 = vunpack.c.l.b16 %v899
      %v940 = vunpack.c.l.b16 %v900
      %v941 = vunpack.c.l.b16 %v901
      %v942 = vunpack.c.l.b16 %v902
      %v943 = vunpack.c.l.b16 %v903
      %v944 = vunpack.c.l.b16 %v904
      %v945 = vunpack.c.l.b16 %v905
      %v946 = vpack.c.b16 %v931, %v930
      %v947 = vpack.c.b16 %v933, %v932
      %v948 = vpack.c.b16 %v935, %v934
      %v949 = vpack.c.b16 %v937, %v936
      %v950 = vpack.c.b16 %v939, %v938
      %v951 = vpack.c.b16 %v941, %v940
      %v952 = vpack.c.b16 %v943, %v942
      %v953 = vpack.c.b16 %v945, %v944
      %962 = vmatprep.subr.bf16.mxu0 0
      %963 = vmatpush1.bf16.msra.mxu0 %v946
      %964 = vmatprep.subr.bf16.mxu0 0
      %965 = vmatpush1.bf16.msra.mxu0 %v947
      %966 = vmatprep.subr.bf16.mxu0 0
      %967 = vmatpush1.bf16.msra.mxu0 %v948
      %968 = vmatprep.subr.bf16.mxu0 0
      %969 = vmatpush1.bf16.msra.mxu0 %v949
      %970 = vmatprep.subr.bf16.mxu0 0
      %971 = vmatpush1.bf16.msra.mxu0 %v950
      %972 = vmatprep.subr.bf16.mxu0 0
      %973 = vmatpush1.bf16.msra.mxu0 %v951
      %974 = vmatprep.subr.bf16.mxu0 0
      %975 = vmatpush1.bf16.msra.mxu0 %v952
      %976 = vmatprep.subr.bf16.mxu0 0
      %977 = vmatpush1.bf16.msra.mxu0 %v953
      %978 = vmatprep.subr.bf16.mxu0 0
      %979 = vmatpush1.bf16.msra.mxu0 0
      %980 = vmatprep.subr.bf16.mxu0 0
      %981 = vmatpush1.bf16.msra.mxu0 0
      %982 = vmatprep.subr.bf16.mxu0 0
      %983 = vmatpush1.bf16.msra.mxu0 0
      %984 = vmatprep.subr.bf16.mxu0 0
      %985 = vmatpush1.bf16.msra.mxu0 0
      %986 = vmatprep.subr.bf16.mxu0 0
      %987 = vmatpush1.bf16.msra.mxu0 0
      %988 = vmatprep.subr.bf16.mxu0 0
      %989 = vmatpush1.bf16.msra.mxu0 0
      %990 = vmatprep.subr.bf16.mxu0 0
      %991 = vmatpush1.bf16.msra.mxu0 0
      %992 = vmatprep.subr.bf16.mxu0 0
      %993 = vmatpush1.bf16.msra.mxu0 0
      %994 = vmatprep.mubr.bf16.mxu0 0
      %995 = vmatmul.mubr.bf16.gmra.mrb[0].mxu0 %v912
      %v996 = vpop.f32.mrb[0].mxu0
      %v997 = vadd.f32 0.0, %v996
      %v998 = vpop.f32.mrb[0].mxu0
      %v999 = vpop.f32.mrb[0].mxu0
      %v1000 = vpop.f32.mrb[0].mxu0
      %1001 = vdwg.mxu0
      %v1002 = vadd.f32 %v882, %v997
      %v1003 = vld [vmem:[%s2] sm:$0x1]
      %v1005 = vlaneseq
      %v1006 = vshrl.u32 %v1005, 7
      %v1007 = vsub.s32 0, %v1006
      %v1008 = vrot.slane %v1003, %v1007
      %v1010 = vadd.f32 %v1002, %v1008
      %vm1011 = vcmp.ge.f32.partialorder %v1010, 0.0
      %v1012 = vmul.f32 %v1010, 0.25
      %v1013 = vsel %vm1011, %v1010, %v1012
      %1014 = vst [vmem:[#allocation2 + $0x20] sm:$0xff] %v1013
      %v1015 = vld [vmem:[#allocation2] sm:$0x80]
      %v1016 = vld [vmem:[#allocation2 + $0x20] sm:$0x7f]
      %v1017 = vpack.c.bf16 %v1016, %v1015
      %v1018 = vld [vmem:[%s3] sm:$0xf]
      %v1019 = vld [vmem:[%s3 + $0x4] sm:$0xf]
      %v1020 = vld [vmem:[%s3 + $0x8] sm:$0xf]
      %v1021 = vld [vmem:[%s3 + $0xc] sm:$0xf]
      %v1022 = vld [vmem:[%s3 + $0x10] sm:$0xf]
      %v1023 = vld [vmem:[%s3 + $0x14] sm:$0xf]
      %v1024 = vld [vmem:[%s3 + $0x18] sm:$0xf]
      %v1025 = vld [vmem:[%s3 + $0x1c] sm:$0xf]
      %v1026 = vld [vmem:[%s3 + $0x20] sm:$0xf]
      %v1027 = vld [vmem:[%s3 + $0x24] sm:$0xf]
      %v1028 = vld [vmem:[%s3 + $0x28] sm:$0xf]
      %v1029 = vld [vmem:[%s3 + $0x2c] sm:$0xf]
      %v1030 = vld [vmem:[%s3 + $0x30] sm:$0xf]
      %v1031 = vld [vmem:[%s3 + $0x34] sm:$0xf]
      %v1032 = vld [vmem:[%s3 + $0x38] sm:$0xf]
      %v1033 = vld [vmem:[%s3 + $0x3c] sm:$0xf]
      %v1034 = vld [vmem:[#allocation2 + $0x20] sm:$0xff]
      %v1035 = vpack.c.bf16 %v1034, %v1034
      %v1036 = vld [vmem:[%s3 + $0x40] sm:$0xf]
      %v1037 = vld [vmem:[%s3 + $0x44] sm:$0xf]
      %v1038 = vld [vmem:[%s3 + $0x48] sm:$0xf]
      %v1039 = vld [vmem:[%s3 + $0x4c] sm:$0xf]
      %v1040 = vld [vmem:[%s3 + $0x50] sm:$0xf]
      %v1041 = vld [vmem:[%s3 + $0x54] sm:$0xf]
      %v1042 = vld [vmem:[%s3 + $0x58] sm:$0xf]
      %v1043 = vld [vmem:[%s3 + $0x5c] sm:$0xf]
      %v1044 = vld [vmem:[%s3 + $0x60] sm:$0xf]
      %v1045 = vld [vmem:[%s3 + $0x64] sm:$0xf]
      %v1046 = vld [vmem:[%s3 + $0x68] sm:$0xf]
      %v1047 = vld [vmem:[%s3 + $0x6c] sm:$0xf]
      %v1048 = vld [vmem:[%s3 + $0x70] sm:$0xf]
      %v1049 = vld [vmem:[%s3 + $0x74] sm:$0xf]
      %v1050 = vld [vmem:[%s3 + $0x78] sm:$0xf]
      %v1051 = vld [vmem:[%s3 + $0x7c] sm:$0xf]
      %v1068 = vunpack.c.l.b16 %v1036
      %v1069 = vunpack.c.l.b16 %v1037
      %v1070 = vunpack.c.l.b16 %v1038
      %v1071 = vunpack.c.l.b16 %v1039
      %v1072 = vunpack.c.l.b16 %v1040
      %v1073 = vunpack.c.l.b16 %v1041
      %v1074 = vunpack.c.l.b16 %v1042
      %v1075 = vunpack.c.l.b16 %v1043
      %v1076 = vunpack.c.l.b16 %v1044
      %v1077 = vunpack.c.l.b16 %v1045
      %v1078 = vunpack.c.l.b16 %v1046
      %v1079 = vunpack.c.l.b16 %v1047
      %v1080 = vunpack.c.l.b16 %v1048
      %v1081 = vunpack.c.l.b16 %v1049
      %v1082 = vunpack.c.l.b16 %v1050
      %v1083 = vunpack.c.l.b16 %v1051
      %v1084 = vpack.c.b16 %v1069, %v1068
      %v1085 = vpack.c.b16 %v1071, %v1070
      %v1086 = vpack.c.b16 %v1073, %v1072
      %v1087 = vpack.c.b16 %v1075, %v1074
      %v1088 = vpack.c.b16 %v1077, %v1076
      %v1089 = vpack.c.b16 %v1079, %v1078
      %v1090 = vpack.c.b16 %v1081, %v1080
      %v1091 = vpack.c.b16 %v1083, %v1082
      %1100 = vmatprep.subr.bf16.mxu0 0
      %1101 = vmatpush1.bf16.msra.mxu0 %v1084
      %1102 = vmatprep.subr.bf16.mxu0 0
      %1103 = vmatpush1.bf16.msra.mxu0 %v1085
      %1104 = vmatprep.subr.bf16.mxu0 0
      %1105 = vmatpush1.bf16.msra.mxu0 %v1086
      %1106 = vmatprep.subr.bf16.mxu0 0
      %1107 = vmatpush1.bf16.msra.mxu0 %v1087
      %1108 = vmatprep.subr.bf16.mxu0 0
      %1109 = vmatpush1.bf16.msra.mxu0 %v1088
      %1110 = vmatprep.subr.bf16.mxu0 0
      %1111 = vmatpush1.bf16.msra.mxu0 %v1089
      %1112 = vmatprep.subr.bf16.mxu0 0
      %1113 = vmatpush1.bf16.msra.mxu0 %v1090
      %1114 = vmatprep.subr.bf16.mxu0 0
      %1115 = vmatpush1.bf16.msra.mxu0 %v1091
      %1116 = vmatprep.subr.bf16.mxu0 0
      %1117 = vmatpush1.bf16.msra.mxu0 0
      %1118 = vmatprep.subr.bf16.mxu0 0
      %1119 = vmatpush1.bf16.msra.mxu0 0
      %1120 = vmatprep.subr.bf16.mxu0 0
      %1121 = vmatpush1.bf16.msra.mxu0 0
      %1122 = vmatprep.subr.bf16.mxu0 0
      %1123 = vmatpush1.bf16.msra.mxu0 0
      %1124 = vmatprep.subr.bf16.mxu0 0
      %1125 = vmatpush1.bf16.msra.mxu0 0
      %1126 = vmatprep.subr.bf16.mxu0 0
      %1127 = vmatpush1.bf16.msra.mxu0 0
      %1128 = vmatprep.subr.bf16.mxu0 0
      %1129 = vmatpush1.bf16.msra.mxu0 0
      %1130 = vmatprep.subr.bf16.mxu0 0
      %1131 = vmatpush1.bf16.msra.mxu0 0
      %1132 = vmatprep.mubr.bf16.mxu0 0
      %1133 = vmatmul.mubr.bf16.gmra.mrb[0].mxu0 %v1035
      %v1134 = vpop.f32.mrb[0].mxu0
      %v1135 = vadd.f32 0.0, %v1134
      %v1136 = vpop.f32.mrb[0].mxu0
      %v1137 = vpop.f32.mrb[0].mxu0
      %v1138 = vpop.f32.mrb[0].mxu0
      %1139 = vdwg.mxu0
      %v1141 = vshrl.u32 %v1017, 16
      %v1143 = vrot.slane %v1141, 3
      %v1144 = vshll.u32 %v1017, 16
      %v1146 = vrot.slane %v1144, 4
      %v1147 = vor.u32 %v1143, %v1146
      %v1165 = vunpack.c.l.b16 %v1018
      %v1166 = vunpack.c.l.b16 %v1019
      %v1167 = vunpack.c.l.b16 %v1020
      %v1168 = vunpack.c.l.b16 %v1021
      %v1169 = vunpack.c.l.b16 %v1022
      %v1170 = vunpack.c.l.b16 %v1023
      %v1171 = vunpack.c.l.b16 %v1024
      %v1172 = vunpack.c.l.b16 %v1025
      %v1173 = vunpack.c.l.b16 %v1026
      %v1174 = vunpack.c.l.b16 %v1027
      %v1175 = vunpack.c.l.b16 %v1028
      %v1176 = vunpack.c.l.b16 %v1029
      %v1177 = vunpack.c.l.b16 %v1030
      %v1178 = vunpack.c.l.b16 %v1031
      %v1179 = vunpack.c.l.b16 %v1032
      %v1180 = vunpack.c.l.b16 %v1033
      %v1181 = vpack.c.b16 %v1166, %v1165
      %v1182 = vpack.c.b16 %v1168, %v1167
      %v1183 = vpack.c.b16 %v1170, %v1169
      %v1184 = vpack.c.b16 %v1172, %v1171
      %v1185 = vpack.c.b16 %v1174, %v1173
      %v1186 = vpack.c.b16 %v1176, %v1175
      %v1187 = vpack.c.b16 %v1178, %v1177
      %v1188 = vpack.c.b16 %v1180, %v1179
      %1197 = vmatprep.subr.bf16.mxu0 0
      %1198 = vmatpush1.bf16.msra.mxu0 %v1181
      %1199 = vmatprep.subr.bf16.mxu0 0
      %1200 = vmatpush1.bf16.msra.mxu0 %v1182
      %1201 = vmatprep.subr.bf16.mxu0 0
      %1202 = vmatpush1.bf16.msra.mxu0 %v1183
      %1203 = vmatprep.subr.bf16.mxu0 0
      %1204 = vmatpush1.bf16.msra.mxu0 %v1184
      %1205 = vmatprep.subr.bf16.mxu0 0
      %1206 = vmatpush1.bf16.msra.mxu0 %v1185
      %1207 = vmatprep.subr.bf16.mxu0 0
      %1208 = vmatpush1.bf16.msra.mxu0 %v1186
      %1209 = vmatprep.subr.bf16.mxu0 0
      %1210 = vmatpush1.bf16.msra.mxu0 %v1187
      %1211 = vmatprep.subr.bf16.mxu0 0
      %1212 = vmatpush1.bf16.msra.mxu0 %v1188
      %1213 = vmatprep.subr.bf16.mxu0 0
      %1214 = vmatpush1.bf16.msra.mxu0 0
      %1215 = vmatprep.subr.bf16.mxu0 0
      %1216 = vmatpush1.bf16.msra.mxu0 0
      %1217 = vmatprep.subr.bf16.mxu0 0
      %1218 = vmatpush1.bf16.msra.mxu0 0
      %1219 = vmatprep.subr.bf16.mxu0 0
      %1220 = vmatpush1.bf16.msra.mxu0 0
      %1221 = vmatprep.subr.bf16.mxu0 0
      %1222 = vmatpush1.bf16.msra.mxu0 0
      %1223 = vmatprep.subr.bf16.mxu0 0
      %1224 = vmatpush1.bf16.msra.mxu0 0
      %1225 = vmatprep.subr.bf16.mxu0 0
      %1226 = vmatpush1.bf16.msra.mxu0 0
      %1227 = vmatprep.subr.bf16.mxu0 0
      %1228 = vmatpush1.bf16.msra.mxu0 0
      %1229 = vmatprep.mubr.bf16.mxu0 0
      %1230 = vmatmul.mubr.bf16.gmra.mrb[0].mxu0 %v1147
      %v1231 = vpop.f32.mrb[0].mxu0
      %v1232 = vadd.f32 %v1135, %v1231
      %v1233 = vpop.f32.mrb[0].mxu0
      %v1234 = vpop.f32.mrb[0].mxu0
      %v1235 = vpop.f32.mrb[0].mxu0
      %1236 = vdwg.mxu0
      %v1237 = vld [vmem:[#allocation2 + $0x20] sm:$0xfe]
      %v1238 = vld [vmem:[#allocation2 + $0x40] sm:$0x1]
      %v1239 = vpack.c.bf16 %v1238, %v1237
      %v1240 = vld [vmem:[%s3 + $0x80] sm:$0xf]
      %v1241 = vld [vmem:[%s3 + $0x84] sm:$0xf]
      %v1242 = vld [vmem:[%s3 + $0x88] sm:$0xf]
      %v1243 = vld [vmem:[%s3 + $0x8c] sm:$0xf]
      %v1244 = vld [vmem:[%s3 + $0x90] sm:$0xf]
      %v1245 = vld [vmem:[%s3 + $0x94] sm:$0xf]
      %v1246 = vld [vmem:[%s3 + $0x98] sm:$0xf]
      %v1247 = vld [vmem:[%s3 + $0x9c] sm:$0xf]
      %v1248 = vld [vmem:[%s3 + $0xa0] sm:$0xf]
      %v1249 = vld [vmem:[%s3 + $0xa4] sm:$0xf]
      %v1250 = vld [vmem:[%s3 + $0xa8] sm:$0xf]
      %v1251 = vld [vmem:[%s3 + $0xac] sm:$0xf]
      %v1252 = vld [vmem:[%s3 + $0xb0] sm:$0xf]
      %v1253 = vld [vmem:[%s3 + $0xb4] sm:$0xf]
      %v1254 = vld [vmem:[%s3 + $0xb8] sm:$0xf]
      %v1255 = vld [vmem:[%s3 + $0xbc] sm:$0xf]
      %v1257 = vshrl.u32 %v1239, 16
      %v1259 = vshll.u32 %v1239, 16
      %v1261 = vrot.slane %v1259, 1
      %v1262 = vor.u32 %v1257, %v1261
      %v1280 = vunpack.c.l.b16 %v1240
      %v1281 = vunpack.c.l.b16 %v1241
      %v1282 = vunpack.c.l.b16 %v1242
      %v1283 = vunpack.c.l.b16 %v1243
      %v1284 = vunpack.c.l.b16 %v1244
      %v1285 = vunpack.c.l.b16 %v1245
      %v1286 = vunpack.c.l.b16 %v1246
      %v1287 = vunpack.c.l.b16 %v1247
      %v1288 = vunpack.c.l.b16 %v1248
      %v1289 = vunpack.c.l.b16 %v1249
      %v1290 = vunpack.c.l.b16 %v1250
      %v1291 = vunpack.c.l.b16 %v1251
      %v1292 = vunpack.c.l.b16 %v1252
      %v1293 = vunpack.c.l.b16 %v1253
      %v1294 = vunpack.c.l.b16 %v1254
      %v1295 = vunpack.c.l.b16 %v1255
      %v1296 = vpack.c.b16 %v1281, %v1280
      %v1297 = vpack.c.b16 %v1283, %v1282
      %v1298 = vpack.c.b16 %v1285, %v1284
      %v1299 = vpack.c.b16 %v1287, %v1286
      %v1300 = vpack.c.b16 %v1289, %v1288
      %v1301 = vpack.c.b16 %v1291, %v1290
      %v1302 = vpack.c.b16 %v1293, %v1292
      %v1303 = vpack.c.b16 %v1295, %v1294
      %1312 = vmatprep.subr.bf16.mxu0 0
      %1313 = vmatpush1.bf16.msra.mxu0 %v1296
      %1314 = vmatprep.subr.bf16.mxu0 0
      %1315 = vmatpush1.bf16.msra.mxu0 %v1297
      %1316 = vmatprep.subr.bf16.mxu0 0
      %1317 = vmatpush1.bf16.msra.mxu0 %v1298
      %1318 = vmatprep.subr.bf16.mxu0 0
      %1319 = vmatpush1.bf16.msra.mxu0 %v1299
      %1320 = vmatprep.subr.bf16.mxu0 0
      %1321 = vmatpush1.bf16.msra.mxu0 %v1300
      %1322 = vmatprep.subr.bf16.mxu0 0
      %1323 = vmatpush1.bf16.msra.mxu0 %v1301
      %1324 = vmatprep.subr.bf16.mxu0 0
      %1325 = vmatpush1.bf16.msra.mxu0 %v1302
      %1326 = vmatprep.subr.bf16.mxu0 0
      %1327 = vmatpush1.bf16.msra.mxu0 %v1303
      %1328 = vmatprep.subr.bf16.mxu0 0
      %1329 = vmatpush1.bf16.msra.mxu0 0
      %1330 = vmatprep.subr.bf16.mxu0 0
      %1331 = vmatpush1.bf16.msra.mxu0 0
      %1332 = vmatprep.subr.bf16.mxu0 0
      %1333 = vmatpush1.bf16.msra.mxu0 0
      %1334 = vmatprep.subr.bf16.mxu0 0
      %1335 = vmatpush1.bf16.msra.mxu0 0
      %1336 = vmatprep.subr.bf16.mxu0 0
      %1337 = vmatpush1.bf16.msra.mxu0 0
      %1338 = vmatprep.subr.bf16.mxu0 0
      %1339 = vmatpush1.bf16.msra.mxu0 0
      %1340 = vmatprep.subr.bf16.mxu0 0
      %1341 = vmatpush1.bf16.msra.mxu0 0
      %1342 = vmatprep.subr.bf16.mxu0 0
      %1343 = vmatpush1.bf16.msra.mxu0 0
      %1344 = vmatprep.mubr.bf16.mxu0 0
      %1345 = vmatmul.mubr.bf16.gmra.mrb[0].mxu0 %v1262
      %v1346 = vpop.f32.mrb[0].mxu0
      %v1347 = vadd.f32 0.0, %v1346
      %v1348 = vpop.f32.mrb[0].mxu0
      %v1349 = vpop.f32.mrb[0].mxu0
      %v1350 = vpop.f32.mrb[0].mxu0
      %1351 = vdwg.mxu0
      %v1352 = vadd.f32 %v1232, %v1347
      %v1353 = vld [vmem:[%s4] sm:$0x1]
      %v1355 = vlaneseq
      %v1356 = vshrl.u32 %v1355, 7
      %v1357 = vsub.s32 0, %v1356
      %v1358 = vrot.slane %v1353, %v1357
      %v1360 = vadd.f32 %v1352, %v1358
      %vm1361 = vcmp.ge.f32.partialorder %v1360, 0.0
      %v1362 = vmul.f32 %v1360, 0.25
      %v1363 = vsel %vm1361, %v1360, %v1362
      %1364 = vst [vmem:[#allocation2 + $0x20] sm:$0xff] %v1363
      %v1365 = vld [vmem:[#allocation2] sm:$0x80]
      %v1366 = vld [vmem:[#allocation2 + $0x20] sm:$0x7f]
      %v1367 = vpack.c.bf16 %v1366, %v1365
      %v1368 = vld [vmem:[%s5] sm:$0xff]
      %v1369 = vld [vmem:[%s5 + $0x8] sm:$0xff]
      %v1370 = vld [vmem:[%s5 + $0x10] sm:$0xff]
      %v1371 = vld [vmem:[%s5 + $0x18] sm:$0xff]
      %v1372 = vld [vmem:[%s5 + $0x20] sm:$0xff]
      %v1373 = vld [vmem:[%s5 + $0x28] sm:$0xff]
      %v1374 = vld [vmem:[%s5 + $0x30] sm:$0xff]
      %v1375 = vld [vmem:[%s5 + $0x38] sm:$0xff]
      %v1376 = vld [vmem:[%s5 + $0x40] sm:$0xff]
      %v1377 = vld [vmem:[%s5 + $0x48] sm:$0xff]
      %v1378 = vld [vmem:[%s5 + $0x50] sm:$0xff]
      %v1379 = vld [vmem:[%s5 + $0x58] sm:$0xff]
      %v1380 = vld [vmem:[%s5 + $0x60] sm:$0xff]
      %v1381 = vld [vmem:[%s5 + $0x68] sm:$0xff]
      %v1382 = vld [vmem:[%s5 + $0x70] sm:$0xff]
      %v1383 = vld [vmem:[%s5 + $0x78] sm:$0xff]
      %v1384 = vld [vmem:[%s5 + $0x80] sm:$0xff]
      %v1385 = vld [vmem:[%s5 + $0x88] sm:$0xff]
      %v1386 = vld [vmem:[%s5 + $0x90] sm:$0xff]
      %v1387 = vld [vmem:[%s5 + $0x98] sm:$0xff]
      %v1388 = vld [vmem:[%s5 + $0xa0] sm:$0xff]
      %v1389 = vld [vmem:[%s5 + $0xa8] sm:$0xff]
      %v1390 = vld [vmem:[%s5 + $0xb0] sm:$0xff]
      %v1391 = vld [vmem:[%s5 + $0xb8] sm:$0xff]
      %v1392 = vld [vmem:[%s5 + $0xc0] sm:$0xff]
      %v1393 = vld [vmem:[%s5 + $0xc8] sm:$0xff]
      %v1394 = vld [vmem:[%s5 + $0xd0] sm:$0xff]
      %v1395 = vld [vmem:[%s5 + $0xd8] sm:$0xff]
      %v1396 = vld [vmem:[%s5 + $0xe0] sm:$0xff]
      %v1397 = vld [vmem:[%s5 + $0xe8] sm:$0xff]
      %v1398 = vld [vmem:[%s5 + $0xf0] sm:$0xff]
      %v1399 = vld [vmem:[%s5 + $0xf8] sm:$0xff]
      %v1400 = vld [vmem:[#allocation2 + $0x20] sm:$0xff]
      %v1401 = vpack.c.bf16 %v1400, %v1400
      %v1402 = vld [vmem:[%s5 + $0x100] sm:$0xff]
      %v1403 = vld [vmem:[%s5 + $0x108] sm:$0xff]
      %v1404 = vld [vmem:[%s5 + $0x110] sm:$0xff]
      %v1405 = vld [vmem:[%s5 + $0x118] sm:$0xff]
      %v1406 = vld [vmem:[%s5 + $0x120] sm:$0xff]
      %v1407 = vld [vmem:[%s5 + $0x128] sm:$0xff]
      %v1408 = vld [vmem:[%s5 + $0x130] sm:$0xff]
      %v1409 = vld [vmem:[%s5 + $0x138] sm:$0xff]
      %v1410 = vld [vmem:[%s5 + $0x140] sm:$0xff]
      %v1411 = vld [vmem:[%s5 + $0x148] sm:$0xff]
      %v1412 = vld [vmem:[%s5 + $0x150] sm:$0xff]
      %v1413 = vld [vmem:[%s5 + $0x158] sm:$0xff]
      %v1414 = vld [vmem:[%s5 + $0x160] sm:$0xff]
      %v1415 = vld [vmem:[%s5 + $0x168] sm:$0xff]
      %v1416 = vld [vmem:[%s5 + $0x170] sm:$0xff]
      %v1417 = vld [vmem:[%s5 + $0x178] sm:$0xff]
      %v1418 = vld [vmem:[%s5 + $0x180] sm:$0xff]
      %v1419 = vld [vmem:[%s5 + $0x188] sm:$0xff]
      %v1420 = vld [vmem:[%s5 + $0x190] sm:$0xff]
      %v1421 = vld [vmem:[%s5 + $0x198] sm:$0xff]
      %v1422 = vld [vmem:[%s5 + $0x1a0] sm:$0xff]
      %v1423 = vld [vmem:[%s5 + $0x1a8] sm:$0xff]
      %v1424 = vld [vmem:[%s5 + $0x1b0] sm:$0xff]
      %v1425 = vld [vmem:[%s5 + $0x1b8] sm:$0xff]
      %v1426 = vld [vmem:[%s5 + $0x1c0] sm:$0xff]
      %v1427 = vld [vmem:[%s5 + $0x1c8] sm:$0xff]
      %v1428 = vld [vmem:[%s5 + $0x1d0] sm:$0xff]
      %v1429 = vld [vmem:[%s5 + $0x1d8] sm:$0xff]
      %v1430 = vld [vmem:[%s5 + $0x1e0] sm:$0xff]
      %v1431 = vld [vmem:[%s5 + $0x1e8] sm:$0xff]
      %v1432 = vld [vmem:[%s5 + $0x1f0] sm:$0xff]
      %v1433 = vld [vmem:[%s5 + $0x1f8] sm:$0xff]
      %v1466 = vunpack.c.l.b16 %v1402
      %v1467 = vunpack.c.h.b16 %v1402
      %v1468 = vunpack.c.l.b16 %v1403
      %v1469 = vunpack.c.h.b16 %v1403
      %v1470 = vunpack.c.l.b16 %v1404
      %v1471 = vunpack.c.h.b16 %v1404
      %v1472 = vunpack.c.l.b16 %v1405
      %v1473 = vunpack.c.h.b16 %v1405
      %v1474 = vunpack.c.l.b16 %v1406
      %v1475 = vunpack.c.h.b16 %v1406
      %v1476 = vunpack.c.l.b16 %v1407
      %v1477 = vunpack.c.h.b16 %v1407
      %v1478 = vunpack.c.l.b16 %v1408
      %v1479 = vunpack.c.h.b16 %v1408
      %v1480 = vunpack.c.l.b16 %v1409
      %v1481 = vunpack.c.h.b16 %v1409
      %v1482 = vunpack.c.l.b16 %v1410
      %v1483 = vunpack.c.h.b16 %v1410
      %v1484 = vunpack.c.l.b16 %v1411
      %v1485 = vunpack.c.h.b16 %v1411
      %v1486 = vunpack.c.l.b16 %v1412
      %v1487 = vunpack.c.h.b16 %v1412
      %v1488 = vunpack.c.l.b16 %v1413
      %v1489 = vunpack.c.h.b16 %v1413
      %v1490 = vunpack.c.l.b16 %v1414
      %v1491 = vunpack.c.h.b16 %v1414
      %v1492 = vunpack.c.l.b16 %v1415
      %v1493 = vunpack.c.h.b16 %v1415
      %v1494 = vunpack.c.l.b16 %v1416
      %v1495 = vunpack.c.h.b16 %v1416
      %v1496 = vunpack.c.l.b16 %v1417
      %v1497 = vunpack.c.h.b16 %v1417
      %v1498 = vunpack.c.l.b16 %v1418
      %v1499 = vunpack.c.h.b16 %v1418
      %v1500 = vunpack.c.l.b16 %v1419
      %v1501 = vunpack.c.h.b16 %v1419
      %v1502 = vunpack.c.l.b16 %v1420
      %v1503 = vunpack.c.h.b16 %v1420
      %v1504 = vunpack.c.l.b16 %v1421
      %v1505 = vunpack.c.h.b16 %v1421
      %v1506 = vunpack.c.l.b16 %v1422
      %v1507 = vunpack.c.h.b16 %v1422
      %v1508 = vunpack.c.l.b16 %v1423
      %v1509 = vunpack.c.h.b16 %v1423
      %v1510 = vunpack.c.l.b16 %v1424
      %v1511 = vunpack.c.h.b16 %v1424
      %v1512 = vunpack.c.l.b16 %v1425
      %v1513 = vunpack.c.h.b16 %v1425
      %v1514 = vunpack.c.l.b16 %v1426
      %v1515 = vunpack.c.h.b16 %v1426
      %v1516 = vunpack.c.l.b16 %v1427
      %v1517 = vunpack.c.h.b16 %v1427
      %v1518 = vunpack.c.l.b16 %v1428
      %v1519 = vunpack.c.h.b16 %v1428
      %v1520 = vunpack.c.l.b16 %v1429
      %v1521 = vunpack.c.h.b16 %v1429
      %v1522 = vunpack.c.l.b16 %v1430
      %v1523 = vunpack.c.h.b16 %v1430
      %v1524 = vunpack.c.l.b16 %v1431
      %v1525 = vunpack.c.h.b16 %v1431
      %v1526 = vunpack.c.l.b16 %v1432
      %v1527 = vunpack.c.h.b16 %v1432
      %v1528 = vunpack.c.l.b16 %v1433
      %v1529 = vunpack.c.h.b16 %v1433
      %v1530 = vpack.c.b16 %v1470, %v1466
      %v1531 = vpack.c.b16 %v1471, %v1467
      %v1532 = vpack.c.b16 %v1472, %v1468
      %v1533 = vpack.c.b16 %v1473, %v1469
      %v1534 = vpack.c.b16 %v1478, %v1474
      %v1535 = vpack.c.b16 %v1479, %v1475
      %v1536 = vpack.c.b16 %v1480, %v1476
      %v1537 = vpack.c.b16 %v1481, %v1477
      %v1538 = vpack.c.b16 %v1486, %v1482
      %v1539 = vpack.c.b16 %v1487, %v1483
      %v1540 = vpack.c.b16 %v1488, %v1484
      %v1541 = vpack.c.b16 %v1489, %v1485
      %v1542 = vpack.c.b16 %v1494, %v1490
      %v1543 = vpack.c.b16 %v1495, %v1491
      %v1544 = vpack.c.b16 %v1496, %v1492
      %v1545 = vpack.c.b16 %v1497, %v1493
      %v1546 = vpack.c.b16 %v1502, %v1498
      %v1547 = vpack.c.b16 %v1503, %v1499
      %v1548 = vpack.c.b16 %v1504, %v1500
      %v1549 = vpack.c.b16 %v1505, %v1501
      %v1550 = vpack.c.b16 %v1510, %v1506
      %v1551 = vpack.c.b16 %v1511, %v1507
      %v1552 = vpack.c.b16 %v1512, %v1508
      %v1553 = vpack.c.b16 %v1513, %v1509
      %v1554 = vpack.c.b16 %v1518, %v1514
      %v1555 = vpack.c.b16 %v1519, %v1515
      %v1556 = vpack.c.b16 %v1520, %v1516
      %v1557 = vpack.c.b16 %v1521, %v1517
      %v1558 = vpack.c.b16 %v1526, %v1522
      %v1559 = vpack.c.b16 %v1527, %v1523
      %v1560 = vpack.c.b16 %v1528, %v1524
      %v1561 = vpack.c.b16 %v1529, %v1525
      %1594 = vmatprep.subr.bf16.mxu0 %v1531
      %1595 = vmatpush1.bf16.msra.mxu0 %v1530
      %1596 = vmatprep.subr.bf16.mxu0 %v1535
      %1597 = vmatpush1.bf16.msra.mxu0 %v1534
      %1598 = vmatprep.subr.bf16.mxu0 %v1539
      %1599 = vmatpush1.bf16.msra.mxu0 %v1538
      %1600 = vmatprep.subr.bf16.mxu0 %v1543
      %1601 = vmatpush1.bf16.msra.mxu0 %v1542
      %1602 = vmatprep.subr.bf16.mxu0 %v1547
      %1603 = vmatpush1.bf16.msra.mxu0 %v1546
      %1604 = vmatprep.subr.bf16.mxu0 %v1551
      %1605 = vmatpush1.bf16.msra.mxu0 %v1550
      %1606 = vmatprep.subr.bf16.mxu0 %v1555
      %1607 = vmatpush1.bf16.msra.mxu0 %v1554
      %1608 = vmatprep.subr.bf16.mxu0 %v1559
      %1609 = vmatpush1.bf16.msra.mxu0 %v1558
      %1610 = vmatprep.subr.bf16.mxu0 0
      %1611 = vmatpush1.bf16.msra.mxu0 0
      %1612 = vmatprep.subr.bf16.mxu0 0
      %1613 = vmatpush1.bf16.msra.mxu0 0
      %1614 = vmatprep.subr.bf16.mxu0 0
      %1615 = vmatpush1.bf16.msra.mxu0 0
      %1616 = vmatprep.subr.bf16.mxu0 0
      %1617 = vmatpush1.bf16.msra.mxu0 0
      %1618 = vmatprep.subr.bf16.mxu0 0
      %1619 = vmatpush1.bf16.msra.mxu0 0
      %1620 = vmatprep.subr.bf16.mxu0 0
      %1621 = vmatpush1.bf16.msra.mxu0 0
      %1622 = vmatprep.subr.bf16.mxu0 0
      %1623 = vmatpush1.bf16.msra.mxu0 0
      %1624 = vmatprep.subr.bf16.mxu0 0
      %1625 = vmatpush1.bf16.msra.mxu0 0
      %1626 = vmatprep.mubr.bf16.mxu0 0
      %1627 = vmatmul.mubr.bf16.gmra.mrb[0].mxu0 %v1401
      %v1628 = vpop.f32.mrb[0].mxu0
      %v1629 = vadd.f32 0.0, %v1628
      %v1630 = vpop.f32.mrb[0].mxu0
      %v1631 = vadd.f32 0.0, %v1630
      %v1632 = vpop.f32.mrb[0].mxu0
      %v1633 = vpop.f32.mrb[0].mxu0
      %1634 = vdwg.mxu0
      %1635 = vmatprep.subr.bf16.mxu0 %v1533
      %1636 = vmatpush1.bf16.msra.mxu0 %v1532
      %1637 = vmatprep.subr.bf16.mxu0 %v1537
      %1638 = vmatpush1.bf16.msra.mxu0 %v1536
      %1639 = vmatprep.subr.bf16.mxu0 %v1541
      %1640 = vmatpush1.bf16.msra.mxu0 %v1540
      %1641 = vmatprep.subr.bf16.mxu0 %v1545
      %1642 = vmatpush1.bf16.msra.mxu0 %v1544
      %1643 = vmatprep.subr.bf16.mxu0 %v1549
      %1644 = vmatpush1.bf16.msra.mxu0 %v1548
      %1645 = vmatprep.subr.bf16.mxu0 %v1553
      %1646 = vmatpush1.bf16.msra.mxu0 %v1552
      %1647 = vmatprep.subr.bf16.mxu0 %v1557
      %1648 = vmatpush1.bf16.msra.mxu0 %v1556
      %1649 = vmatprep.subr.bf16.mxu0 %v1561
      %1650 = vmatpush1.bf16.msra.mxu0 %v1560
      %1651 = vmatprep.subr.bf16.mxu0 0
      %1652 = vmatpush1.bf16.msra.mxu0 0
      %1653 = vmatprep.subr.bf16.mxu0 0
      %1654 = vmatpush1.bf16.msra.mxu0 0
      %1655 = vmatprep.subr.bf16.mxu0 0
      %1656 = vmatpush1.bf16.msra.mxu0 0
      %1657 = vmatprep.subr.bf16.mxu0 0
      %1658 = vmatpush1.bf16.msra.mxu0 0
      %1659 = vmatprep.subr.bf16.mxu0 0
      %1660 = vmatpush1.bf16.msra.mxu0 0
      %1661 = vmatprep.subr.bf16.mxu0 0
      %1662 = vmatpush1.bf16.msra.mxu0 0
      %1663 = vmatprep.subr.bf16.mxu0 0
      %1664 = vmatpush1.bf16.msra.mxu0 0
      %1665 = vmatprep.subr.bf16.mxu0 0
      %1666 = vmatpush1.bf16.msra.mxu0 0
      %1667 = vmatprep.mubr.bf16.mxu0 0
      %1668 = vmatmul.mubr.bf16.gmra.mrb[0].mxu0 %v1401
      %v1669 = vpop.f32.mrb[0].mxu0
      %v1670 = vadd.f32 0.0, %v1669
      %v1671 = vpop.f32.mrb[0].mxu0
      %v1672 = vadd.f32 0.0, %v1671
      %v1673 = vpop.f32.mrb[0].mxu0
      %v1674 = vpop.f32.mrb[0].mxu0
      %1675 = vdwg.mxu0
      %v1677 = vshrl.u32 %v1367, 16
      %v1679 = vrot.slane %v1677, 3
      %v1680 = vshll.u32 %v1367, 16
      %v1682 = vrot.slane %v1680, 4
      %v1683 = vor.u32 %v1679, %v1682
      %v1717 = vunpack.c.l.b16 %v1368
      %v1718 = vunpack.c.h.b16 %v1368
      %v1719 = vunpack.c.l.b16 %v1369
      %v1720 = vunpack.c.h.b16 %v1369
      %v1721 = vunpack.c.l.b16 %v1370
      %v1722 = vunpack.c.h.b16 %v1370
      %v1723 = vunpack.c.l.b16 %v1371
      %v1724 = vunpack.c.h.b16 %v1371
      %v1725 = vunpack.c.l.b16 %v1372
      %v1726 = vunpack.c.h.b16 %v1372
      %v1727 = vunpack.c.l.b16 %v1373
      %v1728 = vunpack.c.h.b16 %v1373
      %v1729 = vunpack.c.l.b16 %v1374
      %v1730 = vunpack.c.h.b16 %v1374
      %v1731 = vunpack.c.l.b16 %v1375
      %v1732 = vunpack.c.h.b16 %v1375
      %v1733 = vunpack.c.l.b16 %v1376
      %v1734 = vunpack.c.h.b16 %v1376
      %v1735 = vunpack.c.l.b16 %v1377
      %v1736 = vunpack.c.h.b16 %v1377
      %v1737 = vunpack.c.l.b16 %v1378
      %v1738 = vunpack.c.h.b16 %v1378
      %v1739 = vunpack.c.l.b16 %v1379
      %v1740 = vunpack.c.h.b16 %v1379
      %v1741 = vunpack.c.l.b16 %v1380
      %v1742 = vunpack.c.h.b16 %v1380
      %v1743 = vunpack.c.l.b16 %v1381
      %v1744 = vunpack.c.h.b16 %v1381
      %v1745 = vunpack.c.l.b16 %v1382
      %v1746 = vunpack.c.h.b16 %v1382
      %v1747 = vunpack.c.l.b16 %v1383
      %v1748 = vunpack.c.h.b16 %v1383
      %v1749 = vunpack.c.l.b16 %v1384
      %v1750 = vunpack.c.h.b16 %v1384
      %v1751 = vunpack.c.l.b16 %v1385
      %v1752 = vunpack.c.h.b16 %v1385
      %v1753 = vunpack.c.l.b16 %v1386
      %v1754 = vunpack.c.h.b16 %v1386
      %v1755 = vunpack.c.l.b16 %v1387
      %v1756 = vunpack.c.h.b16 %v1387
      %v1757 = vunpack.c.l.b16 %v1388
      %v1758 = vunpack.c.h.b16 %v1388
      %v1759 = vunpack.c.l.b16 %v1389
      %v1760 = vunpack.c.h.b16 %v1389
      %v1761 = vunpack.c.l.b16 %v1390
      %v1762 = vunpack.c.h.b16 %v1390
      %v1763 = vunpack.c.l.b16 %v1391
      %v1764 = vunpack.c.h.b16 %v1391
      %v1765 = vunpack.c.l.b16 %v1392
      %v1766 = vunpack.c.h.b16 %v1392
      %v1767 = vunpack.c.l.b16 %v1393
      %v1768 = vunpack.c.h.b16 %v1393
      %v1769 = vunpack.c.l.b16 %v1394
      %v1770 = vunpack.c.h.b16 %v1394
      %v1771 = vunpack.c.l.b16 %v1395
      %v1772 = vunpack.c.h.b16 %v1395
      %v1773 = vunpack.c.l.b16 %v1396
      %v1774 = vunpack.c.h.b16 %v1396
      %v1775 = vunpack.c.l.b16 %v1397
      %v1776 = vunpack.c.h.b16 %v1397
      %v1777 = vunpack.c.l.b16 %v1398
      %v1778 = vunpack.c.h.b16 %v1398
      %v1779 = vunpack.c.l.b16 %v1399
      %v1780 = vunpack.c.h.b16 %v1399
      %v1781 = vpack.c.b16 %v1721, %v1717
      %v1782 = vpack.c.b16 %v1722, %v1718
      %v1783 = vpack.c.b16 %v1723, %v1719
      %v1784 = vpack.c.b16 %v1724, %v1720
      %v1785 = vpack.c.b16 %v1729, %v1725
      %v1786 = vpack.c.b16 %v1730, %v1726
      %v1787 = vpack.c.b16 %v1731, %v1727
      %v1788 = vpack.c.b16 %v1732, %v1728
      %v1789 = vpack.c.b16 %v1737, %v1733
      %v1790 = vpack.c.b16 %v1738, %v1734
      %v1791 = vpack.c.b16 %v1739, %v1735
      %v1792 = vpack.c.b16 %v1740, %v1736
      %v1793 = vpack.c.b16 %v1745, %v1741
      %v1794 = vpack.c.b16 %v1746, %v1742
      %v1795 = vpack.c.b16 %v1747, %v1743
      %v1796 = vpack.c.b16 %v1748, %v1744
      %v1797 = vpack.c.b16 %v1753, %v1749
      %v1798 = vpack.c.b16 %v1754, %v1750
      %v1799 = vpack.c.b16 %v1755, %v1751
      %v1800 = vpack.c.b16 %v1756, %v1752
      %v1801 = vpack.c.b16 %v1761, %v1757
      %v1802 = vpack.c.b16 %v1762, %v1758
      %v1803 = vpack.c.b16 %v1763, %v1759
      %v1804 = vpack.c.b16 %v1764, %v1760
      %v1805 = vpack.c.b16 %v1769, %v1765
      %v1806 = vpack.c.b16 %v1770, %v1766
      %v1807 = vpack.c.b16 %v1771, %v1767
      %v1808 = vpack.c.b16 %v1772, %v1768
      %v1809 = vpack.c.b16 %v1777, %v1773
      %v1810 = vpack.c.b16 %v1778, %v1774
      %v1811 = vpack.c.b16 %v1779, %v1775
      %v1812 = vpack.c.b16 %v1780, %v1776
      %1845 = vmatprep.subr.bf16.mxu0 %v1782
      %1846 = vmatpush1.bf16.msra.mxu0 %v1781
      %1847 = vmatprep.subr.bf16.mxu0 %v1786
      %1848 = vmatpush1.bf16.msra.mxu0 %v1785
      %1849 = vmatprep.subr.bf16.mxu0 %v1790
      %1850 = vmatpush1.bf16.msra.mxu0 %v1789
      %1851 = vmatprep.subr.bf16.mxu0 %v1794
      %1852 = vmatpush1.bf16.msra.mxu0 %v1793
      %1853 = vmatprep.subr.bf16.mxu0 %v1798
      %1854 = vmatpush1.bf16.msra.mxu0 %v1797
      %1855 = vmatprep.subr.bf16.mxu0 %v1802
      %1856 = vmatpush1.bf16.msra.mxu0 %v1801
      %1857 = vmatprep.subr.bf16.mxu0 %v1806
      %1858 = vmatpush1.bf16.msra.mxu0 %v1805
      %1859 = vmatprep.subr.bf16.mxu0 %v1810
      %1860 = vmatpush1.bf16.msra.mxu0 %v1809
      %1861 = vmatprep.subr.bf16.mxu0 0
      %1862 = vmatpush1.bf16.msra.mxu0 0
      %1863 = vmatprep.subr.bf16.mxu0 0
      %1864 = vmatpush1.bf16.msra.mxu0 0
      %1865 = vmatprep.subr.bf16.mxu0 0
      %1866 = vmatpush1.bf16.msra.mxu0 0
      %1867 = vmatprep.subr.bf16.mxu0 0
      %1868 = vmatpush1.bf16.msra.mxu0 0
      %1869 = vmatprep.subr.bf16.mxu0 0
      %1870 = vmatpush1.bf16.msra.mxu0 0
      %1871 = vmatprep.subr.bf16.mxu0 0
      %1872 = vmatpush1.bf16.msra.mxu0 0
      %1873 = vmatprep.subr.bf16.mxu0 0
      %1874 = vmatpush1.bf16.msra.mxu0 0
      %1875 = vmatprep.subr.bf16.mxu0 0
      %1876 = vmatpush1.bf16.msra.mxu0 0
      %1877 = vmatprep.mubr.bf16.mxu0 0
      %1878 = vmatmul.mubr.bf16.gmra.mrb[0].mxu0 %v1683
      %v1879 = vpop.f32.mrb[0].mxu0
      %v1880 = vadd.f32 %v1629, %v1879
      %v1881 = vpop.f32.mrb[0].mxu0
      %v1882 = vadd.f32 %v1631, %v1881
      %v1883 = vpop.f32.mrb[0].mxu0
      %v1884 = vpop.f32.mrb[0].mxu0
      %1885 = vdwg.mxu0
      %1886 = vmatprep.subr.bf16.mxu0 %v1784
      %1887 = vmatpush1.bf16.msra.mxu0 %v1783
      %1888 = vmatprep.subr.bf16.mxu0 %v1788
      %1889 = vmatpush1.bf16.msra.mxu0 %v1787
      %1890 = vmatprep.subr.bf16.mxu0 %v1792
      %1891 = vmatpush1.bf16.msra.mxu0 %v1791
      %1892 = vmatprep.subr.bf16.mxu0 %v1796
      %1893 = vmatpush1.bf16.msra.mxu0 %v1795
      %1894 = vmatprep.subr.bf16.mxu0 %v1800
      %1895 = vmatpush1.bf16.msra.mxu0 %v1799
      %1896 = vmatprep.subr.bf16.mxu0 %v1804
      %1897 = vmatpush1.bf16.msra.mxu0 %v1803
      %1898 = vmatprep.subr.bf16.mxu0 %v1808
      %1899 = vmatpush1.bf16.msra.mxu0 %v1807
      %1900 = vmatprep.subr.bf16.mxu0 %v1812
      %1901 = vmatpush1.bf16.msra.mxu0 %v1811
      %1902 = vmatprep.subr.bf16.mxu0 0
      %1903 = vmatpush1.bf16.msra.mxu0 0
      %1904 = vmatprep.subr.bf16.mxu0 0
      %1905 = vmatpush1.bf16.msra.mxu0 0
      %1906 = vmatprep.subr.bf16.mxu0 0
      %1907 = vmatpush1.bf16.msra.mxu0 0
      %1908 = vmatprep.subr.bf16.mxu0 0
      %1909 = vmatpush1.bf16.msra.mxu0 0
      %1910 = vmatprep.subr.bf16.mxu0 0
      %1911 = vmatpush1.bf16.msra.mxu0 0
      %1912 = vmatprep.subr.bf16.mxu0 0
      %1913 = vmatpush1.bf16.msra.mxu0 0
      %1914 = vmatprep.subr.bf16.mxu0 0
      %1915 = vmatpush1.bf16.msra.mxu0 0
      %1916 = vmatprep.subr.bf16.mxu0 0
      %1917 = vmatpush1.bf16.msra.mxu0 0
      %1918 = vmatprep.mubr.bf16.mxu0 0
      %1919 = vmatmul.mubr.bf16.gmra.mrb[0].mxu0 %v1683
      %v1920 = vpop.f32.mrb[0].mxu0
      %v1921 = vadd.f32 %v1670, %v1920
      %v1922 = vpop.f32.mrb[0].mxu0
      %v1923 = vadd.f32 %v1672, %v1922
      %v1924 = vpop.f32.mrb[0].mxu0
      %v1925 = vpop.f32.mrb[0].mxu0
      %1926 = vdwg.mxu0
      %v1927 = vld [vmem:[#allocation2 + $0x20] sm:$0xfe]
      %v1928 = vld [vmem:[#allocation2 + $0x40] sm:$0x1]
      %v1929 = vpack.c.bf16 %v1928, %v1927
      %v1930 = vld [vmem:[%s5 + $0x200] sm:$0xff]
      %v1931 = vld [vmem:[%s5 + $0x208] sm:$0xff]
      %v1932 = vld [vmem:[%s5 + $0x210] sm:$0xff]
      %v1933 = vld [vmem:[%s5 + $0x218] sm:$0xff]
      %v1934 = vld [vmem:[%s5 + $0x220] sm:$0xff]
      %v1935 = vld [vmem:[%s5 + $0x228] sm:$0xff]
      %v1936 = vld [vmem:[%s5 + $0x230] sm:$0xff]
      %v1937 = vld [vmem:[%s5 + $0x238] sm:$0xff]
      %v1938 = vld [vmem:[%s5 + $0x240] sm:$0xff]
      %v1939 = vld [vmem:[%s5 + $0x248] sm:$0xff]
      %v1940 = vld [vmem:[%s5 + $0x250] sm:$0xff]
      %v1941 = vld [vmem:[%s5 + $0x258] sm:$0xff]
      %v1942 = vld [vmem:[%s5 + $0x260] sm:$0xff]
      %v1943 = vld [vmem:[%s5 + $0x268] sm:$0xff]
      %v1944 = vld [vmem:[%s5 + $0x270] sm:$0xff]
      %v1945 = vld [vmem:[%s5 + $0x278] sm:$0xff]
      %v1946 = vld [vmem:[%s5 + $0x280] sm:$0xff]
      %v1947 = vld [vmem:[%s5 + $0x288] sm:$0xff]
      %v1948 = vld [vmem:[%s5 + $0x290] sm:$0xff]
      %v1949 = vld [vmem:[%s5 + $0x298] sm:$0xff]
      %v1950 = vld [vmem:[%s5 + $0x2a0] sm:$0xff]
      %v1951 = vld [vmem:[%s5 + $0x2a8] sm:$0xff]
      %v1952 = vld [vmem:[%s5 + $0x2b0] sm:$0xff]
      %v1953 = vld [vmem:[%s5 + $0x2b8] sm:$0xff]
      %v1954 = vld [vmem:[%s5 + $0x2c0] sm:$0xff]
      %v1955 = vld [vmem:[%s5 + $0x2c8] sm:$0xff]
      %v1956 = vld [vmem:[%s5 + $0x2d0] sm:$0xff]
      %v1957 = vld [vmem:[%s5 + $0x2d8] sm:$0xff]
      %v1958 = vld [vmem:[%s5 + $0x2e0] sm:$0xff]
      %v1959 = vld [vmem:[%s5 + $0x2e8] sm:$0xff]
      %v1960 = vld [vmem:[%s5 + $0x2f0] sm:$0xff]
      %v1961 = vld [vmem:[%s5 + $0x2f8] sm:$0xff]
      %v1963 = vshrl.u32 %v1929, 16
      %v1965 = vshll.u32 %v1929, 16
      %v1967 = vrot.slane %v1965, 1
      %v1968 = vor.u32 %v1963, %v1967
      %v2002 = vunpack.c.l.b16 %v1930
      %v2003 = vunpack.c.h.b16 %v1930
      %v2004 = vunpack.c.l.b16 %v1931
      %v2005 = vunpack.c.h.b16 %v1931
      %v2006 = vunpack.c.l.b16 %v1932
      %v2007 = vunpack.c.h.b16 %v1932
      %v2008 = vunpack.c.l.b16 %v1933
      %v2009 = vunpack.c.h.b16 %v1933
      %v2010 = vunpack.c.l.b16 %v1934
      %v2011 = vunpack.c.h.b16 %v1934
      %v2012 = vunpack.c.l.b16 %v1935
      %v2013 = vunpack.c.h.b16 %v1935
      %v2014 = vunpack.c.l.b16 %v1936
      %v2015 = vunpack.c.h.b16 %v1936
      %v2016 = vunpack.c.l.b16 %v1937
      %v2017 = vunpack.c.h.b16 %v1937
      %v2018 = vunpack.c.l.b16 %v1938
      %v2019 = vunpack.c.h.b16 %v1938
      %v2020 = vunpack.c.l.b16 %v1939
      %v2021 = vunpack.c.h.b16 %v1939
      %v2022 = vunpack.c.l.b16 %v1940
      %v2023 = vunpack.c.h.b16 %v1940
      %v2024 = vunpack.c.l.b16 %v1941
      %v2025 = vunpack.c.h.b16 %v1941
      %v2026 = vunpack.c.l.b16 %v1942
      %v2027 = vunpack.c.h.b16 %v1942
      %v2028 = vunpack.c.l.b16 %v1943
      %v2029 = vunpack.c.h.b16 %v1943
      %v2030 = vunpack.c.l.b16 %v1944
      %v2031 = vunpack.c.h.b16 %v1944
      %v2032 = vunpack.c.l.b16 %v1945
      %v2033 = vunpack.c.h.b16 %v1945
      %v2034 = vunpack.c.l.b16 %v1946
      %v2035 = vunpack.c.h.b16 %v1946
      %v2036 = vunpack.c.l.b16 %v1947
      %v2037 = vunpack.c.h.b16 %v1947
      %v2038 = vunpack.c.l.b16 %v1948
      %v2039 = vunpack.c.h.b16 %v1948
      %v2040 = vunpack.c.l.b16 %v1949
      %v2041 = vunpack.c.h.b16 %v1949
      %v2042 = vunpack.c.l.b16 %v1950
      %v2043 = vunpack.c.h.b16 %v1950
      %v2044 = vunpack.c.l.b16 %v1951
      %v2045 = vunpack.c.h.b16 %v1951
      %v2046 = vunpack.c.l.b16 %v1952
      %v2047 = vunpack.c.h.b16 %v1952
      %v2048 = vunpack.c.l.b16 %v1953
      %v2049 = vunpack.c.h.b16 %v1953
      %v2050 = vunpack.c.l.b16 %v1954
      %v2051 = vunpack.c.h.b16 %v1954
      %v2052 = vunpack.c.l.b16 %v1955
      %v2053 = vunpack.c.h.b16 %v1955
      %v2054 = vunpack.c.l.b16 %v1956
      %v2055 = vunpack.c.h.b16 %v1956
      %v2056 = vunpack.c.l.b16 %v1957
      %v2057 = vunpack.c.h.b16 %v1957
      %v2058 = vunpack.c.l.b16 %v1958
      %v2059 = vunpack.c.h.b16 %v1958
      %v2060 = vunpack.c.l.b16 %v1959
      %v2061 = vunpack.c.h.b16 %v1959
      %v2062 = vunpack.c.l.b16 %v1960
      %v2063 = vunpack.c.h.b16 %v1960
      %v2064 = vunpack.c.l.b16 %v1961
      %v2065 = vunpack.c.h.b16 %v1961
      %v2066 = vpack.c.b16 %v2006, %v2002
      %v2067 = vpack.c.b16 %v2007, %v2003
      %v2068 = vpack.c.b16 %v2008, %v2004
      %v2069 = vpack.c.b16 %v2009, %v2005
      %v2070 = vpack.c.b16 %v2014, %v2010
      %v2071 = vpack.c.b16 %v2015, %v2011
      %v2072 = vpack.c.b16 %v2016, %v2012
      %v2073 = vpack.c.b16 %v2017, %v2013
      %v2074 = vpack.c.b16 %v2022, %v2018
      %v2075 = vpack.c.b16 %v2023, %v2019
      %v2076 = vpack.c.b16 %v2024, %v2020
      %v2077 = vpack.c.b16 %v2025, %v2021
      %v2078 = vpack.c.b16 %v2030, %v2026
      %v2079 = vpack.c.b16 %v2031, %v2027
      %v2080 = vpack.c.b16 %v2032, %v2028
      %v2081 = vpack.c.b16 %v2033, %v2029
      %v2082 = vpack.c.b16 %v2038, %v2034
      %v2083 = vpack.c.b16 %v2039, %v2035
      %v2084 = vpack.c.b16 %v2040, %v2036
      %v2085 = vpack.c.b16 %v2041, %v2037
      %v2086 = vpack.c.b16 %v2046, %v2042
      %v2087 = vpack.c.b16 %v2047, %v2043
      %v2088 = vpack.c.b16 %v2048, %v2044
      %v2089 = vpack.c.b16 %v2049, %v2045
      %v2090 = vpack.c.b16 %v2054, %v2050
      %v2091 = vpack.c.b16 %v2055, %v2051
      %v2092 = vpack.c.b16 %v2056, %v2052
      %v2093 = vpack.c.b16 %v2057, %v2053
      %v2094 = vpack.c.b16 %v2062, %v2058
      %v2095 = vpack.c.b16 %v2063, %v2059
      %v2096 = vpack.c.b16 %v2064, %v2060
      %v2097 = vpack.c.b16 %v2065, %v2061
      %2130 = vmatprep.subr.bf16.mxu0 %v2067
      %2131 = vmatpush1.bf16.msra.mxu0 %v2066
      %2132 = vmatprep.subr.bf16.mxu0 %v2071
      %2133 = vmatpush1.bf16.msra.mxu0 %v2070
      %2134 = vmatprep.subr.bf16.mxu0 %v2075
      %2135 = vmatpush1.bf16.msra.mxu0 %v2074
      %2136 = vmatprep.subr.bf16.mxu0 %v2079
      %2137 = vmatpush1.bf16.msra.mxu0 %v2078
      %2138 = vmatprep.subr.bf16.mxu0 %v2083
      %2139 = vmatpush1.bf16.msra.mxu0 %v2082
      %2140 = vmatprep.subr.bf16.mxu0 %v2087
      %2141 = vmatpush1.bf16.msra.mxu0 %v2086
      %2142 = vmatprep.subr.bf16.mxu0 %v2091
      %2143 = vmatpush1.bf16.msra.mxu0 %v2090
      %2144 = vmatprep.subr.bf16.mxu0 %v2095
      %2145 = vmatpush1.bf16.msra.mxu0 %v2094
      %2146 = vmatprep.subr.bf16.mxu0 0
      %2147 = vmatpush1.bf16.msra.mxu0 0
      %2148 = vmatprep.subr.bf16.mxu0 0
      %2149 = vmatpush1.bf16.msra.mxu0 0
      %2150 = vmatprep.subr.bf16.mxu0 0
      %2151 = vmatpush1.bf16.msra.mxu0 0
      %2152 = vmatprep.subr.bf16.mxu0 0
      %2153 = vmatpush1.bf16.msra.mxu0 0
      %2154 = vmatprep.subr.bf16.mxu0 0
      %2155 = vmatpush1.bf16.msra.mxu0 0
      %2156 = vmatprep.subr.bf16.mxu0 0
      %2157 = vmatpush1.bf16.msra.mxu0 0
      %2158 = vmatprep.subr.bf16.mxu0 0
      %2159 = vmatpush1.bf16.msra.mxu0 0
      %2160 = vmatprep.subr.bf16.mxu0 0
      %2161 = vmatpush1.bf16.msra.mxu0 0
      %2162 = vmatprep.mubr.bf16.mxu0 0
      %2163 = vmatmul.mubr.bf16.gmra.mrb[0].mxu0 %v1968
      %v2164 = vpop.f32.mrb[0].mxu0
      %v2165 = vadd.f32 0.0, %v2164
      %v2166 = vpop.f32.mrb[0].mxu0
      %v2167 = vadd.f32 0.0, %v2166
      %v2168 = vpop.f32.mrb[0].mxu0
      %v2169 = vpop.f32.mrb[0].mxu0
      %2170 = vdwg.mxu0
      %2171 = vmatprep.subr.bf16.mxu0 %v2069
      %2172 = vmatpush1.bf16.msra.mxu0 %v2068
      %2173 = vmatprep.subr.bf16.mxu0 %v2073
      %2174 = vmatpush1.bf16.msra.mxu0 %v2072
      %2175 = vmatprep.subr.bf16.mxu0 %v2077
      %2176 = vmatpush1.bf16.msra.mxu0 %v2076
      %2177 = vmatprep.subr.bf16.mxu0 %v2081
      %2178 = vmatpush1.bf16.msra.mxu0 %v2080
      %2179 = vmatprep.subr.bf16.mxu0 %v2085
      %2180 = vmatpush1.bf16.msra.mxu0 %v2084
      %2181 = vmatprep.subr.bf16.mxu0 %v2089
      %2182 = vmatpush1.bf16.msra.mxu0 %v2088
      %2183 = vmatprep.subr.bf16.mxu0 %v2093
      %2184 = vmatpush1.bf16.msra.mxu0 %v2092
      %2185 = vmatprep.subr.bf16.mxu0 %v2097
      %2186 = vmatpush1.bf16.msra.mxu0 %v2096
      %2187 = vmatprep.subr.bf16.mxu0 0
      %2188 = vmatpush1.bf16.msra.mxu0 0
      %2189 = vmatprep.subr.bf16.mxu0 0
      %2190 = vmatpush1.bf16.msra.mxu0 0
      %2191 = vmatprep.subr.bf16.mxu0 0
      %2192 = vmatpush1.bf16.msra.mxu0 0
      %2193 = vmatprep.subr.bf16.mxu0 0
      %2194 = vmatpush1.bf16.msra.mxu0 0
      %2195 = vmatprep.subr.bf16.mxu0 0
      %2196 = vmatpush1.bf16.msra.mxu0 0
      %2197 = vmatprep.subr.bf16.mxu0 0
      %2198 = vmatpush1.bf16.msra.mxu0 0
      %2199 = vmatprep.subr.bf16.mxu0 0
      %2200 = vmatpush1.bf16.msra.mxu0 0
      %2201 = vmatprep.subr.bf16.mxu0 0
      %2202 = vmatpush1.bf16.msra.mxu0 0
      %2203 = vmatprep.mubr.bf16.mxu0 0
      %2204 = vmatmul.mubr.bf16.gmra.mrb[0].mxu0 %v1968
      %v2205 = vpop.f32.mrb[0].mxu0
      %v2206 = vadd.f32 0.0, %v2205
      %v2207 = vpop.f32.mrb[0].mxu0
      %v2208 = vadd.f32 0.0, %v2207
      %v2209 = vpop.f32.mrb[0].mxu0
      %v2210 = vpop.f32.mrb[0].mxu0
      %2211 = vdwg.mxu0
      %v2212 = vadd.f32 %v1880, %v2165
      %v2213 = vadd.f32 %v1882, %v2167
      %v2214 = vadd.f32 %v1921, %v2206
      %v2215 = vadd.f32 %v1923, %v2208
      %v2216 = vld [vmem:[%s7] sm:$0xf]
      %v2218 = vlaneseq
      %v2219 = vshrl.u32 %v2218, 7
      %v2220 = vsub.s32 0, %v2219
      %v2221 = vrot.slane %v2216, %v2220
      %v2222 = vlaneseq
      %v2223 = vshrl.u32 %v2222, 7
      %v2224 = vsub.s32 1, %v2223
      %v2225 = vrot.slane %v2216, %v2224
      %v2226 = vlaneseq
      %v2227 = vshrl.u32 %v2226, 7
      %v2228 = vsub.s32 2, %v2227
      %v2229 = vrot.slane %v2216, %v2228
      %v2230 = vlaneseq
      %v2231 = vshrl.u32 %v2230, 7
      %v2232 = vsub.s32 3, %v2231
      %v2233 = vrot.slane %v2216, %v2232
      %v2238 = vadd.f32 %v2212, %v2221
      %v2239 = vadd.f32 %v2213, %v2225
      %v2240 = vadd.f32 %v2214, %v2229
      %v2241 = vadd.f32 %v2215, %v2233
      %v2242 = vld [vmem:[%s6] sm:$0xff]
      %v2243 = vld [vmem:[%s6 + $0x8] sm:$0xff]
      %v2244 = vld [vmem:[%s6 + $0x10] sm:$0xff]
      %v2245 = vld [vmem:[%s6 + $0x18] sm:$0xff]
      %v2246 = vld [vmem:[%s6 + $0x20] sm:$0xff]
      %v2247 = vld [vmem:[%s6 + $0x28] sm:$0xff]
      %v2248 = vld [vmem:[%s6 + $0x30] sm:$0xff]
      %v2249 = vld [vmem:[%s6 + $0x38] sm:$0xff]
      %v2250 = vld [vmem:[%s6 + $0x40] sm:$0xff]
      %v2251 = vld [vmem:[%s6 + $0x48] sm:$0xff]
      %v2252 = vld [vmem:[%s6 + $0x50] sm:$0xff]
      %v2253 = vld [vmem:[%s6 + $0x58] sm:$0xff]
      %v2254 = vld [vmem:[%s6 + $0x60] sm:$0xff]
      %v2255 = vld [vmem:[%s6 + $0x68] sm:$0xff]
      %v2256 = vld [vmem:[%s6 + $0x70] sm:$0xff]
      %v2257 = vld [vmem:[%s6 + $0x78] sm:$0xff]
      %v2258 = vld [vmem:[%s6 + $0x80] sm:$0xff]
      %v2259 = vld [vmem:[%s6 + $0x88] sm:$0xff]
      %v2260 = vld [vmem:[%s6 + $0x90] sm:$0xff]
      %v2261 = vld [vmem:[%s6 + $0x98] sm:$0xff]
      %v2262 = vld [vmem:[%s6 + $0xa0] sm:$0xff]
      %v2263 = vld [vmem:[%s6 + $0xa8] sm:$0xff]
      %v2264 = vld [vmem:[%s6 + $0xb0] sm:$0xff]
      %v2265 = vld [vmem:[%s6 + $0xb8] sm:$0xff]
      %v2266 = vld [vmem:[%s6 + $0xc0] sm:$0xff]
      %v2267 = vld [vmem:[%s6 + $0xc8] sm:$0xff]
      %v2268 = vld [vmem:[%s6 + $0xd0] sm:$0xff]
      %v2269 = vld [vmem:[%s6 + $0xd8] sm:$0xff]
      %v2270 = vld [vmem:[%s6 + $0xe0] sm:$0xff]
      %v2271 = vld [vmem:[%s6 + $0xe8] sm:$0xff]
      %v2272 = vld [vmem:[%s6 + $0xf0] sm:$0xff]
      %v2273 = vld [vmem:[%s6 + $0xf8] sm:$0xff]
      %v2274 = vld [vmem:[%s8] sm:$0xf]
      %v2276 = vlaneseq
      %v2277 = vshrl.u32 %v2276, 7
      %v2278 = vsub.s32 0, %v2277
      %v2279 = vrot.slane %v2274, %v2278
      %v2280 = vlaneseq
      %v2281 = vshrl.u32 %v2280, 7
      %v2282 = vsub.s32 1, %v2281
      %v2283 = vrot.slane %v2274, %v2282
      %v2284 = vlaneseq
      %v2285 = vshrl.u32 %v2284, 7
      %v2286 = vsub.s32 2, %v2285
      %v2287 = vrot.slane %v2274, %v2286
      %v2288 = vlaneseq
      %v2289 = vshrl.u32 %v2288, 7
      %v2290 = vsub.s32 3, %v2289
      %v2291 = vrot.slane %v2274, %v2290
      %v2328 = vunpack.c.l.b16 %v2242
      %v2329 = vunpack.c.h.b16 %v2242
      %v2330 = vunpack.c.l.b16 %v2243
      %v2331 = vunpack.c.h.b16 %v2243
      %v2332 = vunpack.c.l.b16 %v2244
      %v2333 = vunpack.c.h.b16 %v2244
      %v2334 = vunpack.c.l.b16 %v2245
      %v2335 = vunpack.c.h.b16 %v2245
      %v2336 = vunpack.c.l.b16 %v2246
      %v2337 = vunpack.c.h.b16 %v2246
      %v2338 = vunpack.c.l.b16 %v2247
      %v2339 = vunpack.c.h.b16 %v2247
      %v2340 = vunpack.c.l.b16 %v2248
      %v2341 = vunpack.c.h.b16 %v2248
      %v2342 = vunpack.c.l.b16 %v2249
      %v2343 = vunpack.c.h.b16 %v2249
      %v2344 = vunpack.c.l.b16 %v2250
      %v2345 = vunpack.c.h.b16 %v2250
      %v2346 = vunpack.c.l.b16 %v2251
      %v2347 = vunpack.c.h.b16 %v2251
      %v2348 = vunpack.c.l.b16 %v2252
      %v2349 = vunpack.c.h.b16 %v2252
      %v2350 = vunpack.c.l.b16 %v2253
      %v2351 = vunpack.c.h.b16 %v2253
      %v2352 = vunpack.c.l.b16 %v2254
      %v2353 = vunpack.c.h.b16 %v2254
      %v2354 = vunpack.c.l.b16 %v2255
      %v2355 = vunpack.c.h.b16 %v2255
      %v2356 = vunpack.c.l.b16 %v2256
      %v2357 = vunpack.c.h.b16 %v2256
      %v2358 = vunpack.c.l.b16 %v2257
      %v2359 = vunpack.c.h.b16 %v2257
      %v2360 = vunpack.c.l.b16 %v2258
      %v2361 = vunpack.c.h.b16 %v2258
      %v2362 = vunpack.c.l.b16 %v2259
      %v2363 = vunpack.c.h.b16 %v2259
      %v2364 = vunpack.c.l.b16 %v2260
      %v2365 = vunpack.c.h.b16 %v2260
      %v2366 = vunpack.c.l.b16 %v2261
      %v2367 = vunpack.c.h.b16 %v2261
      %v2368 = vunpack.c.l.b16 %v2262
      %v2369 = vunpack.c.h.b16 %v2262
      %v2370 = vunpack.c.l.b16 %v2263
      %v2371 = vunpack.c.h.b16 %v2263
      %v2372 = vunpack.c.l.b16 %v2264
      %v2373 = vunpack.c.h.b16 %v2264
      %v2374 = vunpack.c.l.b16 %v2265
      %v2375 = vunpack.c.h.b16 %v2265
      %v2376 = vunpack.c.l.b16 %v2266
      %v2377 = vunpack.c.h.b16 %v2266
      %v2378 = vunpack.c.l.b16 %v2267
      %v2379 = vunpack.c.h.b16 %v2267
      %v2380 = vunpack.c.l.b16 %v2268
      %v2381 = vunpack.c.h.b16 %v2268
      %v2382 = vunpack.c.l.b16 %v2269
      %v2383 = vunpack.c.h.b16 %v2269
      %v2384 = vunpack.c.l.b16 %v2270
      %v2385 = vunpack.c.h.b16 %v2270
      %v2386 = vunpack.c.l.b16 %v2271
      %v2387 = vunpack.c.h.b16 %v2271
      %v2388 = vunpack.c.l.b16 %v2272
      %v2389 = vunpack.c.h.b16 %v2272
      %v2390 = vunpack.c.l.b16 %v2273
      %v2391 = vunpack.c.h.b16 %v2273
      %v2392 = vpack.c.b16 %v2332, %v2328
      %v2393 = vpack.c.b16 %v2333, %v2329
      %v2394 = vpack.c.b16 %v2334, %v2330
      %v2395 = vpack.c.b16 %v2335, %v2331
      %v2396 = vpack.c.b16 %v2340, %v2336
      %v2397 = vpack.c.b16 %v2341, %v2337
      %v2398 = vpack.c.b16 %v2342, %v2338
      %v2399 = vpack.c.b16 %v2343, %v2339
      %v2400 = vpack.c.b16 %v2348, %v2344
      %v2401 = vpack.c.b16 %v2349, %v2345
      %v2402 = vpack.c.b16 %v2350, %v2346
      %v2403 = vpack.c.b16 %v2351, %v2347
      %v2404 = vpack.c.b16 %v2356, %v2352
      %v2405 = vpack.c.b16 %v2357, %v2353
      %v2406 = vpack.c.b16 %v2358, %v2354
      %v2407 = vpack.c.b16 %v2359, %v2355
      %v2408 = vpack.c.b16 %v2364, %v2360
      %v2409 = vpack.c.b16 %v2365, %v2361
      %v2410 = vpack.c.b16 %v2366, %v2362
      %v2411 = vpack.c.b16 %v2367, %v2363
      %v2412 = vpack.c.b16 %v2372, %v2368
      %v2413 = vpack.c.b16 %v2373, %v2369
      %v2414 = vpack.c.b16 %v2374, %v2370
      %v2415 = vpack.c.b16 %v2375, %v2371
      %v2416 = vpack.c.b16 %v2380, %v2376
      %v2417 = vpack.c.b16 %v2381, %v2377
      %v2418 = vpack.c.b16 %v2382, %v2378
      %v2419 = vpack.c.b16 %v2383, %v2379
      %v2420 = vpack.c.b16 %v2388, %v2384
      %v2421 = vpack.c.b16 %v2389, %v2385
      %v2422 = vpack.c.b16 %v2390, %v2386
      %v2423 = vpack.c.b16 %v2391, %v2387
      %2456 = vmatprep.subr.bf16.mxu0 %v2393
      %2457 = vmatpush1.bf16.msra.mxu0 %v2392
      %2458 = vmatprep.subr.bf16.mxu0 %v2397
      %2459 = vmatpush1.bf16.msra.mxu0 %v2396
      %2460 = vmatprep.subr.bf16.mxu0 %v2401
      %2461 = vmatpush1.bf16.msra.mxu0 %v2400
      %2462 = vmatprep.subr.bf16.mxu0 %v2405
      %2463 = vmatpush1.bf16.msra.mxu0 %v2404
      %2464 = vmatprep.subr.bf16.mxu0 %v2409
      %2465 = vmatpush1.bf16.msra.mxu0 %v2408
      %2466 = vmatprep.subr.bf16.mxu0 %v2413
      %2467 = vmatpush1.bf16.msra.mxu0 %v2412
      %2468 = vmatprep.subr.bf16.mxu0 %v2417
      %2469 = vmatpush1.bf16.msra.mxu0 %v2416
      %2470 = vmatprep.subr.bf16.mxu0 %v2421
      %2471 = vmatpush1.bf16.msra.mxu0 %v2420
      %2472 = vmatprep.subr.bf16.mxu0 0
      %2473 = vmatpush1.bf16.msra.mxu0 0
      %2474 = vmatprep.subr.bf16.mxu0 0
      %2475 = vmatpush1.bf16.msra.mxu0 0
      %2476 = vmatprep.subr.bf16.mxu0 0
      %2477 = vmatpush1.bf16.msra.mxu0 0
      %2478 = vmatprep.subr.bf16.mxu0 0
      %2479 = vmatpush1.bf16.msra.mxu0 0
      %2480 = vmatprep.subr.bf16.mxu0 0
      %2481 = vmatpush1.bf16.msra.mxu0 0
      %2482 = vmatprep.subr.bf16.mxu0 0
      %2483 = vmatpush1.bf16.msra.mxu0 0
      %2484 = vmatprep.subr.bf16.mxu0 0
      %2485 = vmatpush1.bf16.msra.mxu0 0
      %2486 = vmatprep.subr.bf16.mxu0 0
      %2487 = vmatpush1.bf16.msra.mxu0 0
      %2488 = vmatprep.mubr.bf16.mxu0 0
      %2489 = vmatmul.mubr.bf16.gmra.mrb[0].mxu0 %v1401
      %v2490 = vpop.f32.mrb[0].mxu0
      %v2491 = vadd.f32 %v2279, %v2490
      %v2492 = vpop.f32.mrb[0].mxu0
      %v2493 = vadd.f32 %v2283, %v2492
      %v2494 = vpop.f32.mrb[0].mxu0
      %v2495 = vpop.f32.mrb[0].mxu0
      %2496 = vdwg.mxu0
      %2497 = vmatprep.subr.bf16.mxu0 %v2395
      %2498 = vmatpush1.bf16.msra.mxu0 %v2394
      %2499 = vmatprep.subr.bf16.mxu0 %v2399
      %2500 = vmatpush1.bf16.msra.mxu0 %v2398
      %2501 = vmatprep.subr.bf16.mxu0 %v2403
      %2502 = vmatpush1.bf16.msra.mxu0 %v2402
      %2503 = vmatprep.subr.bf16.mxu0 %v2407
      %2504 = vmatpush1.bf16.msra.mxu0 %v2406
      %2505 = vmatprep.subr.bf16.mxu0 %v2411
      %2506 = vmatpush1.bf16.msra.mxu0 %v2410
      %2507 = vmatprep.subr.bf16.mxu0 %v2415
      %2508 = vmatpush1.bf16.msra.mxu0 %v2414
      %2509 = vmatprep.subr.bf16.mxu0 %v2419
      %2510 = vmatpush1.bf16.msra.mxu0 %v2418
      %2511 = vmatprep.subr.bf16.mxu0 %v2423
      %2512 = vmatpush1.bf16.msra.mxu0 %v2422
      %2513 = vmatprep.subr.bf16.mxu0 0
      %2514 = vmatpush1.bf16.msra.mxu0 0
      %2515 = vmatprep.subr.bf16.mxu0 0
      %2516 = vmatpush1.bf16.msra.mxu0 0
      %2517 = vmatprep.subr.bf16.mxu0 0
      %2518 = vmatpush1.bf16.msra.mxu0 0
      %2519 = vmatprep.subr.bf16.mxu0 0
      %2520 = vmatpush1.bf16.msra.mxu0 0
      %2521 = vmatprep.subr.bf16.mxu0 0
      %2522 = vmatpush1.bf16.msra.mxu0 0
      %2523 = vmatprep.subr.bf16.mxu0 0
      %2524 = vmatpush1.bf16.msra.mxu0 0
      %2525 = vmatprep.subr.bf16.mxu0 0
      %2526 = vmatpush1.bf16.msra.mxu0 0
      %2527 = vmatprep.subr.bf16.mxu0 0
      %2528 = vmatpush1.bf16.msra.mxu0 0
      %2529 = vmatprep.mubr.bf16.mxu0 0
      %2530 = vmatmul.mubr.bf16.gmra.mrb[0].mxu0 %v1401
      %v2531 = vpop.f32.mrb[0].mxu0
      %v2532 = vadd.f32 %v2287, %v2531
      %v2533 = vpop.f32.mrb[0].mxu0
      %v2534 = vadd.f32 %v2291, %v2533
      %v2535 = vpop.f32.mrb[0].mxu0
      %v2536 = vpop.f32.mrb[0].mxu0
      %2537 = vdwg.mxu0
      %vm2538 = vcmp.ge.f32.partialorder %v2238, 0.0
      %vm2539 = vcmp.ge.f32.partialorder %v2239, 0.0
      %vm2540 = vcmp.ge.f32.partialorder %v2240, 0.0
      %vm2541 = vcmp.ge.f32.partialorder %v2241, 0.0
      %v2542 = vmul.f32 %v2238, 0.25
      %v2543 = vmul.f32 %v2239, 0.25
      %v2544 = vmul.f32 %v2240, 0.25
      %v2545 = vmul.f32 %v2241, 0.25
      %v2546 = vsel %vm2538, %v2238, %v2542
      %v2547 = vsel %vm2539, %v2239, %v2543
      %v2548 = vsel %vm2540, %v2240, %v2544
      %v2549 = vsel %vm2541, %v2241, %v2545
      %v2550 = vmul.f32 %v2546, 0.5
      %v2551 = vmul.f32 %v2547, 0.5
      %v2552 = vmul.f32 %v2548, 0.5
      %v2553 = vmul.f32 %v2549, 0.5
      %v2554 = vmul.f32 %v2491, 0.5
      %v2555 = vmul.f32 %v2493, 0.5
      %v2556 = vmul.f32 %v2532, 0.5
      %v2557 = vmul.f32 %v2534, 0.5
      %v2558 = vadd.f32 %v2550, %v2554
      %v2559 = vadd.f32 %v2551, %v2555
      %v2560 = vadd.f32 %v2552, %v2556
      %v2561 = vadd.f32 %v2553, %v2557
      %2562 = vst [vmem:[#allocation2 + $0x20] sm:$0xff] %v2558
      %2563 = vst [vmem:[#allocation2 + $0x28] sm:$0xff] %v2559
      %2564 = vst [vmem:[#allocation2 + $0x30] sm:$0xff] %v2560
      %2565 = vst [vmem:[#allocation2 + $0x38] sm:$0xff] %v2561
      %v2566 = vld [vmem:[#allocation2] sm:$0x80]
      %v2567 = vld [vmem:[#allocation2 + $0x8] sm:$0x80]
      %v2568 = vld [vmem:[#allocation2 + $0x10] sm:$0x80]
      %v2569 = vld [vmem:[#allocation2 + $0x18] sm:$0x80]
      %v2570 = vld [vmem:[#allocation2 + $0x20] sm:$0x7f]
      %v2571 = vld [vmem:[#allocation2 + $0x28] sm:$0x7f]
      %v2572 = vld [vmem:[#allocation2 + $0x30] sm:$0x7f]
      %v2573 = vld [vmem:[#allocation2 + $0x38] sm:$0x7f]
      %v2574 = vpack.c.bf16 %v2570, %v2566
      %v2575 = vpack.c.bf16 %v2571, %v2567
      %v2576 = vpack.c.bf16 %v2572, %v2568
      %v2577 = vpack.c.bf16 %v2573, %v2569
      %v2578 = vld [vmem:[%s9] sm:$0xff]
      %v2579 = vld [vmem:[%s9 + $0x8] sm:$0xff]
      %v2580 = vld [vmem:[%s9 + $0x10] sm:$0xff]
      %v2581 = vld [vmem:[%s9 + $0x18] sm:$0xff]
      %v2582 = vld [vmem:[%s9 + $0x20] sm:$0xff]
      %v2583 = vld [vmem:[%s9 + $0x28] sm:$0xff]
      %v2584 = vld [vmem:[%s9 + $0x30] sm:$0xff]
      %v2585 = vld [vmem:[%s9 + $0x38] sm:$0xff]
      %v2586 = vld [vmem:[%s9 + $0x40] sm:$0xff]
      %v2587 = vld [vmem:[%s9 + $0x48] sm:$0xff]
      %v2588 = vld [vmem:[%s9 + $0x50] sm:$0xff]
      %v2589 = vld [vmem:[%s9 + $0x58] sm:$0xff]
      %v2590 = vld [vmem:[%s9 + $0x60] sm:$0xff]
      %v2591 = vld [vmem:[%s9 + $0x68] sm:$0xff]
      %v2592 = vld [vmem:[%s9 + $0x70] sm:$0xff]
      %v2593 = vld [vmem:[%s9 + $0x78] sm:$0xff]
      %v2594 = vld [vmem:[%s9 + $0x80] sm:$0xff]
      %v2595 = vld [vmem:[%s9 + $0x88] sm:$0xff]
      %v2596 = vld [vmem:[%s9 + $0x90] sm:$0xff]
      %v2597 = vld [vmem:[%s9 + $0x98] sm:$0xff]
      %v2598 = vld [vmem:[%s9 + $0xa0] sm:$0xff]
      %v2599 = vld [vmem:[%s9 + $0xa8] sm:$0xff]
      %v2600 = vld [vmem:[%s9 + $0xb0] sm:$0xff]
      %v2601 = vld [vmem:[%s9 + $0xb8] sm:$0xff]
      %v2602 = vld [vmem:[%s9 + $0xc0] sm:$0xff]
      %v2603 = vld [vmem:[%s9 + $0xc8] sm:$0xff]
      %v2604 = vld [vmem:[%s9 + $0xd0] sm:$0xff]
      %v2605 = vld [vmem:[%s9 + $0xd8] sm:$0xff]
      %v2606 = vld [vmem:[%s9 + $0xe0] sm:$0xff]
      %v2607 = vld [vmem:[%s9 + $0xe8] sm:$0xff]
      %v2608 = vld [vmem:[%s9 + $0xf0] sm:$0xff]
      %v2609 = vld [vmem:[%s9 + $0xf8] sm:$0xff]
      %v2610 = vld [vmem:[%s9 + $0x100] sm:$0xff]
      %v2611 = vld [vmem:[%s9 + $0x108] sm:$0xff]
      %v2612 = vld [vmem:[%s9 + $0x110] sm:$0xff]
      %v2613 = vld [vmem:[%s9 + $0x118] sm:$0xff]
      %v2614 = vld [vmem:[%s9 + $0x120] sm:$0xff]
      %v2615 = vld [vmem:[%s9 + $0x128] sm:$0xff]
      %v2616 = vld [vmem:[%s9 + $0x130] sm:$0xff]
      %v2617 = vld [vmem:[%s9 + $0x138] sm:$0xff]
      %v2618 = vld [vmem:[%s9 + $0x140] sm:$0xff]
      %v2619 = vld [vmem:[%s9 + $0x148] sm:$0xff]
      %v2620 = vld [vmem:[%s9 + $0x150] sm:$0xff]
      %v2621 = vld [vmem:[%s9 + $0x158] sm:$0xff]
      %v2622 = vld [vmem:[%s9 + $0x160] sm:$0xff]
      %v2623 = vld [vmem:[%s9 + $0x168] sm:$0xff]
      %v2624 = vld [vmem:[%s9 + $0x170] sm:$0xff]
      %v2625 = vld [vmem:[%s9 + $0x178] sm:$0xff]
      %v2626 = vld [vmem:[%s9 + $0x180] sm:$0xff]
      %v2627 = vld [vmem:[%s9 + $0x188] sm:$0xff]
      %v2628 = vld [vmem:[%s9 + $0x190] sm:$0xff]
      %v2629 = vld [vmem:[%s9 + $0x198] sm:$0xff]
      %v2630 = vld [vmem:[%s9 + $0x1a0] sm:$0xff]
      %v2631 = vld [vmem:[%s9 + $0x1a8] sm:$0xff]
      %v2632 = vld [vmem:[%s9 + $0x1b0] sm:$0xff]
      %v2633 = vld [vmem:[%s9 + $0x1b8] sm:$0xff]
      %v2634 = vld [vmem:[%s9 + $0x1c0] sm:$0xff]
      %v2635 = vld [vmem:[%s9 + $0x1c8] sm:$0xff]
      %v2636 = vld [vmem:[%s9 + $0x1d0] sm:$0xff]
      %v2637 = vld [vmem:[%s9 + $0x1d8] sm:$0xff]
      %v2638 = vld [vmem:[%s9 + $0x1e0] sm:$0xff]
      %v2639 = vld [vmem:[%s9 + $0x1e8] sm:$0xff]
      %v2640 = vld [vmem:[%s9 + $0x1f0] sm:$0xff]
      %v2641 = vld [vmem:[%s9 + $0x1f8] sm:$0xff]
      %v2642 = vld [vmem:[#allocation2 + $0x20] sm:$0xff]
      %v2643 = vld [vmem:[#allocation2 + $0x28] sm:$0xff]
      %v2644 = vld [vmem:[#allocation2 + $0x30] sm:$0xff]
      %v2645 = vld [vmem:[#allocation2 + $0x38] sm:$0xff]
      %v2646 = vpack.c.bf16 %v2642, %v2642
      %v2647 = vpack.c.bf16 %v2643, %v2643
      %v2648 = vpack.c.bf16 %v2644, %v2644
      %v2649 = vpack.c.bf16 %v2645, %v2645
      %v2650 = vld [vmem:[%s9 + $0x200] sm:$0xff]
      %v2651 = vld [vmem:[%s9 + $0x208] sm:$0xff]
      %v2652 = vld [vmem:[%s9 + $0x210] sm:$0xff]
      %v2653 = vld [vmem:[%s9 + $0x218] sm:$0xff]
      %v2654 = vld [vmem:[%s9 + $0x220] sm:$0xff]
      %v2655 = vld [vmem:[%s9 + $0x228] sm:$0xff]
      %v2656 = vld [vmem:[%s9 + $0x230] sm:$0xff]
      %v2657 = vld [vmem:[%s9 + $0x238] sm:$0xff]
      %v2658 = vld [vmem:[%s9 + $0x240] sm:$0xff]
      %v2659 = vld [vmem:[%s9 + $0x248] sm:$0xff]
      %v2660 = vld [vmem:[%s9 + $0x250] sm:$0xff]
      %v2661 = vld [vmem:[%s9 + $0x258] sm:$0xff]
      %v2662 = vld [vmem:[%s9 + $0x260] sm:$0xff]
      %v2663 = vld [vmem:[%s9 + $0x268] sm:$0xff]
      %v2664 = vld [vmem:[%s9 + $0x270] sm:$0xff]
      %v2665 = vld [vmem:[%s9 + $0x278] sm:$0xff]
      %v2666 = vld [vmem:[%s9 + $0x280] sm:$0xff]
      %v2667 = vld [vmem:[%s9 + $0x288] sm:$0xff]
      %v2668 = vld [vmem:[%s9 + $0x290] sm:$0xff]
      %v2669 = vld [vmem:[%s9 + $0x298] sm:$0xff]
      %v2670 = vld [vmem:[%s9 + $0x2a0] sm:$0xff]
      %v2671 = vld [vmem:[%s9 + $0x2a8] sm:$0xff]
      %v2672 = vld [vmem:[%s9 + $0x2b0] sm:$0xff]
      %v2673 = vld [vmem:[%s9 + $0x2b8] sm:$0xff]
      %v2674 = vld [vmem:[%s9 + $0x2c0] sm:$0xff]
      %v2675 = vld [vmem:[%s9 + $0x2c8] sm:$0xff]
      %v2676 = vld [vmem:[%s9 + $0x2d0] sm:$0xff]
      %v2677 = vld [vmem:[%s9 + $0x2d8] sm:$0xff]
      %v2678 = vld [vmem:[%s9 + $0x2e0] sm:$0xff]
      %v2679 = vld [vmem:[%s9 + $0x2e8] sm:$0xff]
      %v2680 = vld [vmem:[%s9 + $0x2f0] sm:$0xff]
      %v2681 = vld [vmem:[%s9 + $0x2f8] sm:$0xff]
      %v2682 = vld [vmem:[%s9 + $0x300] sm:$0xff]
      %v2683 = vld [vmem:[%s9 + $0x308] sm:$0xff]
      %v2684 = vld [vmem:[%s9 + $0x310] sm:$0xff]
      %v2685 = vld [vmem:[%s9 + $0x318] sm:$0xff]
      %v2686 = vld [vmem:[%s9 + $0x320] sm:$0xff]
      %v2687 = vld [vmem:[%s9 + $0x328] sm:$0xff]
      %v2688 = vld [vmem:[%s9 + $0x330] sm:$0xff]
      %v2689 = vld [vmem:[%s9 + $0x338] sm:$0xff]
      %v2690 = vld [vmem:[%s9 + $0x340] sm:$0xff]
      %v2691 = vld [vmem:[%s9 + $0x348] sm:$0xff]
      %v2692 = vld [vmem:[%s9 + $0x350] sm:$0xff]
      %v2693 = vld [vmem:[%s9 + $0x358] sm:$0xff]
      %v2694 = vld [vmem:[%s9 + $0x360] sm:$0xff]
      %v2695 = vld [vmem:[%s9 + $0x368] sm:$0xff]
      %v2696 = vld [vmem:[%s9 + $0x370] sm:$0xff]
      %v2697 = vld [vmem:[%s9 + $0x378] sm:$0xff]
      %v2698 = vld [vmem:[%s9 + $0x380] sm:$0xff]
      %v2699 = vld [vmem:[%s9 + $0x388] sm:$0xff]
      %v2700 = vld [vmem:[%s9 + $0x390] sm:$0xff]
      %v2701 = vld [vmem:[%s9 + $0x398] sm:$0xff]
      %v2702 = vld [vmem:[%s9 + $0x3a0] sm:$0xff]
      %v2703 = vld [vmem:[%s9 + $0x3a8] sm:$0xff]
      %v2704 = vld [vmem:[%s9 + $0x3b0] sm:$0xff]
      %v2705 = vld [vmem:[%s9 + $0x3b8] sm:$0xff]
      %v2706 = vld [vmem:[%s9 + $0x3c0] sm:$0xff]
      %v2707 = vld [vmem:[%s9 + $0x3c8] sm:$0xff]
      %v2708 = vld [vmem:[%s9 + $0x3d0] sm:$0xff]
      %v2709 = vld [vmem:[%s9 + $0x3d8] sm:$0xff]
      %v2710 = vld [vmem:[%s9 + $0x3e0] sm:$0xff]
      %v2711 = vld [vmem:[%s9 + $0x3e8] sm:$0xff]
      %v2712 = vld [vmem:[%s9 + $0x3f0] sm:$0xff]
      %v2713 = vld [vmem:[%s9 + $0x3f8] sm:$0xff]
      %v2778 = vunpack.c.l.b16 %v2650
      %v2779 = vunpack.c.h.b16 %v2650
      %v2780 = vunpack.c.l.b16 %v2651
      %v2781 = vunpack.c.h.b16 %v2651
      %v2782 = vunpack.c.l.b16 %v2652
      %v2783 = vunpack.c.h.b16 %v2652
      %v2784 = vunpack.c.l.b16 %v2653
      %v2785 = vunpack.c.h.b16 %v2653
      %v2786 = vunpack.c.l.b16 %v2654
      %v2787 = vunpack.c.h.b16 %v2654
      %v2788 = vunpack.c.l.b16 %v2655
      %v2789 = vunpack.c.h.b16 %v2655
      %v2790 = vunpack.c.l.b16 %v2656
      %v2791 = vunpack.c.h.b16 %v2656
      %v2792 = vunpack.c.l.b16 %v2657
      %v2793 = vunpack.c.h.b16 %v2657
      %v2794 = vunpack.c.l.b16 %v2658
      %v2795 = vunpack.c.h.b16 %v2658
      %v2796 = vunpack.c.l.b16 %v2659
      %v2797 = vunpack.c.h.b16 %v2659
      %v2798 = vunpack.c.l.b16 %v2660
      %v2799 = vunpack.c.h.b16 %v2660
      %v2800 = vunpack.c.l.b16 %v2661
      %v2801 = vunpack.c.h.b16 %v2661
      %v2802 = vunpack.c.l.b16 %v2662
      %v2803 = vunpack.c.h.b16 %v2662
      %v2804 = vunpack.c.l.b16 %v2663
      %v2805 = vunpack.c.h.b16 %v2663
      %v2806 = vunpack.c.l.b16 %v2664
      %v2807 = vunpack.c.h.b16 %v2664
      %v2808 = vunpack.c.l.b16 %v2665
      %v2809 = vunpack.c.h.b16 %v2665
      %v2810 = vunpack.c.l.b16 %v2666
      %v2811 = vunpack.c.h.b16 %v2666
      %v2812 = vunpack.c.l.b16 %v2667
      %v2813 = vunpack.c.h.b16 %v2667
      %v2814 = vunpack.c.l.b16 %v2668
      %v2815 = vunpack.c.h.b16 %v2668
      %v2816 = vunpack.c.l.b16 %v2669
      %v2817 = vunpack.c.h.b16 %v2669
      %v2818 = vunpack.c.l.b16 %v2670
      %v2819 = vunpack.c.h.b16 %v2670
      %v2820 = vunpack.c.l.b16 %v2671
      %v2821 = vunpack.c.h.b16 %v2671
      %v2822 = vunpack.c.l.b16 %v2672
      %v2823 = vunpack.c.h.b16 %v2672
      %v2824 = vunpack.c.l.b16 %v2673
      %v2825 = vunpack.c.h.b16 %v2673
      %v2826 = vunpack.c.l.b16 %v2674
      %v2827 = vunpack.c.h.b16 %v2674
      %v2828 = vunpack.c.l.b16 %v2675
      %v2829 = vunpack.c.h.b16 %v2675
      %v2830 = vunpack.c.l.b16 %v2676
      %v2831 = vunpack.c.h.b16 %v2676
      %v2832 = vunpack.c.l.b16 %v2677
      %v2833 = vunpack.c.h.b16 %v2677
      %v2834 = vunpack.c.l.b16 %v2678
      %v2835 = vunpack.c.h.b16 %v2678
      %v2836 = vunpack.c.l.b16 %v2679
      %v2837 = vunpack.c.h.b16 %v2679
      %v2838 = vunpack.c.l.b16 %v2680
      %v2839 = vunpack.c.h.b16 %v2680
      %v2840 = vunpack.c.l.b16 %v2681
      %v2841 = vunpack.c.h.b16 %v2681
      %v2842 = vunpack.c.l.b16 %v2682
      %v2843 = vunpack.c.h.b16 %v2682
      %v2844 = vunpack.c.l.b16 %v2683
      %v2845 = vunpack.c.h.b16 %v2683
      %v2846 = vunpack.c.l.b16 %v2684
      %v2847 = vunpack.c.h.b16 %v2684
      %v2848 = vunpack.c.l.b16 %v2685
      %v2849 = vunpack.c.h.b16 %v2685
      %v2850 = vunpack.c.l.b16 %v2686
      %v2851 = vunpack.c.h.b16 %v2686
      %v2852 = vunpack.c.l.b16 %v2687
      %v2853 = vunpack.c.h.b16 %v2687
      %v2854 = vunpack.c.l.b16 %v2688
      %v2855 = vunpack.c.h.b16 %v2688
      %v2856 = vunpack.c.l.b16 %v2689
      %v2857 = vunpack.c.h.b16 %v2689
      %v2858 = vunpack.c.l.b16 %v2690
      %v2859 = vunpack.c.h.b16 %v2690
      %v2860 = vunpack.c.l.b16 %v2691
      %v2861 = vunpack.c.h.b16 %v2691
      %v2862 = vunpack.c.l.b16 %v2692
      %v2863 = vunpack.c.h.b16 %v2692
      %v2864 = vunpack.c.l.b16 %v2693
      %v2865 = vunpack.c.h.b16 %v2693
      %v2866 = vunpack.c.l.b16 %v2694
      %v2867 = vunpack.c.h.b16 %v2694
      %v2868 = vunpack.c.l.b16 %v2695
      %v2869 = vunpack.c.h.b16 %v2695
      %v2870 = vunpack.c.l.b16 %v2696
      %v2871 = vunpack.c.h.b16 %v2696
      %v2872 = vunpack.c.l.b16 %v2697
      %v2873 = vunpack.c.h.b16 %v2697
      %v2874 = vunpack.c.l.b16 %v2698
      %v2875 = vunpack.c.h.b16 %v2698
      %v2876 = vunpack.c.l.b16 %v2699
      %v2877 = vunpack.c.h.b16 %v2699
      %v2878 = vunpack.c.l.b16 %v2700
      %v2879 = vunpack.c.h.b16 %v2700
      %v2880 = vunpack.c.l.b16 %v2701
      %v2881 = vunpack.c.h.b16 %v2701
      %v2882 = vunpack.c.l.b16 %v2702
      %v2883 = vunpack.c.h.b16 %v2702
      %v2884 = vunpack.c.l.b16 %v2703
      %v2885 = vunpack.c.h.b16 %v2703
      %v2886 = vunpack.c.l.b16 %v2704
      %v2887 = vunpack.c.h.b16 %v2704
      %v2888 = vunpack.c.l.b16 %v2705
      %v2889 = vunpack.c.h.b16 %v2705
      %v2890 = vunpack.c.l.b16 %v2706
      %v2891 = vunpack.c.h.b16 %v2706
      %v2892 = vunpack.c.l.b16 %v2707
      %v2893 = vunpack.c.h.b16 %v2707
      %v2894 = vunpack.c.l.b16 %v2708
      %v2895 = vunpack.c.h.b16 %v2708
      %v2896 = vunpack.c.l.b16 %v2709
      %v2897 = vunpack.c.h.b16 %v2709
      %v2898 = vunpack.c.l.b16 %v2710
      %v2899 = vunpack.c.h.b16 %v2710
      %v2900 = vunpack.c.l.b16 %v2711
      %v2901 = vunpack.c.h.b16 %v2711
      %v2902 = vunpack.c.l.b16 %v2712
      %v2903 = vunpack.c.h.b16 %v2712
      %v2904 = vunpack.c.l.b16 %v2713
      %v2905 = vunpack.c.h.b16 %v2713
      %v2906 = vpack.c.b16 %v2780, %v2778
      %v2907 = vpack.c.b16 %v2781, %v2779
      %v2908 = vpack.c.b16 %v2784, %v2782
      %v2909 = vpack.c.b16 %v2785, %v2783
      %v2910 = vpack.c.b16 %v2788, %v2786
      %v2911 = vpack.c.b16 %v2789, %v2787
      %v2912 = vpack.c.b16 %v2792, %v2790
      %v2913 = vpack.c.b16 %v2793, %v2791
      %v2914 = vpack.c.b16 %v2796, %v2794
      %v2915 = vpack.c.b16 %v2797, %v2795
      %v2916 = vpack.c.b16 %v2800, %v2798
      %v2917 = vpack.c.b16 %v2801, %v2799
      %v2918 = vpack.c.b16 %v2804, %v2802
      %v2919 = vpack.c.b16 %v2805, %v2803
      %v2920 = vpack.c.b16 %v2808, %v2806
      %v2921 = vpack.c.b16 %v2809, %v2807
      %v2922 = vpack.c.b16 %v2812, %v2810
      %v2923 = vpack.c.b16 %v2813, %v2811
      %v2924 = vpack.c.b16 %v2816, %v2814
      %v2925 = vpack.c.b16 %v2817, %v2815
      %v2926 = vpack.c.b16 %v2820, %v2818
      %v2927 = vpack.c.b16 %v2821, %v2819
      %v2928 = vpack.c.b16 %v2824, %v2822
      %v2929 = vpack.c.b16 %v2825, %v2823
      %v2930 = vpack.c.b16 %v2828, %v2826
      %v2931 = vpack.c.b16 %v2829, %v2827
      %v2932 = vpack.c.b16 %v2832, %v2830
      %v2933 = vpack.c.b16 %v2833, %v2831
      %v2934 = vpack.c.b16 %v2836, %v2834
      %v2935 = vpack.c.b16 %v2837, %v2835
      %v2936 = vpack.c.b16 %v2840, %v2838
      %v2937 = vpack.c.b16 %v2841, %v2839
      %v2938 = vpack.c.b16 %v2844, %v2842
      %v2939 = vpack.c.b16 %v2845, %v2843
      %v2940 = vpack.c.b16 %v2848, %v2846
      %v2941 = vpack.c.b16 %v2849, %v2847
      %v2942 = vpack.c.b16 %v2852, %v2850
      %v2943 = vpack.c.b16 %v2853, %v2851
      %v2944 = vpack.c.b16 %v2856, %v2854
      %v2945 = vpack.c.b16 %v2857, %v2855
      %v2946 = vpack.c.b16 %v2860, %v2858
      %v2947 = vpack.c.b16 %v2861, %v2859
      %v2948 = vpack.c.b16 %v2864, %v2862
      %v2949 = vpack.c.b16 %v2865, %v2863
      %v2950 = vpack.c.b16 %v2868, %v2866
      %v2951 = vpack.c.b16 %v2869, %v2867
      %v2952 = vpack.c.b16 %v2872, %v2870
      %v2953 = vpack.c.b16 %v2873, %v2871
      %v2954 = vpack.c.b16 %v2876, %v2874
      %v2955 = vpack.c.b16 %v2877, %v2875
      %v2956 = vpack.c.b16 %v2880, %v2878
      %v2957 = vpack.c.b16 %v2881, %v2879
      %v2958 = vpack.c.b16 %v2884, %v2882
      %v2959 = vpack.c.b16 %v2885, %v2883
      %v2960 = vpack.c.b16 %v2888, %v2886
      %v2961 = vpack.c.b16 %v2889, %v2887
      %v2962 = vpack.c.b16 %v2892, %v2890
      %v2963 = vpack.c.b16 %v2893, %v2891
      %v2964 = vpack.c.b16 %v2896, %v2894
      %v2965 = vpack.c.b16 %v2897, %v2895
      %v2966 = vpack.c.b16 %v2900, %v2898
      %v2967 = vpack.c.b16 %v2901, %v2899
      %v2968 = vpack.c.b16 %v2904, %v2902
      %v2969 = vpack.c.b16 %v2905, %v2903
      %3034 = vmatprep.subr.bf16.mxu0 %v2907
      %3035 = vmatpush1.bf16.msra.mxu0 %v2906
      %3036 = vmatprep.subr.bf16.mxu0 %v2909
      %3037 = vmatpush1.bf16.msra.mxu0 %v2908
      %3038 = vmatprep.subr.bf16.mxu0 %v2911
      %3039 = vmatpush1.bf16.msra.mxu0 %v2910
      %3040 = vmatprep.subr.bf16.mxu0 %v2913
      %3041 = vmatpush1.bf16.msra.mxu0 %v2912
      %3042 = vmatprep.subr.bf16.mxu0 %v2915
      %3043 = vmatpush1.bf16.msra.mxu0 %v2914
      %3044 = vmatprep.subr.bf16.mxu0 %v2917
      %3045 = vmatpush1.bf16.msra.mxu0 %v2916
      %3046 = vmatprep.subr.bf16.mxu0 %v2919
      %3047 = vmatpush1.bf16.msra.mxu0 %v2918
      %3048 = vmatprep.subr.bf16.mxu0 %v2921
      %3049 = vmatpush1.bf16.msra.mxu0 %v2920
      %3050 = vmatprep.subr.bf16.mxu0 %v2923
      %3051 = vmatpush1.bf16.msra.mxu0 %v2922
      %3052 = vmatprep.subr.bf16.mxu0 %v2925
      %3053 = vmatpush1.bf16.msra.mxu0 %v2924
      %3054 = vmatprep.subr.bf16.mxu0 %v2927
      %3055 = vmatpush1.bf16.msra.mxu0 %v2926
      %3056 = vmatprep.subr.bf16.mxu0 %v2929
      %3057 = vmatpush1.bf16.msra.mxu0 %v2928
      %3058 = vmatprep.subr.bf16.mxu0 %v2931
      %3059 = vmatpush1.bf16.msra.mxu0 %v2930
      %3060 = vmatprep.subr.bf16.mxu0 %v2933
      %3061 = vmatpush1.bf16.msra.mxu0 %v2932
      %3062 = vmatprep.subr.bf16.mxu0 %v2935
      %3063 = vmatpush1.bf16.msra.mxu0 %v2934
      %3064 = vmatprep.subr.bf16.mxu0 %v2937
      %3065 = vmatpush1.bf16.msra.mxu0 %v2936
      %3066 = vmatprep.mubr.bf16.mxu0 %v2647
      %3067 = vmatmul.mubr.bf16.gmra.mrb[0].mxu0 %v2646
      %v3068 = vpop.f32.mrb[0].mxu0
      %v3069 = vadd.f32 0.0, %v3068
      %v3070 = vpop.f32.mrb[0].mxu0
      %v3071 = vadd.f32 0.0, %v3070
      %v3072 = vpop.f32.mrb[0].mxu0
      %v3073 = vpop.f32.mrb[0].mxu0
      %3074 = vdwg.mxu0
      %3075 = vmatprep.subr.bf16.mxu0 %v2939
      %3076 = vmatpush1.bf16.msra.mxu0 %v2938
      %3077 = vmatprep.subr.bf16.mxu0 %v2941
      %3078 = vmatpush1.bf16.msra.mxu0 %v2940
      %3079 = vmatprep.subr.bf16.mxu0 %v2943
      %3080 = vmatpush1.bf16.msra.mxu0 %v2942
      %3081 = vmatprep.subr.bf16.mxu0 %v2945
      %3082 = vmatpush1.bf16.msra.mxu0 %v2944
      %3083 = vmatprep.subr.bf16.mxu0 %v2947
      %3084 = vmatpush1.bf16.msra.mxu0 %v2946
      %3085 = vmatprep.subr.bf16.mxu0 %v2949
      %3086 = vmatpush1.bf16.msra.mxu0 %v2948
      %3087 = vmatprep.subr.bf16.mxu0 %v2951
      %3088 = vmatpush1.bf16.msra.mxu0 %v2950
      %3089 = vmatprep.subr.bf16.mxu0 %v2953
      %3090 = vmatpush1.bf16.msra.mxu0 %v2952
      %3091 = vmatprep.subr.bf16.mxu0 %v2955
      %3092 = vmatpush1.bf16.msra.mxu0 %v2954
      %3093 = vmatprep.subr.bf16.mxu0 %v2957
      %3094 = vmatpush1.bf16.msra.mxu0 %v2956
      %3095 = vmatprep.subr.bf16.mxu0 %v2959
      %3096 = vmatpush1.bf16.msra.mxu0 %v2958
      %3097 = vmatprep.subr.bf16.mxu0 %v2961
      %3098 = vmatpush1.bf16.msra.mxu0 %v2960
      %3099 = vmatprep.subr.bf16.mxu0 %v2963
      %3100 = vmatpush1.bf16.msra.mxu0 %v2962
      %3101 = vmatprep.subr.bf16.mxu0 %v2965
      %3102 = vmatpush1.bf16.msra.mxu0 %v2964
      %3103 = vmatprep.subr.bf16.mxu0 %v2967
      %3104 = vmatpush1.bf16.msra.mxu0 %v2966
      %3105 = vmatprep.subr.bf16.mxu0 %v2969
      %3106 = vmatpush1.bf16.msra.mxu0 %v2968
      %3107 = vmatprep.mubr.bf16.mxu0 %v2649
      %3108 = vmatmul.mubr.bf16.gmra.mrb[0].mxu0 %v2648
      %v3109 = vpop.f32.mrb[0].mxu0
      %v3110 = vadd.f32 %v3069, %v3109
      %v3111 = vpop.f32.mrb[0].mxu0
      %v3112 = vadd.f32 %v3071, %v3111
      %v3113 = vpop.f32.mrb[0].mxu0
      %v3114 = vpop.f32.mrb[0].mxu0
      %3115 = vdwg.mxu0
      %v3117 = vshrl.u32 %v2574, 16
      %v3119 = vrot.slane %v3117, 3
      %v3120 = vshll.u32 %v2574, 16
      %v3122 = vrot.slane %v3120, 4
      %v3123 = vor.u32 %v3119, %v3122
      %v3125 = vshrl.u32 %v2575, 16
      %v3127 = vrot.slane %v3125, 3
      %v3128 = vshll.u32 %v2575, 16
      %v3130 = vrot.slane %v3128, 4
      %v3131 = vor.u32 %v3127, %v3130
      %v3133 = vshrl.u32 %v2576, 16
      %v3135 = vrot.slane %v3133, 3
      %v3136 = vshll.u32 %v2576, 16
      %v3138 = vrot.slane %v3136, 4
      %v3139 = vor.u32 %v3135, %v3138
      %v3141 = vshrl.u32 %v2577, 16
      %v3143 = vrot.slane %v3141, 3
      %v3144 = vshll.u32 %v2577, 16
      %v3146 = vrot.slane %v3144, 4
      %v3147 = vor.u32 %v3143, %v3146
      %v3216 = vunpack.c.l.b16 %v2578
      %v3217 = vunpack.c.h.b16 %v2578
      %v3218 = vunpack.c.l.b16 %v2579
      %v3219 = vunpack.c.h.b16 %v2579
      %v3220 = vunpack.c.l.b16 %v2580
      %v3221 = vunpack.c.h.b16 %v2580
      %v3222 = vunpack.c.l.b16 %v2581
      %v3223 = vunpack.c.h.b16 %v2581
      %v3224 = vunpack.c.l.b16 %v2582
      %v3225 = vunpack.c.h.b16 %v2582
      %v3226 = vunpack.c.l.b16 %v2583
      %v3227 = vunpack.c.h.b16 %v2583
      %v3228 = vunpack.c.l.b16 %v2584
      %v3229 = vunpack.c.h.b16 %v2584
      %v3230 = vunpack.c.l.b16 %v2585
      %v3231 = vunpack.c.h.b16 %v2585
      %v3232 = vunpack.c.l.b16 %v2586
      %v3233 = vunpack.c.h.b16 %v2586
      %v3234 = vunpack.c.l.b16 %v2587
      %v3235 = vunpack.c.h.b16 %v2587
      %v3236 = vunpack.c.l.b16 %v2588
      %v3237 = vunpack.c.h.b16 %v2588
      %v3238 = vunpack.c.l.b16 %v2589
      %v3239 = vunpack.c.h.b16 %v2589
      %v3240 = vunpack.c.l.b16 %v2590
      %v3241 = vunpack.c.h.b16 %v2590
      %v3242 = vunpack.c.l.b16 %v2591
      %v3243 = vunpack.c.h.b16 %v2591
      %v3244 = vunpack.c.l.b16 %v2592
      %v3245 = vunpack.c.h.b16 %v2592
      %v3246 = vunpack.c.l.b16 %v2593
      %v3247 = vunpack.c.h.b16 %v2593
      %v3248 = vunpack.c.l.b16 %v2594
      %v3249 = vunpack.c.h.b16 %v2594
      %v3250 = vunpack.c.l.b16 %v2595
      %v3251 = vunpack.c.h.b16 %v2595
      %v3252 = vunpack.c.l.b16 %v2596
      %v3253 = vunpack.c.h.b16 %v2596
      %v3254 = vunpack.c.l.b16 %v2597
      %v3255 = vunpack.c.h.b16 %v2597
      %v3256 = vunpack.c.l.b16 %v2598
      %v3257 = vunpack.c.h.b16 %v2598
      %v3258 = vunpack.c.l.b16 %v2599
      %v3259 = vunpack.c.h.b16 %v2599
      %v3260 = vunpack.c.l.b16 %v2600
      %v3261 = vunpack.c.h.b16 %v2600
      %v3262 = vunpack.c.l.b16 %v2601
      %v3263 = vunpack.c.h.b16 %v2601
      %v3264 = vunpack.c.l.b16 %v2602
      %v3265 = vunpack.c.h.b16 %v2602
      %v3266 = vunpack.c.l.b16 %v2603
      %v3267 = vunpack.c.h.b16 %v2603
      %v3268 = vunpack.c.l.b16 %v2604
      %v3269 = vunpack.c.h.b16 %v2604
      %v3270 = vunpack.c.l.b16 %v2605
      %v3271 = vunpack.c.h.b16 %v2605
      %v3272 = vunpack.c.l.b16 %v2606
      %v3273 = vunpack.c.h.b16 %v2606
      %v3274 = vunpack.c.l.b16 %v2607
      %v3275 = vunpack.c.h.b16 %v2607
      %v3276 = vunpack.c.l.b16 %v2608
      %v3277 = vunpack.c.h.b16 %v2608
      %v3278 = vunpack.c.l.b16 %v2609
      %v3279 = vunpack.c.h.b16 %v2609
      %v3280 = vunpack.c.l.b16 %v2610
      %v3281 = vunpack.c.h.b16 %v2610
      %v3282 = vunpack.c.l.b16 %v2611
      %v3283 = vunpack.c.h.b16 %v2611
      %v3284 = vunpack.c.l.b16 %v2612
      %v3285 = vunpack.c.h.b16 %v2612
      %v3286 = vunpack.c.l.b16 %v2613
      %v3287 = vunpack.c.h.b16 %v2613
      %v3288 = vunpack.c.l.b16 %v2614
      %v3289 = vunpack.c.h.b16 %v2614
      %v3290 = vunpack.c.l.b16 %v2615
      %v3291 = vunpack.c.h.b16 %v2615
      %v3292 = vunpack.c.l.b16 %v2616
      %v3293 = vunpack.c.h.b16 %v2616
      %v3294 = vunpack.c.l.b16 %v2617
      %v3295 = vunpack.c.h.b16 %v2617
      %v3296 = vunpack.c.l.b16 %v2618
      %v3297 = vunpack.c.h.b16 %v2618
      %v3298 = vunpack.c.l.b16 %v2619
      %v3299 = vunpack.c.h.b16 %v2619
      %v3300 = vunpack.c.l.b16 %v2620
      %v3301 = vunpack.c.h.b16 %v2620
      %v3302 = vunpack.c.l.b16 %v2621
      %v3303 = vunpack.c.h.b16 %v2621
      %v3304 = vunpack.c.l.b16 %v2622
      %v3305 = vunpack.c.h.b16 %v2622
      %v3306 = vunpack.c.l.b16 %v2623
      %v3307 = vunpack.c.h.b16 %v2623
      %v3308 = vunpack.c.l.b16 %v2624
      %v3309 = vunpack.c.h.b16 %v2624
      %v3310 = vunpack.c.l.b16 %v2625
      %v3311 = vunpack.c.h.b16 %v2625
      %v3312 = vunpack.c.l.b16 %v2626
      %v3313 = vunpack.c.h.b16 %v2626
      %v3314 = vunpack.c.l.b16 %v2627
      %v3315 = vunpack.c.h.b16 %v2627
      %v3316 = vunpack.c.l.b16 %v2628
      %v3317 = vunpack.c.h.b16 %v2628
      %v3318 = vunpack.c.l.b16 %v2629
      %v3319 = vunpack.c.h.b16 %v2629
      %v3320 = vunpack.c.l.b16 %v2630
      %v3321 = vunpack.c.h.b16 %v2630
      %v3322 = vunpack.c.l.b16 %v2631
      %v3323 = vunpack.c.h.b16 %v2631
      %v3324 = vunpack.c.l.b16 %v2632
      %v3325 = vunpack.c.h.b16 %v2632
      %v3326 = vunpack.c.l.b16 %v2633
      %v3327 = vunpack.c.h.b16 %v2633
      %v3328 = vunpack.c.l.b16 %v2634
      %v3329 = vunpack.c.h.b16 %v2634
      %v3330 = vunpack.c.l.b16 %v2635
      %v3331 = vunpack.c.h.b16 %v2635
      %v3332 = vunpack.c.l.b16 %v2636
      %v3333 = vunpack.c.h.b16 %v2636
      %v3334 = vunpack.c.l.b16 %v2637
      %v3335 = vunpack.c.h.b16 %v2637
      %v3336 = vunpack.c.l.b16 %v2638
      %v3337 = vunpack.c.h.b16 %v2638
      %v3338 = vunpack.c.l.b16 %v2639
      %v3339 = vunpack.c.h.b16 %v2639
      %v3340 = vunpack.c.l.b16 %v2640
      %v3341 = vunpack.c.h.b16 %v2640
      %v3342 = vunpack.c.l.b16 %v2641
      %v3343 = vunpack.c.h.b16 %v2641
      %v3344 = vpack.c.b16 %v3218, %v3216
      %v3345 = vpack.c.b16 %v3219, %v3217
      %v3346 = vpack.c.b16 %v3222, %v3220
      %v3347 = vpack.c.b16 %v3223, %v3221
      %v3348 = vpack.c.b16 %v3226, %v3224
      %v3349 = vpack.c.b16 %v3227, %v3225
      %v3350 = vpack.c.b16 %v3230, %v3228
      %v3351 = vpack.c.b16 %v3231, %v3229
      %v3352 = vpack.c.b16 %v3234, %v3232
      %v3353 = vpack.c.b16 %v3235, %v3233
      %v3354 = vpack.c.b16 %v3238, %v3236
      %v3355 = vpack.c.b16 %v3239, %v3237
      %v3356 = vpack.c.b16 %v3242, %v3240
      %v3357 = vpack.c.b16 %v3243, %v3241
      %v3358 = vpack.c.b16 %v3246, %v3244
      %v3359 = vpack.c.b16 %v3247, %v3245
      %v3360 = vpack.c.b16 %v3250, %v3248
      %v3361 = vpack.c.b16 %v3251, %v3249
      %v3362 = vpack.c.b16 %v3254, %v3252
      %v3363 = vpack.c.b16 %v3255, %v3253
      %v3364 = vpack.c.b16 %v3258, %v3256
      %v3365 = vpack.c.b16 %v3259, %v3257
      %v3366 = vpack.c.b16 %v3262, %v3260
      %v3367 = vpack.c.b16 %v3263, %v3261
      %v3368 = vpack.c.b16 %v3266, %v3264
      %v3369 = vpack.c.b16 %v3267, %v3265
      %v3370 = vpack.c.b16 %v3270, %v3268
      %v3371 = vpack.c.b16 %v3271, %v3269
      %v3372 = vpack.c.b16 %v3274, %v3272
      %v3373 = vpack.c.b16 %v3275, %v3273
      %v3374 = vpack.c.b16 %v3278, %v3276
      %v3375 = vpack.c.b16 %v3279, %v3277
      %v3376 = vpack.c.b16 %v3282, %v3280
      %v3377 = vpack.c.b16 %v3283, %v3281
      %v3378 = vpack.c.b16 %v3286, %v3284
      %v3379 = vpack.c.b16 %v3287, %v3285
      %v3380 = vpack.c.b16 %v3290, %v3288
      %v3381 = vpack.c.b16 %v3291, %v3289
      %v3382 = vpack.c.b16 %v3294, %v3292
      %v3383 = vpack.c.b16 %v3295, %v3293
      %v3384 = vpack.c.b16 %v3298, %v3296
      %v3385 = vpack.c.b16 %v3299, %v3297
      %v3386 = vpack.c.b16 %v3302, %v3300
      %v3387 = vpack.c.b16 %v3303, %v3301
      %v3388 = vpack.c.b16 %v3306, %v3304
      %v3389 = vpack.c.b16 %v3307, %v3305
      %v3390 = vpack.c.b16 %v3310, %v3308
      %v3391 = vpack.c.b16 %v3311, %v3309
      %v3392 = vpack.c.b16 %v3314, %v3312
      %v3393 = vpack.c.b16 %v3315, %v3313
      %v3394 = vpack.c.b16 %v3318, %v3316
      %v3395 = vpack.c.b16 %v3319, %v3317
      %v3396 = vpack.c.b16 %v3322, %v3320
      %v3397 = vpack.c.b16 %v3323, %v3321
      %v3398 = vpack.c.b16 %v3326, %v3324
      %v3399 = vpack.c.b16 %v3327, %v3325
      %v3400 = vpack.c.b16 %v3330, %v3328
      %v3401 = vpack.c.b16 %v3331, %v3329
      %v3402 = vpack.c.b16 %v3334, %v3332
      %v3403 = vpack.c.b16 %v3335, %v3333
      %v3404 = vpack.c.b16 %v3338, %v3336
      %v3405 = vpack.c.b16 %v3339, %v3337
      %v3406 = vpack.c.b16 %v3342, %v3340
      %v3407 = vpack.c.b16 %v3343, %v3341
      %3472 = vmatprep.subr.bf16.mxu0 %v3345
      %3473 = vmatpush1.bf16.msra.mxu0 %v3344
      %3474 = vmatprep.subr.bf16.mxu0 %v3347
      %3475 = vmatpush1.bf16.msra.mxu0 %v3346
      %3476 = vmatprep.subr.bf16.mxu0 %v3349
      %3477 = vmatpush1.bf16.msra.mxu0 %v3348
      %3478 = vmatprep.subr.bf16.mxu0 %v3351
      %3479 = vmatpush1.bf16.msra.mxu0 %v3350
      %3480 = vmatprep.subr.bf16.mxu0 %v3353
      %3481 = vmatpush1.bf16.msra.mxu0 %v3352
      %3482 = vmatprep.subr.bf16.mxu0 %v3355
      %3483 = vmatpush1.bf16.msra.mxu0 %v3354
      %3484 = vmatprep.subr.bf16.mxu0 %v3357
      %3485 = vmatpush1.bf16.msra.mxu0 %v3356
      %3486 = vmatprep.subr.bf16.mxu0 %v3359
      %3487 = vmatpush1.bf16.msra.mxu0 %v3358
      %3488 = vmatprep.subr.bf16.mxu0 %v3361
      %3489 = vmatpush1.bf16.msra.mxu0 %v3360
      %3490 = vmatprep.subr.bf16.mxu0 %v3363
      %3491 = vmatpush1.bf16.msra.mxu0 %v3362
      %3492 = vmatprep.subr.bf16.mxu0 %v3365
      %3493 = vmatpush1.bf16.msra.mxu0 %v3364
      %3494 = vmatprep.subr.bf16.mxu0 %v3367
      %3495 = vmatpush1.bf16.msra.mxu0 %v3366
      %3496 = vmatprep.subr.bf16.mxu0 %v3369
      %3497 = vmatpush1.bf16.msra.mxu0 %v3368
      %3498 = vmatprep.subr.bf16.mxu0 %v3371
      %3499 = vmatpush1.bf16.msra.mxu0 %v3370
      %3500 = vmatprep.subr.bf16.mxu0 %v3373
      %3501 = vmatpush1.bf16.msra.mxu0 %v3372
      %3502 = vmatprep.subr.bf16.mxu0 %v3375
      %3503 = vmatpush1.bf16.msra.mxu0 %v3374
      %3504 = vmatprep.mubr.bf16.mxu0 %v3131
      %3505 = vmatmul.mubr.bf16.gmra.mrb[0].mxu0 %v3123
      %v3506 = vpop.f32.mrb[0].mxu0
      %v3507 = vadd.f32 %v3110, %v3506
      %v3508 = vpop.f32.mrb[0].mxu0
      %v3509 = vadd.f32 %v3112, %v3508
      %v3510 = vpop.f32.mrb[0].mxu0
      %v3511 = vpop.f32.mrb[0].mxu0
      %3512 = vdwg.mxu0
      %3513 = vmatprep.subr.bf16.mxu0 %v3377
      %3514 = vmatpush1.bf16.msra.mxu0 %v3376
      %3515 = vmatprep.subr.bf16.mxu0 %v3379
      %3516 = vmatpush1.bf16.msra.mxu0 %v3378
      %3517 = vmatprep.subr.bf16.mxu0 %v3381
      %3518 = vmatpush1.bf16.msra.mxu0 %v3380
      %3519 = vmatprep.subr.bf16.mxu0 %v3383
      %3520 = vmatpush1.bf16.msra.mxu0 %v3382
      %3521 = vmatprep.subr.bf16.mxu0 %v3385
      %3522 = vmatpush1.bf16.msra.mxu0 %v3384
      %3523 = vmatprep.subr.bf16.mxu0 %v3387
      %3524 = vmatpush1.bf16.msra.mxu0 %v3386
      %3525 = vmatprep.subr.bf16.mxu0 %v3389
      %3526 = vmatpush1.bf16.msra.mxu0 %v3388
      %3527 = vmatprep.subr.bf16.mxu0 %v3391
      %3528 = vmatpush1.bf16.msra.mxu0 %v3390
      %3529 = vmatprep.subr.bf16.mxu0 %v3393
      %3530 = vmatpush1.bf16.msra.mxu0 %v3392
      %3531 = vmatprep.subr.bf16.mxu0 %v3395
      %3532 = vmatpush1.bf16.msra.mxu0 %v3394
      %3533 = vmatprep.subr.bf16.mxu0 %v3397
      %3534 = vmatpush1.bf16.msra.mxu0 %v3396
      %3535 = vmatprep.subr.bf16.mxu0 %v3399
      %3536 = vmatpush1.bf16.msra.mxu0 %v3398
      %3537 = vmatprep.subr.bf16.mxu0 %v3401
      %3538 = vmatpush1.bf16.msra.mxu0 %v3400
      %3539 = vmatprep.subr.bf16.mxu0 %v3403
      %3540 = vmatpush1.bf16.msra.mxu0 %v3402
      %3541 = vmatprep.subr.bf16.mxu0 %v3405
      %3542 = vmatpush1.bf16.msra.mxu0 %v3404
      %3543 = vmatprep.subr.bf16.mxu0 %v3407
      %3544 = vmatpush1.bf16.msra.mxu0 %v3406
      %3545 = vmatprep.mubr.bf16.mxu0 %v3147
      %3546 = vmatmul.mubr.bf16.gmra.mrb[0].mxu0 %v3139
      %v3547 = vpop.f32.mrb[0].mxu0
      %v3548 = vadd.f32 %v3507, %v3547
      %v3549 = vpop.f32.mrb[0].mxu0
      %v3550 = vadd.f32 %v3509, %v3549
      %v3551 = vpop.f32.mrb[0].mxu0
      %v3552 = vpop.f32.mrb[0].mxu0
      %3553 = vdwg.mxu0
      %v3554 = vld [vmem:[#allocation2 + $0x20] sm:$0xfe]
      %v3555 = vld [vmem:[#allocation2 + $0x28] sm:$0xfe]
      %v3556 = vld [vmem:[#allocation2 + $0x30] sm:$0xfe]
      %v3557 = vld [vmem:[#allocation2 + $0x38] sm:$0xfe]
      %v3558 = vld [vmem:[#allocation2 + $0x40] sm:$0x1]
      %v3559 = vld [vmem:[#allocation2 + $0x48] sm:$0x1]
      %v3560 = vld [vmem:[#allocation2 + $0x50] sm:$0x1]
      %v3561 = vld [vmem:[#allocation2 + $0x58] sm:$0x1]
      %v3562 = vpack.c.bf16 %v3558, %v3554
      %v3563 = vpack.c.bf16 %v3559, %v3555
      %v3564 = vpack.c.bf16 %v3560, %v3556
      %v3565 = vpack.c.bf16 %v3561, %v3557
      %v3566 = vld [vmem:[%s9 + $0x400] sm:$0xff]
      %v3567 = vld [vmem:[%s9 + $0x408] sm:$0xff]
      %v3568 = vld [vmem:[%s9 + $0x410] sm:$0xff]
      %v3569 = vld [vmem:[%s9 + $0x418] sm:$0xff]
      %v3570 = vld [vmem:[%s9 + $0x420] sm:$0xff]
      %v3571 = vld [vmem:[%s9 + $0x428] sm:$0xff]
      %v3572 = vld [vmem:[%s9 + $0x430] sm:$0xff]
      %v3573 = vld [vmem:[%s9 + $0x438] sm:$0xff]
      %v3574 = vld [vmem:[%s9 + $0x440] sm:$0xff]
      %v3575 = vld [vmem:[%s9 + $0x448] sm:$0xff]
      %v3576 = vld [vmem:[%s9 + $0x450] sm:$0xff]
      %v3577 = vld [vmem:[%s9 + $0x458] sm:$0xff]
      %v3578 = vld [vmem:[%s9 + $0x460] sm:$0xff]
      %v3579 = vld [vmem:[%s9 + $0x468] sm:$0xff]
      %v3580 = vld [vmem:[%s9 + $0x470] sm:$0xff]
      %v3581 = vld [vmem:[%s9 + $0x478] sm:$0xff]
      %v3582 = vld [vmem:[%s9 + $0x480] sm:$0xff]
      %v3583 = vld [vmem:[%s9 + $0x488] sm:$0xff]
      %v3584 = vld [vmem:[%s9 + $0x490] sm:$0xff]
      %v3585 = vld [vmem:[%s9 + $0x498] sm:$0xff]
      %v3586 = vld [vmem:[%s9 + $0x4a0] sm:$0xff]
      %v3587 = vld [vmem:[%s9 + $0x4a8] sm:$0xff]
      %v3588 = vld [vmem:[%s9 + $0x4b0] sm:$0xff]
      %v3589 = vld [vmem:[%s9 + $0x4b8] sm:$0xff]
      %v3590 = vld [vmem:[%s9 + $0x4c0] sm:$0xff]
      %v3591 = vld [vmem:[%s9 + $0x4c8] sm:$0xff]
      %v3592 = vld [vmem:[%s9 + $0x4d0] sm:$0xff]
      %v3593 = vld [vmem:[%s9 + $0x4d8] sm:$0xff]
      %v3594 = vld [vmem:[%s9 + $0x4e0] sm:$0xff]
      %v3595 = vld [vmem:[%s9 + $0x4e8] sm:$0xff]
      %v3596 = vld [vmem:[%s9 + $0x4f0] sm:$0xff]
      %v3597 = vld [vmem:[%s9 + $0x4f8] sm:$0xff]
      %v3598 = vld [vmem:[%s9 + $0x500] sm:$0xff]
      %v3599 = vld [vmem:[%s9 + $0x508] sm:$0xff]
      %v3600 = vld [vmem:[%s9 + $0x510] sm:$0xff]
      %v3601 = vld [vmem:[%s9 + $0x518] sm:$0xff]
      %v3602 = vld [vmem:[%s9 + $0x520] sm:$0xff]
      %v3603 = vld [vmem:[%s9 + $0x528] sm:$0xff]
      %v3604 = vld [vmem:[%s9 + $0x530] sm:$0xff]
      %v3605 = vld [vmem:[%s9 + $0x538] sm:$0xff]
      %v3606 = vld [vmem:[%s9 + $0x540] sm:$0xff]
      %v3607 = vld [vmem:[%s9 + $0x548] sm:$0xff]
      %v3608 = vld [vmem:[%s9 + $0x550] sm:$0xff]
      %v3609 = vld [vmem:[%s9 + $0x558] sm:$0xff]
      %v3610 = vld [vmem:[%s9 + $0x560] sm:$0xff]
      %v3611 = vld [vmem:[%s9 + $0x568] sm:$0xff]
      %v3612 = vld [vmem:[%s9 + $0x570] sm:$0xff]
      %v3613 = vld [vmem:[%s9 + $0x578] sm:$0xff]
      %v3614 = vld [vmem:[%s9 + $0x580] sm:$0xff]
      %v3615 = vld [vmem:[%s9 + $0x588] sm:$0xff]
      %v3616 = vld [vmem:[%s9 + $0x590] sm:$0xff]
      %v3617 = vld [vmem:[%s9 + $0x598] sm:$0xff]
      %v3618 = vld [vmem:[%s9 + $0x5a0] sm:$0xff]
      %v3619 = vld [vmem:[%s9 + $0x5a8] sm:$0xff]
      %v3620 = vld [vmem:[%s9 + $0x5b0] sm:$0xff]
      %v3621 = vld [vmem:[%s9 + $0x5b8] sm:$0xff]
      %v3622 = vld [vmem:[%s9 + $0x5c0] sm:$0xff]
      %v3623 = vld [vmem:[%s9 + $0x5c8] sm:$0xff]
      %v3624 = vld [vmem:[%s9 + $0x5d0] sm:$0xff]
      %v3625 = vld [vmem:[%s9 + $0x5d8] sm:$0xff]
      %v3626 = vld [vmem:[%s9 + $0x5e0] sm:$0xff]
      %v3627 = vld [vmem:[%s9 + $0x5e8] sm:$0xff]
      %v3628 = vld [vmem:[%s9 + $0x5f0] sm:$0xff]
      %v3629 = vld [vmem:[%s9 + $0x5f8] sm:$0xff]
      %v3631 = vshrl.u32 %v3562, 16
      %v3633 = vshll.u32 %v3562, 16
      %v3635 = vrot.slane %v3633, 1
      %v3636 = vor.u32 %v3631, %v3635
      %v3638 = vshrl.u32 %v3563, 16
      %v3640 = vshll.u32 %v3563, 16
      %v3642 = vrot.slane %v3640, 1
      %v3643 = vor.u32 %v3638, %v3642
      %v3645 = vshrl.u32 %v3564, 16
      %v3647 = vshll.u32 %v3564, 16
      %v3649 = vrot.slane %v3647, 1
      %v3650 = vor.u32 %v3645, %v3649
      %v3652 = vshrl.u32 %v3565, 16
      %v3654 = vshll.u32 %v3565, 16
      %v3656 = vrot.slane %v3654, 1
      %v3657 = vor.u32 %v3652, %v3656
      %v3726 = vunpack.c.l.b16 %v3566
      %v3727 = vunpack.c.h.b16 %v3566
      %v3728 = vunpack.c.l.b16 %v3567
      %v3729 = vunpack.c.h.b16 %v3567
      %v3730 = vunpack.c.l.b16 %v3568
      %v3731 = vunpack.c.h.b16 %v3568
      %v3732 = vunpack.c.l.b16 %v3569
      %v3733 = vunpack.c.h.b16 %v3569
      %v3734 = vunpack.c.l.b16 %v3570
      %v3735 = vunpack.c.h.b16 %v3570
      %v3736 = vunpack.c.l.b16 %v3571
      %v3737 = vunpack.c.h.b16 %v3571
      %v3738 = vunpack.c.l.b16 %v3572
      %v3739 = vunpack.c.h.b16 %v3572
      %v3740 = vunpack.c.l.b16 %v3573
      %v3741 = vunpack.c.h.b16 %v3573
      %v3742 = vunpack.c.l.b16 %v3574
      %v3743 = vunpack.c.h.b16 %v3574
      %v3744 = vunpack.c.l.b16 %v3575
      %v3745 = vunpack.c.h.b16 %v3575
      %v3746 = vunpack.c.l.b16 %v3576
      %v3747 = vunpack.c.h.b16 %v3576
      %v3748 = vunpack.c.l.b16 %v3577
      %v3749 = vunpack.c.h.b16 %v3577
      %v3750 = vunpack.c.l.b16 %v3578
      %v3751 = vunpack.c.h.b16 %v3578
      %v3752 = vunpack.c.l.b16 %v3579
      %v3753 = vunpack.c.h.b16 %v3579
      %v3754 = vunpack.c.l.b16 %v3580
      %v3755 = vunpack.c.h.b16 %v3580
      %v3756 = vunpack.c.l.b16 %v3581
      %v3757 = vunpack.c.h.b16 %v3581
      %v3758 = vunpack.c.l.b16 %v3582
      %v3759 = vunpack.c.h.b16 %v3582
      %v3760 = vunpack.c.l.b16 %v3583
      %v3761 = vunpack.c.h.b16 %v3583
      %v3762 = vunpack.c.l.b16 %v3584
      %v3763 = vunpack.c.h.b16 %v3584
      %v3764 = vunpack.c.l.b16 %v3585
      %v3765 = vunpack.c.h.b16 %v3585
      %v3766 = vunpack.c.l.b16 %v3586
      %v3767 = vunpack.c.h.b16 %v3586
      %v3768 = vunpack.c.l.b16 %v3587
      %v3769 = vunpack.c.h.b16 %v3587
      %v3770 = vunpack.c.l.b16 %v3588
      %v3771 = vunpack.c.h.b16 %v3588
      %v3772 = vunpack.c.l.b16 %v3589
      %v3773 = vunpack.c.h.b16 %v3589
      %v3774 = vunpack.c.l.b16 %v3590
      %v3775 = vunpack.c.h.b16 %v3590
      %v3776 = vunpack.c.l.b16 %v3591
      %v3777 = vunpack.c.h.b16 %v3591
      %v3778 = vunpack.c.l.b16 %v3592
      %v3779 = vunpack.c.h.b16 %v3592
      %v3780 = vunpack.c.l.b16 %v3593
      %v3781 = vunpack.c.h.b16 %v3593
      %v3782 = vunpack.c.l.b16 %v3594
      %v3783 = vunpack.c.h.b16 %v3594
      %v3784 = vunpack.c.l.b16 %v3595
      %v3785 = vunpack.c.h.b16 %v3595
      %v3786 = vunpack.c.l.b16 %v3596
      %v3787 = vunpack.c.h.b16 %v3596
      %v3788 = vunpack.c.l.b16 %v3597
      %v3789 = vunpack.c.h.b16 %v3597
      %v3790 = vunpack.c.l.b16 %v3598
      %v3791 = vunpack.c.h.b16 %v3598
      %v3792 = vunpack.c.l.b16 %v3599
      %v3793 = vunpack.c.h.b16 %v3599
      %v3794 = vunpack.c.l.b16 %v3600
      %v3795 = vunpack.c.h.b16 %v3600
      %v3796 = vunpack.c.l.b16 %v3601
      %v3797 = vunpack.c.h.b16 %v3601
      %v3798 = vunpack.c.l.b16 %v3602
      %v3799 = vunpack.c.h.b16 %v3602
      %v3800 = vunpack.c.l.b16 %v3603
      %v3801 = vunpack.c.h.b16 %v3603
      %v3802 = vunpack.c.l.b16 %v3604
      %v3803 = vunpack.c.h.b16 %v3604
      %v3804 = vunpack.c.l.b16 %v3605
      %v3805 = vunpack.c.h.b16 %v3605
      %v3806 = vunpack.c.l.b16 %v3606
      %v3807 = vunpack.c.h.b16 %v3606
      %v3808 = vunpack.c.l.b16 %v3607
      %v3809 = vunpack.c.h.b16 %v3607
      %v3810 = vunpack.c.l.b16 %v3608
      %v3811 = vunpack.c.h.b16 %v3608
      %v3812 = vunpack.c.l.b16 %v3609
      %v3813 = vunpack.c.h.b16 %v3609
      %v3814 = vunpack.c.l.b16 %v3610
      %v3815 = vunpack.c.h.b16 %v3610
      %v3816 = vunpack.c.l.b16 %v3611
      %v3817 = vunpack.c.h.b16 %v3611
      %v3818 = vunpack.c.l.b16 %v3612
      %v3819 = vunpack.c.h.b16 %v3612
      %v3820 = vunpack.c.l.b16 %v3613
      %v3821 = vunpack.c.h.b16 %v3613
      %v3822 = vunpack.c.l.b16 %v3614
      %v3823 = vunpack.c.h.b16 %v3614
      %v3824 = vunpack.c.l.b16 %v3615
      %v3825 = vunpack.c.h.b16 %v3615
      %v3826 = vunpack.c.l.b16 %v3616
      %v3827 = vunpack.c.h.b16 %v3616
      %v3828 = vunpack.c.l.b16 %v3617
      %v3829 = vunpack.c.h.b16 %v3617
      %v3830 = vunpack.c.l.b16 %v3618
      %v3831 = vunpack.c.h.b16 %v3618
      %v3832 = vunpack.c.l.b16 %v3619
      %v3833 = vunpack.c.h.b16 %v3619
      %v3834 = vunpack.c.l.b16 %v3620
      %v3835 = vunpack.c.h.b16 %v3620
      %v3836 = vunpack.c.l.b16 %v3621
      %v3837 = vunpack.c.h.b16 %v3621
      %v3838 = vunpack.c.l.b16 %v3622
      %v3839 = vunpack.c.h.b16 %v3622
      %v3840 = vunpack.c.l.b16 %v3623
      %v3841 = vunpack.c.h.b16 %v3623
      %v3842 = vunpack.c.l.b16 %v3624
      %v3843 = vunpack.c.h.b16 %v3624
      %v3844 = vunpack.c.l.b16 %v3625
      %v3845 = vunpack.c.h.b16 %v3625
      %v3846 = vunpack.c.l.b16 %v3626
      %v3847 = vunpack.c.h.b16 %v3626
      %v3848 = vunpack.c.l.b16 %v3627
      %v3849 = vunpack.c.h.b16 %v3627
      %v3850 = vunpack.c.l.b16 %v3628
      %v3851 = vunpack.c.h.b16 %v3628
      %v3852 = vunpack.c.l.b16 %v3629
      %v3853 = vunpack.c.h.b16 %v3629
      %v3854 = vpack.c.b16 %v3728, %v3726
      %v3855 = vpack.c.b16 %v3729, %v3727
      %v3856 = vpack.c.b16 %v3732, %v3730
      %v3857 = vpack.c.b16 %v3733, %v3731
      %v3858 = vpack.c.b16 %v3736, %v3734
      %v3859 = vpack.c.b16 %v3737, %v3735
      %v3860 = vpack.c.b16 %v3740, %v3738
      %v3861 = vpack.c.b16 %v3741, %v3739
      %v3862 = vpack.c.b16 %v3744, %v3742
      %v3863 = vpack.c.b16 %v3745, %v3743
      %v3864 = vpack.c.b16 %v3748, %v3746
      %v3865 = vpack.c.b16 %v3749, %v3747
      %v3866 = vpack.c.b16 %v3752, %v3750
      %v3867 = vpack.c.b16 %v3753, %v3751
      %v3868 = vpack.c.b16 %v3756, %v3754
      %v3869 = vpack.c.b16 %v3757, %v3755
      %v3870 = vpack.c.b16 %v3760, %v3758
      %v3871 = vpack.c.b16 %v3761, %v3759
      %v3872 = vpack.c.b16 %v3764, %v3762
      %v3873 = vpack.c.b16 %v3765, %v3763
      %v3874 = vpack.c.b16 %v3768, %v3766
      %v3875 = vpack.c.b16 %v3769, %v3767
      %v3876 = vpack.c.b16 %v3772, %v3770
      %v3877 = vpack.c.b16 %v3773, %v3771
      %v3878 = vpack.c.b16 %v3776, %v3774
      %v3879 = vpack.c.b16 %v3777, %v3775
      %v3880 = vpack.c.b16 %v3780, %v3778
      %v3881 = vpack.c.b16 %v3781, %v3779
      %v3882 = vpack.c.b16 %v3784, %v3782
      %v3883 = vpack.c.b16 %v3785, %v3783
      %v3884 = vpack.c.b16 %v3788, %v3786
      %v3885 = vpack.c.b16 %v3789, %v3787
      %v3886 = vpack.c.b16 %v3792, %v3790
      %v3887 = vpack.c.b16 %v3793, %v3791
      %v3888 = vpack.c.b16 %v3796, %v3794
      %v3889 = vpack.c.b16 %v3797, %v3795
      %v3890 = vpack.c.b16 %v3800, %v3798
      %v3891 = vpack.c.b16 %v3801, %v3799
      %v3892 = vpack.c.b16 %v3804, %v3802
      %v3893 = vpack.c.b16 %v3805, %v3803
      %v3894 = vpack.c.b16 %v3808, %v3806
      %v3895 = vpack.c.b16 %v3809, %v3807
      %v3896 = vpack.c.b16 %v3812, %v3810
      %v3897 = vpack.c.b16 %v3813, %v3811
      %v3898 = vpack.c.b16 %v3816, %v3814
      %v3899 = vpack.c.b16 %v3817, %v3815
      %v3900 = vpack.c.b16 %v3820, %v3818
      %v3901 = vpack.c.b16 %v3821, %v3819
      %v3902 = vpack.c.b16 %v3824, %v3822
      %v3903 = vpack.c.b16 %v3825, %v3823
      %v3904 = vpack.c.b16 %v3828, %v3826
      %v3905 = vpack.c.b16 %v3829, %v3827
      %v3906 = vpack.c.b16 %v3832, %v3830
      %v3907 = vpack.c.b16 %v3833, %v3831
      %v3908 = vpack.c.b16 %v3836, %v3834
      %v3909 = vpack.c.b16 %v3837, %v3835
      %v3910 = vpack.c.b16 %v3840, %v3838
      %v3911 = vpack.c.b16 %v3841, %v3839
      %v3912 = vpack.c.b16 %v3844, %v3842
      %v3913 = vpack.c.b16 %v3845, %v3843
      %v3914 = vpack.c.b16 %v3848, %v3846
      %v3915 = vpack.c.b16 %v3849, %v3847
      %v3916 = vpack.c.b16 %v3852, %v3850
      %v3917 = vpack.c.b16 %v3853, %v3851
      %3982 = vmatprep.subr.bf16.mxu0 %v3855
      %3983 = vmatpush1.bf16.msra.mxu0 %v3854
      %3984 = vmatprep.subr.bf16.mxu0 %v3857
      %3985 = vmatpush1.bf16.msra.mxu0 %v3856
      %3986 = vmatprep.subr.bf16.mxu0 %v3859
      %3987 = vmatpush1.bf16.msra.mxu0 %v3858
      %3988 = vmatprep.subr.bf16.mxu0 %v3861
      %3989 = vmatpush1.bf16.msra.mxu0 %v3860
      %3990 = vmatprep.subr.bf16.mxu0 %v3863
      %3991 = vmatpush1.bf16.msra.mxu0 %v3862
      %3992 = vmatprep.subr.bf16.mxu0 %v3865
      %3993 = vmatpush1.bf16.msra.mxu0 %v3864
      %3994 = vmatprep.subr.bf16.mxu0 %v3867
      %3995 = vmatpush1.bf16.msra.mxu0 %v3866
      %3996 = vmatprep.subr.bf16.mxu0 %v3869
      %3997 = vmatpush1.bf16.msra.mxu0 %v3868
      %3998 = vmatprep.subr.bf16.mxu0 %v3871
      %3999 = vmatpush1.bf16.msra.mxu0 %v3870
      %4000 = vmatprep.subr.bf16.mxu0 %v3873
      %4001 = vmatpush1.bf16.msra.mxu0 %v3872
      %4002 = vmatprep.subr.bf16.mxu0 %v3875
      %4003 = vmatpush1.bf16.msra.mxu0 %v3874
      %4004 = vmatprep.subr.bf16.mxu0 %v3877
      %4005 = vmatpush1.bf16.msra.mxu0 %v3876
      %4006 = vmatprep.subr.bf16.mxu0 %v3879
      %4007 = vmatpush1.bf16.msra.mxu0 %v3878
      %4008 = vmatprep.subr.bf16.mxu0 %v3881
      %4009 = vmatpush1.bf16.msra.mxu0 %v3880
      %4010 = vmatprep.subr.bf16.mxu0 %v3883
      %4011 = vmatpush1.bf16.msra.mxu0 %v3882
      %4012 = vmatprep.subr.bf16.mxu0 %v3885
      %4013 = vmatpush1.bf16.msra.mxu0 %v3884
      %4014 = vmatprep.mubr.bf16.mxu0 %v3643
      %4015 = vmatmul.mubr.bf16.gmra.mrb[0].mxu0 %v3636
      %v4016 = vpop.f32.mrb[0].mxu0
      %v4017 = vadd.f32 0.0, %v4016
      %v4018 = vpop.f32.mrb[0].mxu0
      %v4019 = vadd.f32 0.0, %v4018
      %v4020 = vpop.f32.mrb[0].mxu0
      %v4021 = vpop.f32.mrb[0].mxu0
      %4022 = vdwg.mxu0
      %4023 = vmatprep.subr.bf16.mxu0 %v3887
      %4024 = vmatpush1.bf16.msra.mxu0 %v3886
      %4025 = vmatprep.subr.bf16.mxu0 %v3889
      %4026 = vmatpush1.bf16.msra.mxu0 %v3888
      %4027 = vmatprep.subr.bf16.mxu0 %v3891
      %4028 = vmatpush1.bf16.msra.mxu0 %v3890
      %4029 = vmatprep.subr.bf16.mxu0 %v3893
      %4030 = vmatpush1.bf16.msra.mxu0 %v3892
      %4031 = vmatprep.subr.bf16.mxu0 %v3895
      %4032 = vmatpush1.bf16.msra.mxu0 %v3894
      %4033 = vmatprep.subr.bf16.mxu0 %v3897
      %4034 = vmatpush1.bf16.msra.mxu0 %v3896
      %4035 = vmatprep.subr.bf16.mxu0 %v3899
      %4036 = vmatpush1.bf16.msra.mxu0 %v3898
      %4037 = vmatprep.subr.bf16.mxu0 %v3901
      %4038 = vmatpush1.bf16.msra.mxu0 %v3900
      %4039 = vmatprep.subr.bf16.mxu0 %v3903
      %4040 = vmatpush1.bf16.msra.mxu0 %v3902
      %4041 = vmatprep.subr.bf16.mxu0 %v3905
      %4042 = vmatpush1.bf16.msra.mxu0 %v3904
      %4043 = vmatprep.subr.bf16.mxu0 %v3907
      %4044 = vmatpush1.bf16.msra.mxu0 %v3906
      %4045 = vmatprep.subr.bf16.mxu0 %v3909
      %4046 = vmatpush1.bf16.msra.mxu0 %v3908
      %4047 = vmatprep.subr.bf16.mxu0 %v3911
      %4048 = vmatpush1.bf16.msra.mxu0 %v3910
      %4049 = vmatprep.subr.bf16.mxu0 %v3913
      %4050 = vmatpush1.bf16.msra.mxu0 %v3912
      %4051 = vmatprep.subr.bf16.mxu0 %v3915
      %4052 = vmatpush1.bf16.msra.mxu0 %v3914
      %4053 = vmatprep.subr.bf16.mxu0 %v3917
      %4054 = vmatpush1.bf16.msra.mxu0 %v3916
      %4055 = vmatprep.mubr.bf16.mxu0 %v3657
      %4056 = vmatmul.mubr.bf16.gmra.mrb[0].mxu0 %v3650
      %v4057 = vpop.f32.mrb[0].mxu0
      %v4058 = vadd.f32 %v4017, %v4057
      %v4059 = vpop.f32.mrb[0].mxu0
      %v4060 = vadd.f32 %v4019, %v4059
      %v4061 = vpop.f32.mrb[0].mxu0
      %v4062 = vpop.f32.mrb[0].mxu0
      %4063 = vdwg.mxu0
      %v4064 = vadd.f32 %v3548, %v4058
      %v4065 = vadd.f32 %v3550, %v4060
      %v4066 = vld [vmem:[%s11] sm:$0x3]
      %v4068 = vlaneseq
      %v4069 = vshrl.u32 %v4068, 7
      %v4070 = vsub.s32 0, %v4069
      %v4071 = vrot.slane %v4066, %v4070
      %v4072 = vlaneseq
      %v4073 = vshrl.u32 %v4072, 7
      %v4074 = vsub.s32 1, %v4073
      %v4075 = vrot.slane %v4066, %v4074
      %v4078 = vadd.f32 %v4064, %v4071
      %v4079 = vadd.f32 %v4065, %v4075
      %v4080 = vld [vmem:[%s10] sm:$0xff]
      %v4081 = vld [vmem:[%s10 + $0x8] sm:$0xff]
      %v4082 = vld [vmem:[%s10 + $0x10] sm:$0xff]
      %v4083 = vld [vmem:[%s10 + $0x18] sm:$0xff]
      %v4084 = vld [vmem:[%s10 + $0x20] sm:$0xff]
      %v4085 = vld [vmem:[%s10 + $0x28] sm:$0xff]
      %v4086 = vld [vmem:[%s10 + $0x30] sm:$0xff]
      %v4087 = vld [vmem:[%s10 + $0x38] sm:$0xff]
      %v4088 = vld [vmem:[%s10 + $0x40] sm:$0xff]
      %v4089 = vld [vmem:[%s10 + $0x48] sm:$0xff]
      %v4090 = vld [vmem:[%s10 + $0x50] sm:$0xff]
      %v4091 = vld [vmem:[%s10 + $0x58] sm:$0xff]
      %v4092 = vld [vmem:[%s10 + $0x60] sm:$0xff]
      %v4093 = vld [vmem:[%s10 + $0x68] sm:$0xff]
      %v4094 = vld [vmem:[%s10 + $0x70] sm:$0xff]
      %v4095 = vld [vmem:[%s10 + $0x78] sm:$0xff]
      %v4096 = vld [vmem:[%s10 + $0x80] sm:$0xff]
      %v4097 = vld [vmem:[%s10 + $0x88] sm:$0xff]
      %v4098 = vld [vmem:[%s10 + $0x90] sm:$0xff]
      %v4099 = vld [vmem:[%s10 + $0x98] sm:$0xff]
      %v4100 = vld [vmem:[%s10 + $0xa0] sm:$0xff]
      %v4101 = vld [vmem:[%s10 + $0xa8] sm:$0xff]
      %v4102 = vld [vmem:[%s10 + $0xb0] sm:$0xff]
      %v4103 = vld [vmem:[%s10 + $0xb8] sm:$0xff]
      %v4104 = vld [vmem:[%s10 + $0xc0] sm:$0xff]
      %v4105 = vld [vmem:[%s10 + $0xc8] sm:$0xff]
      %v4106 = vld [vmem:[%s10 + $0xd0] sm:$0xff]
      %v4107 = vld [vmem:[%s10 + $0xd8] sm:$0xff]
      %v4108 = vld [vmem:[%s10 + $0xe0] sm:$0xff]
      %v4109 = vld [vmem:[%s10 + $0xe8] sm:$0xff]
      %v4110 = vld [vmem:[%s10 + $0xf0] sm:$0xff]
      %v4111 = vld [vmem:[%s10 + $0xf8] sm:$0xff]
      %v4112 = vld [vmem:[%s10 + $0x100] sm:$0xff]
      %v4113 = vld [vmem:[%s10 + $0x108] sm:$0xff]
      %v4114 = vld [vmem:[%s10 + $0x110] sm:$0xff]
      %v4115 = vld [vmem:[%s10 + $0x118] sm:$0xff]
      %v4116 = vld [vmem:[%s10 + $0x120] sm:$0xff]
      %v4117 = vld [vmem:[%s10 + $0x128] sm:$0xff]
      %v4118 = vld [vmem:[%s10 + $0x130] sm:$0xff]
      %v4119 = vld [vmem:[%s10 + $0x138] sm:$0xff]
      %v4120 = vld [vmem:[%s10 + $0x140] sm:$0xff]
      %v4121 = vld [vmem:[%s10 + $0x148] sm:$0xff]
      %v4122 = vld [vmem:[%s10 + $0x150] sm:$0xff]
      %v4123 = vld [vmem:[%s10 + $0x158] sm:$0xff]
      %v4124 = vld [vmem:[%s10 + $0x160] sm:$0xff]
      %v4125 = vld [vmem:[%s10 + $0x168] sm:$0xff]
      %v4126 = vld [vmem:[%s10 + $0x170] sm:$0xff]
      %v4127 = vld [vmem:[%s10 + $0x178] sm:$0xff]
      %v4128 = vld [vmem:[%s10 + $0x180] sm:$0xff]
      %v4129 = vld [vmem:[%s10 + $0x188] sm:$0xff]
      %v4130 = vld [vmem:[%s10 + $0x190] sm:$0xff]
      %v4131 = vld [vmem:[%s10 + $0x198] sm:$0xff]
      %v4132 = vld [vmem:[%s10 + $0x1a0] sm:$0xff]
      %v4133 = vld [vmem:[%s10 + $0x1a8] sm:$0xff]
      %v4134 = vld [vmem:[%s10 + $0x1b0] sm:$0xff]
      %v4135 = vld [vmem:[%s10 + $0x1b8] sm:$0xff]
      %v4136 = vld [vmem:[%s10 + $0x1c0] sm:$0xff]
      %v4137 = vld [vmem:[%s10 + $0x1c8] sm:$0xff]
      %v4138 = vld [vmem:[%s10 + $0x1d0] sm:$0xff]
      %v4139 = vld [vmem:[%s10 + $0x1d8] sm:$0xff]
      %v4140 = vld [vmem:[%s10 + $0x1e0] sm:$0xff]
      %v4141 = vld [vmem:[%s10 + $0x1e8] sm:$0xff]
      %v4142 = vld [vmem:[%s10 + $0x1f0] sm:$0xff]
      %v4143 = vld [vmem:[%s10 + $0x1f8] sm:$0xff]
      %v4144 = vld [vmem:[%s12] sm:$0x3]
      %v4146 = vlaneseq
      %v4147 = vshrl.u32 %v4146, 7
      %v4148 = vsub.s32 0, %v4147
      %v4149 = vrot.slane %v4144, %v4148
      %v4150 = vlaneseq
      %v4151 = vshrl.u32 %v4150, 7
      %v4152 = vsub.s32 1, %v4151
      %v4153 = vrot.slane %v4144, %v4152
      %v4220 = vunpack.c.l.b16 %v4080
      %v4221 = vunpack.c.h.b16 %v4080
      %v4222 = vunpack.c.l.b16 %v4081
      %v4223 = vunpack.c.h.b16 %v4081
      %v4224 = vunpack.c.l.b16 %v4082
      %v4225 = vunpack.c.h.b16 %v4082
      %v4226 = vunpack.c.l.b16 %v4083
      %v4227 = vunpack.c.h.b16 %v4083
      %v4228 = vunpack.c.l.b16 %v4084
      %v4229 = vunpack.c.h.b16 %v4084
      %v4230 = vunpack.c.l.b16 %v4085
      %v4231 = vunpack.c.h.b16 %v4085
      %v4232 = vunpack.c.l.b16 %v4086
      %v4233 = vunpack.c.h.b16 %v4086
      %v4234 = vunpack.c.l.b16 %v4087
      %v4235 = vunpack.c.h.b16 %v4087
      %v4236 = vunpack.c.l.b16 %v4088
      %v4237 = vunpack.c.h.b16 %v4088
      %v4238 = vunpack.c.l.b16 %v4089
      %v4239 = vunpack.c.h.b16 %v4089
      %v4240 = vunpack.c.l.b16 %v4090
      %v4241 = vunpack.c.h.b16 %v4090
      %v4242 = vunpack.c.l.b16 %v4091
      %v4243 = vunpack.c.h.b16 %v4091
      %v4244 = vunpack.c.l.b16 %v4092
      %v4245 = vunpack.c.h.b16 %v4092
      %v4246 = vunpack.c.l.b16 %v4093
      %v4247 = vunpack.c.h.b16 %v4093
      %v4248 = vunpack.c.l.b16 %v4094
      %v4249 = vunpack.c.h.b16 %v4094
      %v4250 = vunpack.c.l.b16 %v4095
      %v4251 = vunpack.c.h.b16 %v4095
      %v4252 = vunpack.c.l.b16 %v4096
      %v4253 = vunpack.c.h.b16 %v4096
      %v4254 = vunpack.c.l.b16 %v4097
      %v4255 = vunpack.c.h.b16 %v4097
      %v4256 = vunpack.c.l.b16 %v4098
      %v4257 = vunpack.c.h.b16 %v4098
      %v4258 = vunpack.c.l.b16 %v4099
      %v4259 = vunpack.c.h.b16 %v4099
      %v4260 = vunpack.c.l.b16 %v4100
      %v4261 = vunpack.c.h.b16 %v4100
      %v4262 = vunpack.c.l.b16 %v4101
      %v4263 = vunpack.c.h.b16 %v4101
      %v4264 = vunpack.c.l.b16 %v4102
      %v4265 = vunpack.c.h.b16 %v4102
      %v4266 = vunpack.c.l.b16 %v4103
      %v4267 = vunpack.c.h.b16 %v4103
      %v4268 = vunpack.c.l.b16 %v4104
      %v4269 = vunpack.c.h.b16 %v4104
      %v4270 = vunpack.c.l.b16 %v4105
      %v4271 = vunpack.c.h.b16 %v4105
      %v4272 = vunpack.c.l.b16 %v4106
      %v4273 = vunpack.c.h.b16 %v4106
      %v4274 = vunpack.c.l.b16 %v4107
      %v4275 = vunpack.c.h.b16 %v4107
      %v4276 = vunpack.c.l.b16 %v4108
      %v4277 = vunpack.c.h.b16 %v4108
      %v4278 = vunpack.c.l.b16 %v4109
      %v4279 = vunpack.c.h.b16 %v4109
      %v4280 = vunpack.c.l.b16 %v4110
      %v4281 = vunpack.c.h.b16 %v4110
      %v4282 = vunpack.c.l.b16 %v4111
      %v4283 = vunpack.c.h.b16 %v4111
      %v4284 = vunpack.c.l.b16 %v4112
      %v4285 = vunpack.c.h.b16 %v4112
      %v4286 = vunpack.c.l.b16 %v4113
      %v4287 = vunpack.c.h.b16 %v4113
      %v4288 = vunpack.c.l.b16 %v4114
      %v4289 = vunpack.c.h.b16 %v4114
      %v4290 = vunpack.c.l.b16 %v4115
      %v4291 = vunpack.c.h.b16 %v4115
      %v4292 = vunpack.c.l.b16 %v4116
      %v4293 = vunpack.c.h.b16 %v4116
      %v4294 = vunpack.c.l.b16 %v4117
      %v4295 = vunpack.c.h.b16 %v4117
      %v4296 = vunpack.c.l.b16 %v4118
      %v4297 = vunpack.c.h.b16 %v4118
      %v4298 = vunpack.c.l.b16 %v4119
      %v4299 = vunpack.c.h.b16 %v4119
      %v4300 = vunpack.c.l.b16 %v4120
      %v4301 = vunpack.c.h.b16 %v4120
      %v4302 = vunpack.c.l.b16 %v4121
      %v4303 = vunpack.c.h.b16 %v4121
      %v4304 = vunpack.c.l.b16 %v4122
      %v4305 = vunpack.c.h.b16 %v4122
      %v4306 = vunpack.c.l.b16 %v4123
      %v4307 = vunpack.c.h.b16 %v4123
      %v4308 = vunpack.c.l.b16 %v4124
      %v4309 = vunpack.c.h.b16 %v4124
      %v4310 = vunpack.c.l.b16 %v4125
      %v4311 = vunpack.c.h.b16 %v4125
      %v4312 = vunpack.c.l.b16 %v4126
      %v4313 = vunpack.c.h.b16 %v4126
      %v4314 = vunpack.c.l.b16 %v4127
      %v4315 = vunpack.c.h.b16 %v4127
      %v4316 = vunpack.c.l.b16 %v4128
      %v4317 = vunpack.c.h.b16 %v4128
      %v4318 = vunpack.c.l.b16 %v4129
      %v4319 = vunpack.c.h.b16 %v4129
      %v4320 = vunpack.c.l.b16 %v4130
      %v4321 = vunpack.c.h.b16 %v4130
      %v4322 = vunpack.c.l.b16 %v4131
      %v4323 = vunpack.c.h.b16 %v4131
      %v4324 = vunpack.c.l.b16 %v4132
      %v4325 = vunpack.c.h.b16 %v4132
      %v4326 = vunpack.c.l.b16 %v4133
      %v4327 = vunpack.c.h.b16 %v4133
      %v4328 = vunpack.c.l.b16 %v4134
      %v4329 = vunpack.c.h.b16 %v4134
      %v4330 = vunpack.c.l.b16 %v4135
      %v4331 = vunpack.c.h.b16 %v4135
      %v4332 = vunpack.c.l.b16 %v4136
      %v4333 = vunpack.c.h.b16 %v4136
      %v4334 = vunpack.c.l.b16 %v4137
      %v4335 = vunpack.c.h.b16 %v4137
      %v4336 = vunpack.c.l.b16 %v4138
      %v4337 = vunpack.c.h.b16 %v4138
      %v4338 = vunpack.c.l.b16 %v4139
      %v4339 = vunpack.c.h.b16 %v4139
      %v4340 = vunpack.c.l.b16 %v4140
      %v4341 = vunpack.c.h.b16 %v4140
      %v4342 = vunpack.c.l.b16 %v4141
      %v4343 = vunpack.c.h.b16 %v4141
      %v4344 = vunpack.c.l.b16 %v4142
      %v4345 = vunpack.c.h.b16 %v4142
      %v4346 = vunpack.c.l.b16 %v4143
      %v4347 = vunpack.c.h.b16 %v4143
      %v4348 = vpack.c.b16 %v4222, %v4220
      %v4349 = vpack.c.b16 %v4223, %v4221
      %v4350 = vpack.c.b16 %v4226, %v4224
      %v4351 = vpack.c.b16 %v4227, %v4225
      %v4352 = vpack.c.b16 %v4230, %v4228
      %v4353 = vpack.c.b16 %v4231, %v4229
      %v4354 = vpack.c.b16 %v4234, %v4232
      %v4355 = vpack.c.b16 %v4235, %v4233
      %v4356 = vpack.c.b16 %v4238, %v4236
      %v4357 = vpack.c.b16 %v4239, %v4237
      %v4358 = vpack.c.b16 %v4242, %v4240
      %v4359 = vpack.c.b16 %v4243, %v4241
      %v4360 = vpack.c.b16 %v4246, %v4244
      %v4361 = vpack.c.b16 %v4247, %v4245
      %v4362 = vpack.c.b16 %v4250, %v4248
      %v4363 = vpack.c.b16 %v4251, %v4249
      %v4364 = vpack.c.b16 %v4254, %v4252
      %v4365 = vpack.c.b16 %v4255, %v4253
      %v4366 = vpack.c.b16 %v4258, %v4256
      %v4367 = vpack.c.b16 %v4259, %v4257
      %v4368 = vpack.c.b16 %v4262, %v4260
      %v4369 = vpack.c.b16 %v4263, %v4261
      %v4370 = vpack.c.b16 %v4266, %v4264
      %v4371 = vpack.c.b16 %v4267, %v4265
      %v4372 = vpack.c.b16 %v4270, %v4268
      %v4373 = vpack.c.b16 %v4271, %v4269
      %v4374 = vpack.c.b16 %v4274, %v4272
      %v4375 = vpack.c.b16 %v4275, %v4273
      %v4376 = vpack.c.b16 %v4278, %v4276
      %v4377 = vpack.c.b16 %v4279, %v4277
      %v4378 = vpack.c.b16 %v4282, %v4280
      %v4379 = vpack.c.b16 %v4283, %v4281
      %v4380 = vpack.c.b16 %v4286, %v4284
      %v4381 = vpack.c.b16 %v4287, %v4285
      %v4382 = vpack.c.b16 %v4290, %v4288
      %v4383 = vpack.c.b16 %v4291, %v4289
      %v4384 = vpack.c.b16 %v4294, %v4292
      %v4385 = vpack.c.b16 %v4295, %v4293
      %v4386 = vpack.c.b16 %v4298, %v4296
      %v4387 = vpack.c.b16 %v4299, %v4297
      %v4388 = vpack.c.b16 %v4302, %v4300
      %v4389 = vpack.c.b16 %v4303, %v4301
      %v4390 = vpack.c.b16 %v4306, %v4304
      %v4391 = vpack.c.b16 %v4307, %v4305
      %v4392 = vpack.c.b16 %v4310, %v4308
      %v4393 = vpack.c.b16 %v4311, %v4309
      %v4394 = vpack.c.b16 %v4314, %v4312
      %v4395 = vpack.c.b16 %v4315, %v4313
      %v4396 = vpack.c.b16 %v4318, %v4316
      %v4397 = vpack.c.b16 %v4319, %v4317
      %v4398 = vpack.c.b16 %v4322, %v4320
      %v4399 = vpack.c.b16 %v4323, %v4321
      %v4400 = vpack.c.b16 %v4326, %v4324
      %v4401 = vpack.c.b16 %v4327, %v4325
      %v4402 = vpack.c.b16 %v4330, %v4328
      %v4403 = vpack.c.b16 %v4331, %v4329
      %v4404 = vpack.c.b16 %v4334, %v4332
      %v4405 = vpack.c.b16 %v4335, %v4333
      %v4406 = vpack.c.b16 %v4338, %v4336
      %v4407 = vpack.c.b16 %v4339, %v4337
      %v4408 = vpack.c.b16 %v4342, %v4340
      %v4409 = vpack.c.b16 %v4343, %v4341
      %v4410 = vpack.c.b16 %v4346, %v4344
      %v4411 = vpack.c.b16 %v4347, %v4345
      %4476 = vmatprep.subr.bf16.mxu0 %v4349
      %4477 = vmatpush1.bf16.msra.mxu0 %v4348
      %4478 = vmatprep.subr.bf16.mxu0 %v4351
      %4479 = vmatpush1.bf16.msra.mxu0 %v4350
      %4480 = vmatprep.subr.bf16.mxu0 %v4353
      %4481 = vmatpush1.bf16.msra.mxu0 %v4352
      %4482 = vmatprep.subr.bf16.mxu0 %v4355
      %4483 = vmatpush1.bf16.msra.mxu0 %v4354
      %4484 = vmatprep.subr.bf16.mxu0 %v4357
      %4485 = vmatpush1.bf16.msra.mxu0 %v4356
      %4486 = vmatprep.subr.bf16.mxu0 %v4359
      %4487 = vmatpush1.bf16.msra.mxu0 %v4358
      %4488 = vmatprep.subr.bf16.mxu0 %v4361
      %4489 = vmatpush1.bf16.msra.mxu0 %v4360
      %4490 = vmatprep.subr.bf16.mxu0 %v4363
      %4491 = vmatpush1.bf16.msra.mxu0 %v4362
      %4492 = vmatprep.subr.bf16.mxu0 %v4365
      %4493 = vmatpush1.bf16.msra.mxu0 %v4364
      %4494 = vmatprep.subr.bf16.mxu0 %v4367
      %4495 = vmatpush1.bf16.msra.mxu0 %v4366
      %4496 = vmatprep.subr.bf16.mxu0 %v4369
      %4497 = vmatpush1.bf16.msra.mxu0 %v4368
      %4498 = vmatprep.subr.bf16.mxu0 %v4371
      %4499 = vmatpush1.bf16.msra.mxu0 %v4370
      %4500 = vmatprep.subr.bf16.mxu0 %v4373
      %4501 = vmatpush1.bf16.msra.mxu0 %v4372
      %4502 = vmatprep.subr.bf16.mxu0 %v4375
      %4503 = vmatpush1.bf16.msra.mxu0 %v4374
      %4504 = vmatprep.subr.bf16.mxu0 %v4377
      %4505 = vmatpush1.bf16.msra.mxu0 %v4376
      %4506 = vmatprep.subr.bf16.mxu0 %v4379
      %4507 = vmatpush1.bf16.msra.mxu0 %v4378
      %4508 = vmatprep.mubr.bf16.mxu0 %v2647
      %4509 = vmatmul.mubr.bf16.gmra.mrb[0].mxu0 %v2646
      %v4510 = vpop.f32.mrb[0].mxu0
      %v4511 = vadd.f32 %v4149, %v4510
      %v4512 = vpop.f32.mrb[0].mxu0
      %v4513 = vadd.f32 %v4153, %v4512
      %v4514 = vpop.f32.mrb[0].mxu0
      %v4515 = vpop.f32.mrb[0].mxu0
      %4516 = vdwg.mxu0
      %4517 = vmatprep.subr.bf16.mxu0 %v4381
      %4518 = vmatpush1.bf16.msra.mxu0 %v4380
      %4519 = vmatprep.subr.bf16.mxu0 %v4383
      %4520 = vmatpush1.bf16.msra.mxu0 %v4382
      %4521 = vmatprep.subr.bf16.mxu0 %v4385
      %4522 = vmatpush1.bf16.msra.mxu0 %v4384
      %4523 = vmatprep.subr.bf16.mxu0 %v4387
      %4524 = vmatpush1.bf16.msra.mxu0 %v4386
      %4525 = vmatprep.subr.bf16.mxu0 %v4389
      %4526 = vmatpush1.bf16.msra.mxu0 %v4388
      %4527 = vmatprep.subr.bf16.mxu0 %v4391
      %4528 = vmatpush1.bf16.msra.mxu0 %v4390
      %4529 = vmatprep.subr.bf16.mxu0 %v4393
      %4530 = vmatpush1.bf16.msra.mxu0 %v4392
      %4531 = vmatprep.subr.bf16.mxu0 %v4395
      %4532 = vmatpush1.bf16.msra.mxu0 %v4394
      %4533 = vmatprep.subr.bf16.mxu0 %v4397
      %4534 = vmatpush1.bf16.msra.mxu0 %v4396
      %4535 = vmatprep.subr.bf16.mxu0 %v4399
      %4536 = vmatpush1.bf16.msra.mxu0 %v4398
      %4537 = vmatprep.subr.bf16.mxu0 %v4401
      %4538 = vmatpush1.bf16.msra.mxu0 %v4400
      %4539 = vmatprep.subr.bf16.mxu0 %v4403
      %4540 = vmatpush1.bf16.msra.mxu0 %v4402
      %4541 = vmatprep.subr.bf16.mxu0 %v4405
      %4542 = vmatpush1.bf16.msra.mxu0 %v4404
      %4543 = vmatprep.subr.bf16.mxu0 %v4407
      %4544 = vmatpush1.bf16.msra.mxu0 %v4406
      %4545 = vmatprep.subr.bf16.mxu0 %v4409
      %4546 = vmatpush1.bf16.msra.mxu0 %v4408
      %4547 = vmatprep.subr.bf16.mxu0 %v4411
      %4548 = vmatpush1.bf16.msra.mxu0 %v4410
      %4549 = vmatprep.mubr.bf16.mxu0 %v2649
      %4550 = vmatmul.mubr.bf16.gmra.mrb[0].mxu0 %v2648
      %v4551 = vpop.f32.mrb[0].mxu0
      %v4552 = vadd.f32 %v4511, %v4551
      %v4553 = vpop.f32.mrb[0].mxu0
      %v4554 = vadd.f32 %v4513, %v4553
      %v4555 = vpop.f32.mrb[0].mxu0
      %v4556 = vpop.f32.mrb[0].mxu0
      %4557 = vdwg.mxu0
      %vm4558 = vcmp.ge.f32.partialorder %v4078, 0.0
      %vm4559 = vcmp.ge.f32.partialorder %v4079, 0.0
      %v4560 = vmul.f32 %v4078, 0.25
      %v4561 = vmul.f32 %v4079, 0.25
      %v4562 = vsel %vm4558, %v4078, %v4560
      %v4563 = vsel %vm4559, %v4079, %v4561
      %v4564 = vmul.f32 %v4562, 0.33333334
      %v4565 = vmul.f32 %v4563, 0.33333334
      %v4566 = vmul.f32 %v4552, 0.6666667
      %v4567 = vmul.f32 %v4554, 0.6666667
      %v4568 = vadd.f32 %v4564, %v4566
      %v4569 = vadd.f32 %v4565, %v4567
      %4570 = vst [vmem:[#allocation2 + $0x20] sm:$0xff] %v4568
      %4571 = vst [vmem:[#allocation2 + $0x28] sm:$0xff] %v4569
      %v4572 = vld [vmem:[#allocation2] sm:$0x80]
      %v4573 = vld [vmem:[#allocation2 + $0x8] sm:$0x80]
      %v4574 = vld [vmem:[#allocation2 + $0x20] sm:$0x7f]
      %v4575 = vld [vmem:[#allocation2 + $0x28] sm:$0x7f]
      %v4576 = vpack.c.bf16 %v4574, %v4572
      %v4577 = vpack.c.bf16 %v4575, %v4573
      %v4578 = vld [vmem:[%s13] sm:$0xf]
      %v4579 = vld [vmem:[%s13 + $0x4] sm:$0xf]
      %v4580 = vld [vmem:[%s13 + $0x8] sm:$0xf]
      %v4581 = vld [vmem:[%s13 + $0xc] sm:$0xf]
      %v4582 = vld [vmem:[%s13 + $0x10] sm:$0xf]
      %v4583 = vld [vmem:[%s13 + $0x14] sm:$0xf]
      %v4584 = vld [vmem:[%s13 + $0x18] sm:$0xf]
      %v4585 = vld [vmem:[%s13 + $0x1c] sm:$0xf]
      %v4586 = vld [vmem:[%s13 + $0x20] sm:$0xf]
      %v4587 = vld [vmem:[%s13 + $0x24] sm:$0xf]
      %v4588 = vld [vmem:[%s13 + $0x28] sm:$0xf]
      %v4589 = vld [vmem:[%s13 + $0x2c] sm:$0xf]
      %v4590 = vld [vmem:[%s13 + $0x30] sm:$0xf]
      %v4591 = vld [vmem:[%s13 + $0x34] sm:$0xf]
      %v4592 = vld [vmem:[%s13 + $0x38] sm:$0xf]
      %v4593 = vld [vmem:[%s13 + $0x3c] sm:$0xf]
      %v4594 = vld [vmem:[%s13 + $0x40] sm:$0xf]
      %v4595 = vld [vmem:[%s13 + $0x44] sm:$0xf]
      %v4596 = vld [vmem:[%s13 + $0x48] sm:$0xf]
      %v4597 = vld [vmem:[%s13 + $0x4c] sm:$0xf]
      %v4598 = vld [vmem:[%s13 + $0x50] sm:$0xf]
      %v4599 = vld [vmem:[%s13 + $0x54] sm:$0xf]
      %v4600 = vld [vmem:[%s13 + $0x58] sm:$0xf]
      %v4601 = vld [vmem:[%s13 + $0x5c] sm:$0xf]
      %v4602 = vld [vmem:[%s13 + $0x60] sm:$0xf]
      %v4603 = vld [vmem:[%s13 + $0x64] sm:$0xf]
      %v4604 = vld [vmem:[%s13 + $0x68] sm:$0xf]
      %v4605 = vld [vmem:[%s13 + $0x6c] sm:$0xf]
      %v4606 = vld [vmem:[%s13 + $0x70] sm:$0xf]
      %v4607 = vld [vmem:[%s13 + $0x74] sm:$0xf]
      %v4608 = vld [vmem:[%s13 + $0x78] sm:$0xf]
      %v4609 = vld [vmem:[%s13 + $0x7c] sm:$0xf]
      %v4610 = vld [vmem:[#allocation2 + $0x20] sm:$0xff]
      %v4611 = vld [vmem:[#allocation2 + $0x28] sm:$0xff]
      %v4612 = vpack.c.bf16 %v4610, %v4610
      %v4613 = vpack.c.bf16 %v4611, %v4611
      %v4614 = vld [vmem:[%s13 + $0x80] sm:$0xf]
      %v4615 = vld [vmem:[%s13 + $0x84] sm:$0xf]
      %v4616 = vld [vmem:[%s13 + $0x88] sm:$0xf]
      %v4617 = vld [vmem:[%s13 + $0x8c] sm:$0xf]
      %v4618 = vld [vmem:[%s13 + $0x90] sm:$0xf]
      %v4619 = vld [vmem:[%s13 + $0x94] sm:$0xf]
      %v4620 = vld [vmem:[%s13 + $0x98] sm:$0xf]
      %v4621 = vld [vmem:[%s13 + $0x9c] sm:$0xf]
      %v4622 = vld [vmem:[%s13 + $0xa0] sm:$0xf]
      %v4623 = vld [vmem:[%s13 + $0xa4] sm:$0xf]
      %v4624 = vld [vmem:[%s13 + $0xa8] sm:$0xf]
      %v4625 = vld [vmem:[%s13 + $0xac] sm:$0xf]
      %v4626 = vld [vmem:[%s13 + $0xb0] sm:$0xf]
      %v4627 = vld [vmem:[%s13 + $0xb4] sm:$0xf]
      %v4628 = vld [vmem:[%s13 + $0xb8] sm:$0xf]
      %v4629 = vld [vmem:[%s13 + $0xbc] sm:$0xf]
      %v4630 = vld [vmem:[%s13 + $0xc0] sm:$0xf]
      %v4631 = vld [vmem:[%s13 + $0xc4] sm:$0xf]
      %v4632 = vld [vmem:[%s13 + $0xc8] sm:$0xf]
      %v4633 = vld [vmem:[%s13 + $0xcc] sm:$0xf]
      %v4634 = vld [vmem:[%s13 + $0xd0] sm:$0xf]
      %v4635 = vld [vmem:[%s13 + $0xd4] sm:$0xf]
      %v4636 = vld [vmem:[%s13 + $0xd8] sm:$0xf]
      %v4637 = vld [vmem:[%s13 + $0xdc] sm:$0xf]
      %v4638 = vld [vmem:[%s13 + $0xe0] sm:$0xf]
      %v4639 = vld [vmem:[%s13 + $0xe4] sm:$0xf]
      %v4640 = vld [vmem:[%s13 + $0xe8] sm:$0xf]
      %v4641 = vld [vmem:[%s13 + $0xec] sm:$0xf]
      %v4642 = vld [vmem:[%s13 + $0xf0] sm:$0xf]
      %v4643 = vld [vmem:[%s13 + $0xf4] sm:$0xf]
      %v4644 = vld [vmem:[%s13 + $0xf8] sm:$0xf]
      %v4645 = vld [vmem:[%s13 + $0xfc] sm:$0xf]
      %v4678 = vunpack.c.l.b16 %v4614
      %v4679 = vunpack.c.l.b16 %v4615
      %v4680 = vunpack.c.l.b16 %v4616
      %v4681 = vunpack.c.l.b16 %v4617
      %v4682 = vunpack.c.l.b16 %v4618
      %v4683 = vunpack.c.l.b16 %v4619
      %v4684 = vunpack.c.l.b16 %v4620
      %v4685 = vunpack.c.l.b16 %v4621
      %v4686 = vunpack.c.l.b16 %v4622
      %v4687 = vunpack.c.l.b16 %v4623
      %v4688 = vunpack.c.l.b16 %v4624
      %v4689 = vunpack.c.l.b16 %v4625
      %v4690 = vunpack.c.l.b16 %v4626
      %v4691 = vunpack.c.l.b16 %v4627
      %v4692 = vunpack.c.l.b16 %v4628
      %v4693 = vunpack.c.l.b16 %v4629
      %v4694 = vunpack.c.l.b16 %v4630
      %v4695 = vunpack.c.l.b16 %v4631
      %v4696 = vunpack.c.l.b16 %v4632
      %v4697 = vunpack.c.l.b16 %v4633
      %v4698 = vunpack.c.l.b16 %v4634
      %v4699 = vunpack.c.l.b16 %v4635
      %v4700 = vunpack.c.l.b16 %v4636
      %v4701 = vunpack.c.l.b16 %v4637
      %v4702 = vunpack.c.l.b16 %v4638
      %v4703 = vunpack.c.l.b16 %v4639
      %v4704 = vunpack.c.l.b16 %v4640
      %v4705 = vunpack.c.l.b16 %v4641
      %v4706 = vunpack.c.l.b16 %v4642
      %v4707 = vunpack.c.l.b16 %v4643
      %v4708 = vunpack.c.l.b16 %v4644
      %v4709 = vunpack.c.l.b16 %v4645
      %v4710 = vpack.c.b16 %v4679, %v4678
      %v4711 = vpack.c.b16 %v4681, %v4680
      %v4712 = vpack.c.b16 %v4683, %v4682
      %v4713 = vpack.c.b16 %v4685, %v4684
      %v4714 = vpack.c.b16 %v4687, %v4686
      %v4715 = vpack.c.b16 %v4689, %v4688
      %v4716 = vpack.c.b16 %v4691, %v4690
      %v4717 = vpack.c.b16 %v4693, %v4692
      %v4718 = vpack.c.b16 %v4695, %v4694
      %v4719 = vpack.c.b16 %v4697, %v4696
      %v4720 = vpack.c.b16 %v4699, %v4698
      %v4721 = vpack.c.b16 %v4701, %v4700
      %v4722 = vpack.c.b16 %v4703, %v4702
      %v4723 = vpack.c.b16 %v4705, %v4704
      %v4724 = vpack.c.b16 %v4707, %v4706
      %v4725 = vpack.c.b16 %v4709, %v4708
      %4742 = vmatprep.subr.bf16.mxu0 0
      %4743 = vmatpush1.bf16.msra.mxu0 %v4710
      %4744 = vmatprep.subr.bf16.mxu0 0
      %4745 = vmatpush1.bf16.msra.mxu0 %v4711
      %4746 = vmatprep.subr.bf16.mxu0 0
      %4747 = vmatpush1.bf16.msra.mxu0 %v4712
      %4748 = vmatprep.subr.bf16.mxu0 0
      %4749 = vmatpush1.bf16.msra.mxu0 %v4713
      %4750 = vmatprep.subr.bf16.mxu0 0
      %4751 = vmatpush1.bf16.msra.mxu0 %v4714
      %4752 = vmatprep.subr.bf16.mxu0 0
      %4753 = vmatpush1.bf16.msra.mxu0 %v4715
      %4754 = vmatprep.subr.bf16.mxu0 0
      %4755 = vmatpush1.bf16.msra.mxu0 %v4716
      %4756 = vmatprep.subr.bf16.mxu0 0
      %4757 = vmatpush1.bf16.msra.mxu0 %v4717
      %4758 = vmatprep.subr.bf16.mxu0 0
      %4759 = vmatpush1.bf16.msra.mxu0 %v4718
      %4760 = vmatprep.subr.bf16.mxu0 0
      %4761 = vmatpush1.bf16.msra.mxu0 %v4719
      %4762 = vmatprep.subr.bf16.mxu0 0
      %4763 = vmatpush1.bf16.msra.mxu0 %v4720
      %4764 = vmatprep.subr.bf16.mxu0 0
      %4765 = vmatpush1.bf16.msra.mxu0 %v4721
      %4766 = vmatprep.subr.bf16.mxu0 0
      %4767 = vmatpush1.bf16.msra.mxu0 %v4722
      %4768 = vmatprep.subr.bf16.mxu0 0
      %4769 = vmatpush1.bf16.msra.mxu0 %v4723
      %4770 = vmatprep.subr.bf16.mxu0 0
      %4771 = vmatpush1.bf16.msra.mxu0 %v4724
      %4772 = vmatprep.subr.bf16.mxu0 0
      %4773 = vmatpush1.bf16.msra.mxu0 %v4725
      %4774 = vmatprep.mubr.bf16.mxu0 %v4613
      %4775 = vmatmul.mubr.bf16.gmra.mrb[0].mxu0 %v4612
      %v4776 = vpop.f32.mrb[0].mxu0
      %v4777 = vadd.f32 0.0, %v4776
      %v4778 = vpop.f32.mrb[0].mxu0
      %v4779 = vpop.f32.mrb[0].mxu0
      %v4780 = vpop.f32.mrb[0].mxu0
      %4781 = vdwg.mxu0
      %v4783 = vshrl.u32 %v4576, 16
      %v4785 = vrot.slane %v4783, 3
      %v4786 = vshll.u32 %v4576, 16
      %v4788 = vrot.slane %v4786, 4
      %v4789 = vor.u32 %v4785, %v4788
      %v4791 = vshrl.u32 %v4577, 16
      %v4793 = vrot.slane %v4791, 3
      %v4794 = vshll.u32 %v4577, 16
      %v4796 = vrot.slane %v4794, 4
      %v4797 = vor.u32 %v4793, %v4796
      %v4832 = vunpack.c.l.b16 %v4578
      %v4833 = vunpack.c.l.b16 %v4579
      %v4834 = vunpack.c.l.b16 %v4580
      %v4835 = vunpack.c.l.b16 %v4581
      %v4836 = vunpack.c.l.b16 %v4582
      %v4837 = vunpack.c.l.b16 %v4583
      %v4838 = vunpack.c.l.b16 %v4584
      %v4839 = vunpack.c.l.b16 %v4585
      %v4840 = vunpack.c.l.b16 %v4586
      %v4841 = vunpack.c.l.b16 %v4587
      %v4842 = vunpack.c.l.b16 %v4588
      %v4843 = vunpack.c.l.b16 %v4589
      %v4844 = vunpack.c.l.b16 %v4590
      %v4845 = vunpack.c.l.b16 %v4591
      %v4846 = vunpack.c.l.b16 %v4592
      %v4847 = vunpack.c.l.b16 %v4593
      %v4848 = vunpack.c.l.b16 %v4594
      %v4849 = vunpack.c.l.b16 %v4595
      %v4850 = vunpack.c.l.b16 %v4596
      %v4851 = vunpack.c.l.b16 %v4597
      %v4852 = vunpack.c.l.b16 %v4598
      %v4853 = vunpack.c.l.b16 %v4599
      %v4854 = vunpack.c.l.b16 %v4600
      %v4855 = vunpack.c.l.b16 %v4601
      %v4856 = vunpack.c.l.b16 %v4602
      %v4857 = vunpack.c.l.b16 %v4603
      %v4858 = vunpack.c.l.b16 %v4604
      %v4859 = vunpack.c.l.b16 %v4605
      %v4860 = vunpack.c.l.b16 %v4606
      %v4861 = vunpack.c.l.b16 %v4607
      %v4862 = vunpack.c.l.b16 %v4608
      %v4863 = vunpack.c.l.b16 %v4609
      %v4864 = vpack.c.b16 %v4833, %v4832
      %v4865 = vpack.c.b16 %v4835, %v4834
      %v4866 = vpack.c.b16 %v4837, %v4836
      %v4867 = vpack.c.b16 %v4839, %v4838
      %v4868 = vpack.c.b16 %v4841, %v4840
      %v4869 = vpack.c.b16 %v4843, %v4842
      %v4870 = vpack.c.b16 %v4845, %v4844
      %v4871 = vpack.c.b16 %v4847, %v4846
      %v4872 = vpack.c.b16 %v4849, %v4848
      %v4873 = vpack.c.b16 %v4851, %v4850
      %v4874 = vpack.c.b16 %v4853, %v4852
      %v4875 = vpack.c.b16 %v4855, %v4854
      %v4876 = vpack.c.b16 %v4857, %v4856
      %v4877 = vpack.c.b16 %v4859, %v4858
      %v4878 = vpack.c.b16 %v4861, %v4860
      %v4879 = vpack.c.b16 %v4863, %v4862
      %4896 = vmatprep.subr.bf16.mxu0 0
      %4897 = vmatpush1.bf16.msra.mxu0 %v4864
      %4898 = vmatprep.subr.bf16.mxu0 0
      %4899 = vmatpush1.bf16.msra.mxu0 %v4865
      %4900 = vmatprep.subr.bf16.mxu0 0
      %4901 = vmatpush1.bf16.msra.mxu0 %v4866
      %4902 = vmatprep.subr.bf16.mxu0 0
      %4903 = vmatpush1.bf16.msra.mxu0 %v4867
      %4904 = vmatprep.subr.bf16.mxu0 0
      %4905 = vmatpush1.bf16.msra.mxu0 %v4868
      %4906 = vmatprep.subr.bf16.mxu0 0
      %4907 = vmatpush1.bf16.msra.mxu0 %v4869
      %4908 = vmatprep.subr.bf16.mxu0 0
      %4909 = vmatpush1.bf16.msra.mxu0 %v4870
      %4910 = vmatprep.subr.bf16.mxu0 0
      %4911 = vmatpush1.bf16.msra.mxu0 %v4871
      %4912 = vmatprep.subr.bf16.mxu0 0
      %4913 = vmatpush1.bf16.msra.mxu0 %v4872
      %4914 = vmatprep.subr.bf16.mxu0 0
      %4915 = vmatpush1.bf16.msra.mxu0 %v4873
      %4916 = vmatprep.subr.bf16.mxu0 0
      %4917 = vmatpush1.bf16.msra.mxu0 %v4874
      %4918 = vmatprep.subr.bf16.mxu0 0
      %4919 = vmatpush1.bf16.msra.mxu0 %v4875
      %4920 = vmatprep.subr.bf16.mxu0 0
      %4921 = vmatpush1.bf16.msra.mxu0 %v4876
      %4922 = vmatprep.subr.bf16.mxu0 0
      %4923 = vmatpush1.bf16.msra.mxu0 %v4877
      %4924 = vmatprep.subr.bf16.mxu0 0
      %4925 = vmatpush1.bf16.msra.mxu0 %v4878
      %4926 = vmatprep.subr.bf16.mxu0 0
      %4927 = vmatpush1.bf16.msra.mxu0 %v4879
      %4928 = vmatprep.mubr.bf16.mxu0 %v4797
      %4929 = vmatmul.mubr.bf16.gmra.mrb[0].mxu0 %v4789
      %v4930 = vpop.f32.mrb[0].mxu0
      %v4931 = vadd.f32 %v4777, %v4930
      %v4932 = vpop.f32.mrb[0].mxu0
      %v4933 = vpop.f32.mrb[0].mxu0
      %v4934 = vpop.f32.mrb[0].mxu0
      %4935 = vdwg.mxu0
      %v4936 = vld [vmem:[#allocation2 + $0x20] sm:$0xfe]
      %v4937 = vld [vmem:[#allocation2 + $0x28] sm:$0xfe]
      %v4938 = vld [vmem:[#allocation2 + $0x40] sm:$0x1]
      %v4939 = vld [vmem:[#allocation2 + $0x48] sm:$0x1]
      %v4940 = vpack.c.bf16 %v4938, %v4936
      %v4941 = vpack.c.bf16 %v4939, %v4937
      %v4942 = vld [vmem:[%s13 + $0x100] sm:$0xf]
      %v4943 = vld [vmem:[%s13 + $0x104] sm:$0xf]
      %v4944 = vld [vmem:[%s13 + $0x108] sm:$0xf]
      %v4945 = vld [vmem:[%s13 + $0x10c] sm:$0xf]
      %v4946 = vld [vmem:[%s13 + $0x110] sm:$0xf]
      %v4947 = vld [vmem:[%s13 + $0x114] sm:$0xf]
      %v4948 = vld [vmem:[%s13 + $0x118] sm:$0xf]
      %v4949 = vld [vmem:[%s13 + $0x11c] sm:$0xf]
      %v4950 = vld [vmem:[%s13 + $0x120] sm:$0xf]
      %v4951 = vld [vmem:[%s13 + $0x124] sm:$0xf]
      %v4952 = vld [vmem:[%s13 + $0x128] sm:$0xf]
      %v4953 = vld [vmem:[%s13 + $0x12c] sm:$0xf]
      %v4954 = vld [vmem:[%s13 + $0x130] sm:$0xf]
      %v4955 = vld [vmem:[%s13 + $0x134] sm:$0xf]
      %v4956 = vld [vmem:[%s13 + $0x138] sm:$0xf]
      %v4957 = vld [vmem:[%s13 + $0x13c] sm:$0xf]
      %v4958 = vld [vmem:[%s13 + $0x140] sm:$0xf]
      %v4959 = vld [vmem:[%s13 + $0x144] sm:$0xf]
      %v4960 = vld [vmem:[%s13 + $0x148] sm:$0xf]
      %v4961 = vld [vmem:[%s13 + $0x14c] sm:$0xf]
      %v4962 = vld [vmem:[%s13 + $0x150] sm:$0xf]
      %v4963 = vld [vmem:[%s13 + $0x154] sm:$0xf]
      %v4964 = vld [vmem:[%s13 + $0x158] sm:$0xf]
      %v4965 = vld [vmem:[%s13 + $0x15c] sm:$0xf]
      %v4966 = vld [vmem:[%s13 + $0x160] sm:$0xf]
      %v4967 = vld [vmem:[%s13 + $0x164] sm:$0xf]
      %v4968 = vld [vmem:[%s13 + $0x168] sm:$0xf]
      %v4969 = vld [vmem:[%s13 + $0x16c] sm:$0xf]
      %v4970 = vld [vmem:[%s13 + $0x170] sm:$0xf]
      %v4971 = vld [vmem:[%s13 + $0x174] sm:$0xf]
      %v4972 = vld [vmem:[%s13 + $0x178] sm:$0xf]
      %v4973 = vld [vmem:[%s13 + $0x17c] sm:$0xf]
      %v4975 = vshrl.u32 %v4940, 16
      %v4977 = vshll.u32 %v4940, 16
      %v4979 = vrot.slane %v4977, 1
      %v4980 = vor.u32 %v4975, %v4979
      %v4982 = vshrl.u32 %v4941, 16
      %v4984 = vshll.u32 %v4941, 16
      %v4986 = vrot.slane %v4984, 1
      %v4987 = vor.u32 %v4982, %v4986
      %v5022 = vunpack.c.l.b16 %v4942
      %v5023 = vunpack.c.l.b16 %v4943
      %v5024 = vunpack.c.l.b16 %v4944
      %v5025 = vunpack.c.l.b16 %v4945
      %v5026 = vunpack.c.l.b16 %v4946
      %v5027 = vunpack.c.l.b16 %v4947
      %v5028 = vunpack.c.l.b16 %v4948
      %v5029 = vunpack.c.l.b16 %v4949
      %v5030 = vunpack.c.l.b16 %v4950
      %v5031 = vunpack.c.l.b16 %v4951
      %v5032 = vunpack.c.l.b16 %v4952
      %v5033 = vunpack.c.l.b16 %v4953
      %v5034 = vunpack.c.l.b16 %v4954
      %v5035 = vunpack.c.l.b16 %v4955
      %v5036 = vunpack.c.l.b16 %v4956
      %v5037 = vunpack.c.l.b16 %v4957
      %v5038 = vunpack.c.l.b16 %v4958
      %v5039 = vunpack.c.l.b16 %v4959
      %v5040 = vunpack.c.l.b16 %v4960
      %v5041 = vunpack.c.l.b16 %v4961
      %v5042 = vunpack.c.l.b16 %v4962
      %v5043 = vunpack.c.l.b16 %v4963
      %v5044 = vunpack.c.l.b16 %v4964
      %v5045 = vunpack.c.l.b16 %v4965
      %v5046 = vunpack.c.l.b16 %v4966
      %v5047 = vunpack.c.l.b16 %v4967
      %v5048 = vunpack.c.l.b16 %v4968
      %v5049 = vunpack.c.l.b16 %v4969
      %v5050 = vunpack.c.l.b16 %v4970
      %v5051 = vunpack.c.l.b16 %v4971
      %v5052 = vunpack.c.l.b16 %v4972
      %v5053 = vunpack.c.l.b16 %v4973
      %v5054 = vpack.c.b16 %v5023, %v5022
      %v5055 = vpack.c.b16 %v5025, %v5024
      %v5056 = vpack.c.b16 %v5027, %v5026
      %v5057 = vpack.c.b16 %v5029, %v5028
      %v5058 = vpack.c.b16 %v5031, %v5030
      %v5059 = vpack.c.b16 %v5033, %v5032
      %v5060 = vpack.c.b16 %v5035, %v5034
      %v5061 = vpack.c.b16 %v5037, %v5036
      %v5062 = vpack.c.b16 %v5039, %v5038
      %v5063 = vpack.c.b16 %v5041, %v5040
      %v5064 = vpack.c.b16 %v5043, %v5042
      %v5065 = vpack.c.b16 %v5045, %v5044
      %v5066 = vpack.c.b16 %v5047, %v5046
      %v5067 = vpack.c.b16 %v5049, %v5048
      %v5068 = vpack.c.b16 %v5051, %v5050
      %v5069 = vpack.c.b16 %v5053, %v5052
      %5086 = vmatprep.subr.bf16.mxu0 0
      %5087 = vmatpush1.bf16.msra.mxu0 %v5054
      %5088 = vmatprep.subr.bf16.mxu0 0
      %5089 = vmatpush1.bf16.msra.mxu0 %v5055
      %5090 = vmatprep.subr.bf16.mxu0 0
      %5091 = vmatpush1.bf16.msra.mxu0 %v5056
      %5092 = vmatprep.subr.bf16.mxu0 0
      %5093 = vmatpush1.bf16.msra.mxu0 %v5057
      %5094 = vmatprep.subr.bf16.mxu0 0
      %5095 = vmatpush1.bf16.msra.mxu0 %v5058
      %5096 = vmatprep.subr.bf16.mxu0 0
      %5097 = vmatpush1.bf16.msra.mxu0 %v5059
      %5098 = vmatprep.subr.bf16.mxu0 0
      %5099 = vmatpush1.bf16.msra.mxu0 %v5060
      %5100 = vmatprep.subr.bf16.mxu0 0
      %5101 = vmatpush1.bf16.msra.mxu0 %v5061
      %5102 = vmatprep.subr.bf16.mxu0 0
      %5103 = vmatpush1.bf16.msra.mxu0 %v5062
      %5104 = vmatprep.subr.bf16.mxu0 0
      %5105 = vmatpush1.bf16.msra.mxu0 %v5063
      %5106 = vmatprep.subr.bf16.mxu0 0
      %5107 = vmatpush1.bf16.msra.mxu0 %v5064
      %5108 = vmatprep.subr.bf16.mxu0 0
      %5109 = vmatpush1.bf16.msra.mxu0 %v5065
      %5110 = vmatprep.subr.bf16.mxu0 0
      %5111 = vmatpush1.bf16.msra.mxu0 %v5066
      %5112 = vmatprep.subr.bf16.mxu0 0
      %5113 = vmatpush1.bf16.msra.mxu0 %v5067
      %5114 = vmatprep.subr.bf16.mxu0 0
      %5115 = vmatpush1.bf16.msra.mxu0 %v5068
      %5116 = vmatprep.subr.bf16.mxu0 0
      %5117 = vmatpush1.bf16.msra.mxu0 %v5069
      %5118 = vmatprep.mubr.bf16.mxu0 %v4987
      %5119 = vmatmul.mubr.bf16.gmra.mrb[0].mxu0 %v4980
      %v5120 = vpop.f32.mrb[0].mxu0
      %v5121 = vadd.f32 0.0, %v5120
      %v5122 = vpop.f32.mrb[0].mxu0
      %v5123 = vpop.f32.mrb[0].mxu0
      %v5124 = vpop.f32.mrb[0].mxu0
      %5125 = vdwg.mxu0
      %v5126 = vadd.f32 %v4931, %v5121
      %v5127 = vld [vmem:[%s15] sm:$0x1]
      %v5129 = vlaneseq
      %v5130 = vshrl.u32 %v5129, 7
      %v5131 = vsub.s32 0, %v5130
      %v5132 = vrot.slane %v5127, %v5131
      %v5134 = vadd.f32 %v5126, %v5132
      %v5135 = vld [vmem:[%s14] sm:$0xf]
      %v5136 = vld [vmem:[%s14 + $0x4] sm:$0xf]
      %v5137 = vld [vmem:[%s14 + $0x8] sm:$0xf]
      %v5138 = vld [vmem:[%s14 + $0xc] sm:$0xf]
      %v5139 = vld [vmem:[%s14 + $0x10] sm:$0xf]
      %v5140 = vld [vmem:[%s14 + $0x14] sm:$0xf]
      %v5141 = vld [vmem:[%s14 + $0x18] sm:$0xf]
      %v5142 = vld [vmem:[%s14 + $0x1c] sm:$0xf]
      %v5143 = vld [vmem:[%s14 + $0x20] sm:$0xf]
      %v5144 = vld [vmem:[%s14 + $0x24] sm:$0xf]
      %v5145 = vld [vmem:[%s14 + $0x28] sm:$0xf]
      %v5146 = vld [vmem:[%s14 + $0x2c] sm:$0xf]
      %v5147 = vld [vmem:[%s14 + $0x30] sm:$0xf]
      %v5148 = vld [vmem:[%s14 + $0x34] sm:$0xf]
      %v5149 = vld [vmem:[%s14 + $0x38] sm:$0xf]
      %v5150 = vld [vmem:[%s14 + $0x3c] sm:$0xf]
      %v5151 = vld [vmem:[%s14 + $0x40] sm:$0xf]
      %v5152 = vld [vmem:[%s14 + $0x44] sm:$0xf]
      %v5153 = vld [vmem:[%s14 + $0x48] sm:$0xf]
      %v5154 = vld [vmem:[%s14 + $0x4c] sm:$0xf]
      %v5155 = vld [vmem:[%s14 + $0x50] sm:$0xf]
      %v5156 = vld [vmem:[%s14 + $0x54] sm:$0xf]
      %v5157 = vld [vmem:[%s14 + $0x58] sm:$0xf]
      %v5158 = vld [vmem:[%s14 + $0x5c] sm:$0xf]
      %v5159 = vld [vmem:[%s14 + $0x60] sm:$0xf]
      %v5160 = vld [vmem:[%s14 + $0x64] sm:$0xf]
      %v5161 = vld [vmem:[%s14 + $0x68] sm:$0xf]
      %v5162 = vld [vmem:[%s14 + $0x6c] sm:$0xf]
      %v5163 = vld [vmem:[%s14 + $0x70] sm:$0xf]
      %v5164 = vld [vmem:[%s14 + $0x74] sm:$0xf]
      %v5165 = vld [vmem:[%s14 + $0x78] sm:$0xf]
      %v5166 = vld [vmem:[%s14 + $0x7c] sm:$0xf]
      %v5167 = vld [vmem:[%s16] sm:$0x1]
      %v5169 = vlaneseq
      %v5170 = vshrl.u32 %v5169, 7
      %v5171 = vsub.s32 0, %v5170
      %v5172 = vrot.slane %v5167, %v5171
      %v5206 = vunpack.c.l.b16 %v5135
      %v5207 = vunpack.c.l.b16 %v5136
      %v5208 = vunpack.c.l.b16 %v5137
      %v5209 = vunpack.c.l.b16 %v5138
      %v5210 = vunpack.c.l.b16 %v5139
      %v5211 = vunpack.c.l.b16 %v5140
      %v5212 = vunpack.c.l.b16 %v5141
      %v5213 = vunpack.c.l.b16 %v5142
      %v5214 = vunpack.c.l.b16 %v5143
      %v5215 = vunpack.c.l.b16 %v5144
      %v5216 = vunpack.c.l.b16 %v5145
      %v5217 = vunpack.c.l.b16 %v5146
      %v5218 = vunpack.c.l.b16 %v5147
      %v5219 = vunpack.c.l.b16 %v5148
      %v5220 = vunpack.c.l.b16 %v5149
      %v5221 = vunpack.c.l.b16 %v5150
      %v5222 = vunpack.c.l.b16 %v5151
      %v5223 = vunpack.c.l.b16 %v5152
      %v5224 = vunpack.c.l.b16 %v5153
      %v5225 = vunpack.c.l.b16 %v5154
      %v5226 = vunpack.c.l.b16 %v5155
      %v5227 = vunpack.c.l.b16 %v5156
      %v5228 = vunpack.c.l.b16 %v5157
      %v5229 = vunpack.c.l.b16 %v5158
      %v5230 = vunpack.c.l.b16 %v5159
      %v5231 = vunpack.c.l.b16 %v5160
      %v5232 = vunpack.c.l.b16 %v5161
      %v5233 = vunpack.c.l.b16 %v5162
      %v5234 = vunpack.c.l.b16 %v5163
      %v5235 = vunpack.c.l.b16 %v5164
      %v5236 = vunpack.c.l.b16 %v5165
      %v5237 = vunpack.c.l.b16 %v5166
      %v5238 = vpack.c.b16 %v5207, %v5206
      %v5239 = vpack.c.b16 %v5209, %v5208
      %v5240 = vpack.c.b16 %v5211, %v5210
      %v5241 = vpack.c.b16 %v5213, %v5212
      %v5242 = vpack.c.b16 %v5215, %v5214
      %v5243 = vpack.c.b16 %v5217, %v5216
      %v5244 = vpack.c.b16 %v5219, %v5218
      %v5245 = vpack.c.b16 %v5221, %v5220
      %v5246 = vpack.c.b16 %v5223, %v5222
      %v5247 = vpack.c.b16 %v5225, %v5224
      %v5248 = vpack.c.b16 %v5227, %v5226
      %v5249 = vpack.c.b16 %v5229, %v5228
      %v5250 = vpack.c.b16 %v5231, %v5230
      %v5251 = vpack.c.b16 %v5233, %v5232
      %v5252 = vpack.c.b16 %v5235, %v5234
      %v5253 = vpack.c.b16 %v5237, %v5236
      %5270 = vmatprep.subr.bf16.mxu0 0
      %5271 = vmatpush1.bf16.msra.mxu0 %v5238
      %5272 = vmatprep.subr.bf16.mxu0 0
      %5273 = vmatpush1.bf16.msra.mxu0 %v5239
      %5274 = vmatprep.subr.bf16.mxu0 0
      %5275 = vmatpush1.bf16.msra.mxu0 %v5240
      %5276 = vmatprep.subr.bf16.mxu0 0
      %5277 = vmatpush1.bf16.msra.mxu0 %v5241
      %5278 = vmatprep.subr.bf16.mxu0 0
      %5279 = vmatpush1.bf16.msra.mxu0 %v5242
      %5280 = vmatprep.subr.bf16.mxu0 0
      %5281 = vmatpush1.bf16.msra.mxu0 %v5243
      %5282 = vmatprep.subr.bf16.mxu0 0
      %5283 = vmatpush1.bf16.msra.mxu0 %v5244
      %5284 = vmatprep.subr.bf16.mxu0 0
      %5285 = vmatpush1.bf16.msra.mxu0 %v5245
      %5286 = vmatprep.subr.bf16.mxu0 0
      %5287 = vmatpush1.bf16.msra.mxu0 %v5246
      %5288 = vmatprep.subr.bf16.mxu0 0
      %5289 = vmatpush1.bf16.msra.mxu0 %v5247
      %5290 = vmatprep.subr.bf16.mxu0 0
      %5291 = vmatpush1.bf16.msra.mxu0 %v5248
      %5292 = vmatprep.subr.bf16.mxu0 0
      %5293 = vmatpush1.bf16.msra.mxu0 %v5249
      %5294 = vmatprep.subr.bf16.mxu0 0
      %5295 = vmatpush1.bf16.msra.mxu0 %v5250
      %5296 = vmatprep.subr.bf16.mxu0 0
      %5297 = vmatpush1.bf16.msra.mxu0 %v5251
      %5298 = vmatprep.subr.bf16.mxu0 0
      %5299 = vmatpush1.bf16.msra.mxu0 %v5252
      %5300 = vmatprep.subr.bf16.mxu0 0
      %5301 = vmatpush1.bf16.msra.mxu0 %v5253
      %5302 = vmatprep.mubr.bf16.mxu0 %v4613
      %5303 = vmatmul.mubr.bf16.gmra.mrb[0].mxu0 %v4612
      %v5304 = vpop.f32.mrb[0].mxu0
      %v5305 = vadd.f32 %v5172, %v5304
      %v5306 = vpop.f32.mrb[0].mxu0
      %v5307 = vpop.f32.mrb[0].mxu0
      %v5308 = vpop.f32.mrb[0].mxu0
      %5309 = vdwg.mxu0
      %vm5310 = vcmp.ge.f32.partialorder %v5134, 0.0
      %v5311 = vmul.f32 %v5134, 0.25
      %v5312 = vsel %vm5310, %v5134, %v5311
      %v5313 = vmul.f32 %v5312, 0.25
      %v5314 = vmul.f32 %v5305, 0.75
      %v5315 = vadd.f32 %v5313, %v5314
      %5316 = vst [vmem:[#allocation2 + $0x20] sm:$0xff] %v5315
      %v5317 = vld [vmem:[#allocation2] sm:$0x80]
      %v5318 = vld [vmem:[#allocation2 + $0x20] sm:$0x7f]
      %v5319 = vpack.c.bf16 %v5318, %v5317
      %v5320 = vld [vmem:[%s17] sm:$0xf]
      %v5321 = vld [vmem:[%s17 + $0x4] sm:$0xf]
      %v5322 = vld [vmem:[%s17 + $0x8] sm:$0xf]
      %v5323 = vld [vmem:[%s17 + $0xc] sm:$0xf]
      %v5324 = vld [vmem:[%s17 + $0x10] sm:$0xf]
      %v5325 = vld [vmem:[%s17 + $0x14] sm:$0xf]
      %v5326 = vld [vmem:[%s17 + $0x18] sm:$0xf]
      %v5327 = vld [vmem:[%s17 + $0x1c] sm:$0xf]
      %v5328 = vld [vmem:[%s17 + $0x20] sm:$0xf]
      %v5329 = vld [vmem:[%s17 + $0x24] sm:$0xf]
      %v5330 = vld [vmem:[%s17 + $0x28] sm:$0xf]
      %v5331 = vld [vmem:[%s17 + $0x2c] sm:$0xf]
      %v5332 = vld [vmem:[%s17 + $0x30] sm:$0xf]
      %v5333 = vld [vmem:[%s17 + $0x34] sm:$0xf]
      %v5334 = vld [vmem:[%s17 + $0x38] sm:$0xf]
      %v5335 = vld [vmem:[%s17 + $0x3c] sm:$0xf]
      %v5336 = vld [vmem:[#allocation2 + $0x20] sm:$0xff]
      %v5337 = vpack.c.bf16 %v5336, %v5336
      %v5338 = vld [vmem:[%s17 + $0x40] sm:$0xf]
      %v5339 = vld [vmem:[%s17 + $0x44] sm:$0xf]
      %v5340 = vld [vmem:[%s17 + $0x48] sm:$0xf]
      %v5341 = vld [vmem:[%s17 + $0x4c] sm:$0xf]
      %v5342 = vld [vmem:[%s17 + $0x50] sm:$0xf]
      %v5343 = vld [vmem:[%s17 + $0x54] sm:$0xf]
      %v5344 = vld [vmem:[%s17 + $0x58] sm:$0xf]
      %v5345 = vld [vmem:[%s17 + $0x5c] sm:$0xf]
      %v5346 = vld [vmem:[%s17 + $0x60] sm:$0xf]
      %v5347 = vld [vmem:[%s17 + $0x64] sm:$0xf]
      %v5348 = vld [vmem:[%s17 + $0x68] sm:$0xf]
      %v5349 = vld [vmem:[%s17 + $0x6c] sm:$0xf]
      %v5350 = vld [vmem:[%s17 + $0x70] sm:$0xf]
      %v5351 = vld [vmem:[%s17 + $0x74] sm:$0xf]
      %v5352 = vld [vmem:[%s17 + $0x78] sm:$0xf]
      %v5353 = vld [vmem:[%s17 + $0x7c] sm:$0xf]
      %v5370 = vunpack.c.l.b16 %v5338
      %v5371 = vunpack.c.l.b16 %v5339
      %v5372 = vunpack.c.l.b16 %v5340
      %v5373 = vunpack.c.l.b16 %v5341
      %v5374 = vunpack.c.l.b16 %v5342
      %v5375 = vunpack.c.l.b16 %v5343
      %v5376 = vunpack.c.l.b16 %v5344
      %v5377 = vunpack.c.l.b16 %v5345
      %v5378 = vunpack.c.l.b16 %v5346
      %v5379 = vunpack.c.l.b16 %v5347
      %v5380 = vunpack.c.l.b16 %v5348
      %v5381 = vunpack.c.l.b16 %v5349
      %v5382 = vunpack.c.l.b16 %v5350
      %v5383 = vunpack.c.l.b16 %v5351
      %v5384 = vunpack.c.l.b16 %v5352
      %v5385 = vunpack.c.l.b16 %v5353
      %v5386 = vpack.c.b16 %v5371, %v5370
      %v5387 = vpack.c.b16 %v5373, %v5372
      %v5388 = vpack.c.b16 %v5375, %v5374
      %v5389 = vpack.c.b16 %v5377, %v5376
      %v5390 = vpack.c.b16 %v5379, %v5378
      %v5391 = vpack.c.b16 %v5381, %v5380
      %v5392 = vpack.c.b16 %v5383, %v5382
      %v5393 = vpack.c.b16 %v5385, %v5384
      %5402 = vmatprep.subr.bf16.mxu0 0
      %5403 = vmatpush1.bf16.msra.mxu0 %v5386
      %5404 = vmatprep.subr.bf16.mxu0 0
      %5405 = vmatpush1.bf16.msra.mxu0 %v5387
      %5406 = vmatprep.subr.bf16.mxu0 0
      %5407 = vmatpush1.bf16.msra.mxu0 %v5388
      %5408 = vmatprep.subr.bf16.mxu0 0
      %5409 = vmatpush1.bf16.msra.mxu0 %v5389
      %5410 = vmatprep.subr.bf16.mxu0 0
      %5411 = vmatpush1.bf16.msra.mxu0 %v5390
      %5412 = vmatprep.subr.bf16.mxu0 0
      %5413 = vmatpush1.bf16.msra.mxu0 %v5391
      %5414 = vmatprep.subr.bf16.mxu0 0
      %5415 = vmatpush1.bf16.msra.mxu0 %v5392
      %5416 = vmatprep.subr.bf16.mxu0 0
      %5417 = vmatpush1.bf16.msra.mxu0 %v5393
      %5418 = vmatprep.subr.bf16.mxu0 0
      %5419 = vmatpush1.bf16.msra.mxu0 0
      %5420 = vmatprep.subr.bf16.mxu0 0
      %5421 = vmatpush1.bf16.msra.mxu0 0
      %5422 = vmatprep.subr.bf16.mxu0 0
      %5423 = vmatpush1.bf16.msra.mxu0 0
      %5424 = vmatprep.subr.bf16.mxu0 0
      %5425 = vmatpush1.bf16.msra.mxu0 0
      %5426 = vmatprep.subr.bf16.mxu0 0
      %5427 = vmatpush1.bf16.msra.mxu0 0
      %5428 = vmatprep.subr.bf16.mxu0 0
      %5429 = vmatpush1.bf16.msra.mxu0 0
      %5430 = vmatprep.subr.bf16.mxu0 0
      %5431 = vmatpush1.bf16.msra.mxu0 0
      %5432 = vmatprep.subr.bf16.mxu0 0
      %5433 = vmatpush1.bf16.msra.mxu0 0
      %5434 = vmatprep.mubr.bf16.mxu0 0
      %5435 = vmatmul.mubr.bf16.gmra.mrb[0].mxu0 %v5337
      %v5436 = vpop.f32.mrb[0].mxu0
      %v5437 = vadd.f32 0.0, %v5436
      %v5438 = vpop.f32.mrb[0].mxu0
      %v5439 = vpop.f32.mrb[0].mxu0
      %v5440 = vpop.f32.mrb[0].mxu0
      %5441 = vdwg.mxu0
      %v5443 = vshrl.u32 %v5319, 16
      %v5445 = vrot.slane %v5443, 3
      %v5446 = vshll.u32 %v5319, 16
      %v5448 = vrot.slane %v5446, 4
      %v5449 = vor.u32 %v5445, %v5448
      %v5467 = vunpack.c.l.b16 %v5320
      %v5468 = vunpack.c.l.b16 %v5321
      %v5469 = vunpack.c.l.b16 %v5322
      %v5470 = vunpack.c.l.b16 %v5323
      %v5471 = vunpack.c.l.b16 %v5324
      %v5472 = vunpack.c.l.b16 %v5325
      %v5473 = vunpack.c.l.b16 %v5326
      %v5474 = vunpack.c.l.b16 %v5327
      %v5475 = vunpack.c.l.b16 %v5328
      %v5476 = vunpack.c.l.b16 %v5329
      %v5477 = vunpack.c.l.b16 %v5330
      %v5478 = vunpack.c.l.b16 %v5331
      %v5479 = vunpack.c.l.b16 %v5332
      %v5480 = vunpack.c.l.b16 %v5333
      %v5481 = vunpack.c.l.b16 %v5334
      %v5482 = vunpack.c.l.b16 %v5335
      %v5483 = vpack.c.b16 %v5468, %v5467
      %v5484 = vpack.c.b16 %v5470, %v5469
      %v5485 = vpack.c.b16 %v5472, %v5471
      %v5486 = vpack.c.b16 %v5474, %v5473
      %v5487 = vpack.c.b16 %v5476, %v5475
      %v5488 = vpack.c.b16 %v5478, %v5477
      %v5489 = vpack.c.b16 %v5480, %v5479
      %v5490 = vpack.c.b16 %v5482, %v5481
      %5499 = vmatprep.subr.bf16.mxu0 0
      %5500 = vmatpush1.bf16.msra.mxu0 %v5483
      %5501 = vmatprep.subr.bf16.mxu0 0
      %5502 = vmatpush1.bf16.msra.mxu0 %v5484
      %5503 = vmatprep.subr.bf16.mxu0 0
      %5504 = vmatpush1.bf16.msra.mxu0 %v5485
      %5505 = vmatprep.subr.bf16.mxu0 0
      %5506 = vmatpush1.bf16.msra.mxu0 %v5486
      %5507 = vmatprep.subr.bf16.mxu0 0
      %5508 = vmatpush1.bf16.msra.mxu0 %v5487
      %5509 = vmatprep.subr.bf16.mxu0 0
      %5510 = vmatpush1.bf16.msra.mxu0 %v5488
      %5511 = vmatprep.subr.bf16.mxu0 0
      %5512 = vmatpush1.bf16.msra.mxu0 %v5489
      %5513 = vmatprep.subr.bf16.mxu0 0
      %5514 = vmatpush1.bf16.msra.mxu0 %v5490
      %5515 = vmatprep.subr.bf16.mxu0 0
      %5516 = vmatpush1.bf16.msra.mxu0 0
      %5517 = vmatprep.subr.bf16.mxu0 0
      %5518 = vmatpush1.bf16.msra.mxu0 0
      %5519 = vmatprep.subr.bf16.mxu0 0
      %5520 = vmatpush1.bf16.msra.mxu0 0
      %5521 = vmatprep.subr.bf16.mxu0 0
      %5522 = vmatpush1.bf16.msra.mxu0 0
      %5523 = vmatprep.subr.bf16.mxu0 0
      %5524 = vmatpush1.bf16.msra.mxu0 0
      %5525 = vmatprep.subr.bf16.mxu0 0
      %5526 = vmatpush1.bf16.msra.mxu0 0
      %5527 = vmatprep.subr.bf16.mxu0 0
      %5528 = vmatpush1.bf16.msra.mxu0 0
      %5529 = vmatprep.subr.bf16.mxu0 0
      %5530 = vmatpush1.bf16.msra.mxu0 0
      %5531 = vmatprep.mubr.bf16.mxu0 0
      %5532 = vmatmul.mubr.bf16.gmra.mrb[0].mxu0 %v5449
      %v5533 = vpop.f32.mrb[0].mxu0
      %v5534 = vadd.f32 %v5437, %v5533
      %v5535 = vpop.f32.mrb[0].mxu0
      %v5536 = vpop.f32.mrb[0].mxu0
      %v5537 = vpop.f32.mrb[0].mxu0
      %5538 = vdwg.mxu0
      %v5539 = vld [vmem:[#allocation2 + $0x20] sm:$0xfe]
      %v5540 = vld [vmem:[#allocation2 + $0x40] sm:$0x1]
      %v5541 = vpack.c.bf16 %v5540, %v5539
      %v5542 = vld [vmem:[%s17 + $0x80] sm:$0xf]
      %v5543 = vld [vmem:[%s17 + $0x84] sm:$0xf]
      %v5544 = vld [vmem:[%s17 + $0x88] sm:$0xf]
      %v5545 = vld [vmem:[%s17 + $0x8c] sm:$0xf]
      %v5546 = vld [vmem:[%s17 + $0x90] sm:$0xf]
      %v5547 = vld [vmem:[%s17 + $0x94] sm:$0xf]
      %v5548 = vld [vmem:[%s17 + $0x98] sm:$0xf]
      %v5549 = vld [vmem:[%s17 + $0x9c] sm:$0xf]
      %v5550 = vld [vmem:[%s17 + $0xa0] sm:$0xf]
      %v5551 = vld [vmem:[%s17 + $0xa4] sm:$0xf]
      %v5552 = vld [vmem:[%s17 + $0xa8] sm:$0xf]
      %v5553 = vld [vmem:[%s17 + $0xac] sm:$0xf]
      %v5554 = vld [vmem:[%s17 + $0xb0] sm:$0xf]
      %v5555 = vld [vmem:[%s17 + $0xb4] sm:$0xf]
      %v5556 = vld [vmem:[%s17 + $0xb8] sm:$0xf]
      %v5557 = vld [vmem:[%s17 + $0xbc] sm:$0xf]
      %v5559 = vshrl.u32 %v5541, 16
      %v5561 = vshll.u32 %v5541, 16
      %v5563 = vrot.slane %v5561, 1
      %v5564 = vor.u32 %v5559, %v5563
      %v5582 = vunpack.c.l.b16 %v5542
      %v5583 = vunpack.c.l.b16 %v5543
      %v5584 = vunpack.c.l.b16 %v5544
      %v5585 = vunpack.c.l.b16 %v5545
      %v5586 = vunpack.c.l.b16 %v5546
      %v5587 = vunpack.c.l.b16 %v5547
      %v5588 = vunpack.c.l.b16 %v5548
      %v5589 = vunpack.c.l.b16 %v5549
      %v5590 = vunpack.c.l.b16 %v5550
      %v5591 = vunpack.c.l.b16 %v5551
      %v5592 = vunpack.c.l.b16 %v5552
      %v5593 = vunpack.c.l.b16 %v5553
      %v5594 = vunpack.c.l.b16 %v5554
      %v5595 = vunpack.c.l.b16 %v5555
      %v5596 = vunpack.c.l.b16 %v5556
      %v5597 = vunpack.c.l.b16 %v5557
      %v5598 = vpack.c.b16 %v5583, %v5582
      %v5599 = vpack.c.b16 %v5585, %v5584
      %v5600 = vpack.c.b16 %v5587, %v5586
      %v5601 = vpack.c.b16 %v5589, %v5588
      %v5602 = vpack.c.b16 %v5591, %v5590
      %v5603 = vpack.c.b16 %v5593, %v5592
      %v5604 = vpack.c.b16 %v5595, %v5594
      %v5605 = vpack.c.b16 %v5597, %v5596
      %5614 = vmatprep.subr.bf16.mxu0 0
      %5615 = vmatpush1.bf16.msra.mxu0 %v5598
      %5616 = vmatprep.subr.bf16.mxu0 0
      %5617 = vmatpush1.bf16.msra.mxu0 %v5599
      %5618 = vmatprep.subr.bf16.mxu0 0
      %5619 = vmatpush1.bf16.msra.mxu0 %v5600
      %5620 = vmatprep.subr.bf16.mxu0 0
      %5621 = vmatpush1.bf16.msra.mxu0 %v5601
      %5622 = vmatprep.subr.bf16.mxu0 0
      %5623 = vmatpush1.bf16.msra.mxu0 %v5602
      %5624 = vmatprep.subr.bf16.mxu0 0
      %5625 = vmatpush1.bf16.msra.mxu0 %v5603
      %5626 = vmatprep.subr.bf16.mxu0 0
      %5627 = vmatpush1.bf16.msra.mxu0 %v5604
      %5628 = vmatprep.subr.bf16.mxu0 0
      %5629 = vmatpush1.bf16.msra.mxu0 %v5605
      %5630 = vmatprep.subr.bf16.mxu0 0
      %5631 = vmatpush1.bf16.msra.mxu0 0
      %5632 = vmatprep.subr.bf16.mxu0 0
      %5633 = vmatpush1.bf16.msra.mxu0 0
      %5634 = vmatprep.subr.bf16.mxu0 0
      %5635 = vmatpush1.bf16.msra.mxu0 0
      %5636 = vmatprep.subr.bf16.mxu0 0
      %5637 = vmatpush1.bf16.msra.mxu0 0
      %5638 = vmatprep.subr.bf16.mxu0 0
      %5639 = vmatpush1.bf16.msra.mxu0 0
      %5640 = vmatprep.subr.bf16.mxu0 0
      %5641 = vmatpush1.bf16.msra.mxu0 0
      %5642 = vmatprep.subr.bf16.mxu0 0
      %5643 = vmatpush1.bf16.msra.mxu0 0
      %5644 = vmatprep.subr.bf16.mxu0 0
      %5645 = vmatpush1.bf16.msra.mxu0 0
      %5646 = vmatprep.mubr.bf16.mxu0 0
      %5647 = vmatmul.mubr.bf16.gmra.mrb[0].mxu0 %v5564
      %v5648 = vpop.f32.mrb[0].mxu0
      %v5649 = vadd.f32 0.0, %v5648
      %v5650 = vpop.f32.mrb[0].mxu0
      %v5651 = vpop.f32.mrb[0].mxu0
      %v5652 = vpop.f32.mrb[0].mxu0
      %5653 = vdwg.mxu0
      %v5654 = vadd.f32 %v5534, %v5649
      %v5655 = vld [vmem:[%s19] sm:$0x1]
      %v5657 = vlaneseq
      %v5658 = vshrl.u32 %v5657, 7
      %v5659 = vsub.s32 0, %v5658
      %v5660 = vrot.slane %v5655, %v5659
      %v5662 = vadd.f32 %v5654, %v5660
      %v5663 = vld [vmem:[%s18] sm:$0xf]
      %v5664 = vld [vmem:[%s18 + $0x4] sm:$0xf]
      %v5665 = vld [vmem:[%s18 + $0x8] sm:$0xf]
      %v5666 = vld [vmem:[%s18 + $0xc] sm:$0xf]
      %v5667 = vld [vmem:[%s18 + $0x10] sm:$0xf]
      %v5668 = vld [vmem:[%s18 + $0x14] sm:$0xf]
      %v5669 = vld [vmem:[%s18 + $0x18] sm:$0xf]
      %v5670 = vld [vmem:[%s18 + $0x1c] sm:$0xf]
      %v5671 = vld [vmem:[%s18 + $0x20] sm:$0xf]
      %v5672 = vld [vmem:[%s18 + $0x24] sm:$0xf]
      %v5673 = vld [vmem:[%s18 + $0x28] sm:$0xf]
      %v5674 = vld [vmem:[%s18 + $0x2c] sm:$0xf]
      %v5675 = vld [vmem:[%s18 + $0x30] sm:$0xf]
      %v5676 = vld [vmem:[%s18 + $0x34] sm:$0xf]
      %v5677 = vld [vmem:[%s18 + $0x38] sm:$0xf]
      %v5678 = vld [vmem:[%s18 + $0x3c] sm:$0xf]
      %v5679 = vld [vmem:[%s20] sm:$0x1]
      %v5681 = vlaneseq
      %v5682 = vshrl.u32 %v5681, 7
      %v5683 = vsub.s32 0, %v5682
      %v5684 = vrot.slane %v5679, %v5683
      %v5702 = vunpack.c.l.b16 %v5663
      %v5703 = vunpack.c.l.b16 %v5664
      %v5704 = vunpack.c.l.b16 %v5665
      %v5705 = vunpack.c.l.b16 %v5666
      %v5706 = vunpack.c.l.b16 %v5667
      %v5707 = vunpack.c.l.b16 %v5668
      %v5708 = vunpack.c.l.b16 %v5669
      %v5709 = vunpack.c.l.b16 %v5670
      %v5710 = vunpack.c.l.b16 %v5671
      %v5711 = vunpack.c.l.b16 %v5672
      %v5712 = vunpack.c.l.b16 %v5673
      %v5713 = vunpack.c.l.b16 %v5674
      %v5714 = vunpack.c.l.b16 %v5675
      %v5715 = vunpack.c.l.b16 %v5676
      %v5716 = vunpack.c.l.b16 %v5677
      %v5717 = vunpack.c.l.b16 %v5678
      %v5718 = vpack.c.b16 %v5703, %v5702
      %v5719 = vpack.c.b16 %v5705, %v5704
      %v5720 = vpack.c.b16 %v5707, %v5706
      %v5721 = vpack.c.b16 %v5709, %v5708
      %v5722 = vpack.c.b16 %v5711, %v5710
      %v5723 = vpack.c.b16 %v5713, %v5712
      %v5724 = vpack.c.b16 %v5715, %v5714
      %v5725 = vpack.c.b16 %v5717, %v5716
      %5734 = vmatprep.subr.bf16.mxu0 0
      %5735 = vmatpush1.bf16.msra.mxu0 %v5718
      %5736 = vmatprep.subr.bf16.mxu0 0
      %5737 = vmatpush1.bf16.msra.mxu0 %v5719
      %5738 = vmatprep.subr.bf16.mxu0 0
      %5739 = vmatpush1.bf16.msra.mxu0 %v5720
      %5740 = vmatprep.subr.bf16.mxu0 0
      %5741 = vmatpush1.bf16.msra.mxu0 %v5721
      %5742 = vmatprep.subr.bf16.mxu0 0
      %5743 = vmatpush1.bf16.msra.mxu0 %v5722
      %5744 = vmatprep.subr.bf16.mxu0 0
      %5745 = vmatpush1.bf16.msra.mxu0 %v5723
      %5746 = vmatprep.subr.bf16.mxu0 0
      %5747 = vmatpush1.bf16.msra.mxu0 %v5724
      %5748 = vmatprep.subr.bf16.mxu0 0
      %5749 = vmatpush1.bf16.msra.mxu0 %v5725
      %5750 = vmatprep.subr.bf16.mxu0 0
      %5751 = vmatpush1.bf16.msra.mxu0 0
      %5752 = vmatprep.subr.bf16.mxu0 0
      %5753 = vmatpush1.bf16.msra.mxu0 0
      %5754 = vmatprep.subr.bf16.mxu0 0
      %5755 = vmatpush1.bf16.msra.mxu0 0
      %5756 = vmatprep.subr.bf16.mxu0 0
      %5757 = vmatpush1.bf16.msra.mxu0 0
      %5758 = vmatprep.subr.bf16.mxu0 0
      %5759 = vmatpush1.bf16.msra.mxu0 0
      %5760 = vmatprep.subr.bf16.mxu0 0
      %5761 = vmatpush1.bf16.msra.mxu0 0
      %5762 = vmatprep.subr.bf16.mxu0 0
      %5763 = vmatpush1.bf16.msra.mxu0 0
      %5764 = vmatprep.subr.bf16.mxu0 0
      %5765 = vmatpush1.bf16.msra.mxu0 0
      %5766 = vmatprep.mubr.bf16.mxu0 0
      %5767 = vmatmul.mubr.bf16.gmra.mrb[0].mxu0 %v5337
      %v5768 = vpop.f32.mrb[0].mxu0
      %v5769 = vadd.f32 %v5684, %v5768
      %v5770 = vpop.f32.mrb[0].mxu0
      %v5771 = vpop.f32.mrb[0].mxu0
      %v5772 = vpop.f32.mrb[0].mxu0
      %5773 = vdwg.mxu0
      %v5774 = vmul.f32 %v5662, 0.2
      %v5775 = vmul.f32 %v5769, 0.8
      %v5776 = vadd.f32 %v5774, %v5775
      %5777 = vst [vmem:[%s651] sm:$0xff] %v5776
      %p5778 = scmp.lt.s32.totalorder %s32, 1
      %s5779 = scalar_select %p5778, %s32, 1
      %s5780 = smul.addr %s5779, 8
      %s5781 = scalar_lea.vmem %s21, %s5780
      // Predicated region
      $region105: #{_lambda_.1} parent=103 // pred_check
        %p5782 = pneg %p496
      $region106: #{_lambda_.1} parent=103 // pred_check_branch
        %5784 = sbr.rel (%p5782) target = $region108
      $region107: #{_lambda_.1} parent=103 // pred_region
        _
      $region108: #{_lambda_.1} parent=103 // pred_fallthru
        _
    $region104: #{_lambda_.1} parent=5 // pred_fallthru
      _
    %p5785 = scmp.le.s32.totalorder 2, %s27
    // Predicated region
    $region109: #{_lambda_.1} parent=5 // pred_check
      %p5786 = pneg %p5785
    $region110: #{_lambda_.1} parent=5 // pred_check_branch
      %5788 = sbr.rel (%p5786) target = $region112
    $region111: #{_lambda_.1} parent=5 // pred_region
      %s5789 = ssub.s32 %s27, 2
      // Predicated region
      $region113: #{_lambda_.1} parent=111 // pred_check
        %p5790 = pneg %p502
      $region114: #{_lambda_.1} parent=111 // pred_check_branch
        %5792 = sbr.rel (%p5790) target = $region116
      $region115: #{_lambda_.1} parent=111 // pred_region
        %p5793 = scmp.lt.s32.totalorder %s33, 1
        %s5794 = scalar_select %p5793, %s33, 1
        %s5795 = smul.addr %s5794, 8
        %s5796 = scalar_lea.vmem %s21, %s5795
      $region116: #{_lambda_.1} parent=111 // pred_fallthru
        _
    $region112: #{_lambda_.1} parent=5 // pred_fallthru
      _
  $region6: #{_lambda_.1} parent=0 // loop_footer
    %s31 = sadd.s32 1, %s27
  $region7: #{_lambda_.1} parent=0 // loop_footer_branch
    %26 = sbr.rel target = $region3
  $region8: #{_lambda_.1} parent=0 // loop_exit
    _

</llo_original>
